<compile_context>
chip_gen: v7x
topology: tpu7x:2x2x1
jax: 0.10.0
libtpu: 0.0.40
codegen_flags: <defaults>
</compile_context>

<pallas_src>
import functools

import jax
import jax.numpy as jnp
from jax import lax
from jax.experimental import pallas as pl
from jax.experimental.pallas import tpu as pltpu


# ----------------------------------------------------------------------------
# helpers
# ----------------------------------------------------------------------------
def round_up(x, m):
    return ((x + m - 1) // m) * m


def pad_last(arr, target):
    """Zero-pad the last axis of `arr` up to `target` columns."""
    pad = target - arr.shape[-1]
    if pad == 0:
        return arr
    cfg = [(0, 0)] * (arr.ndim - 1) + [(0, pad)]
    return jnp.pad(arr, cfg)


def split_parity(x, s):
    """x: (N,H,W,C) -> (parity-stacked padded input, Hs).

    The input is zero-padded by 1 on each spatial side (rounded up so the
    padded extents are multiples of s) and split into s*s parity planes,
    stacked along H:  result[:, p*Hs:(p+1)*Hs, :, :] = xpad[:, i::s, j::s, :]
    with p = i*s + j.  Every 3x3 conv tap (kh,kw) at stride s then reads a
    *contiguous* window of plane (kh%s, kw%s) at offset (kh//s, kw//s).
    Total size ~= 1x the padded input (no im2col inflation).
    """
    N, H, W, C = x.shape
    Hp = round_up(H + 2, s)
    Wp = round_up(W + 2, s)
    xp = jnp.pad(x, ((0, 0), (1, Hp - H - 1), (1, Wp - W - 1), (0, 0)))
    planes = [xp[:, i::s, j::s, :] for i in range(s) for j in range(s)]
    return jnp.concatenate(planes, axis=1), Hp // s


def pick_nb(N, Ho, Wo, target_m=2048):
    """Batch items per grid step: biggest divisor of N with NB*Ho*Wo <= target_m,
    keeping >= 2 grid steps when N >= 2 (so both v7x TensorCores get work)."""
    best = 1
    for nb in range(1, N + 1):
        if N % nb != 0 or nb * Ho * Wo > target_m:
            continue
        if N >= 2 and N // nb < 2:
            continue
        best = nb
    return best


# ----------------------------------------------------------------------------
# Pallas kernel: the whole BasicBlock for one batch block.
# ----------------------------------------------------------------------------
def basic_block_kernel(xpar_ref, xs_ref, w1_ref, b1_ref, w2_ref, b2_ref,
                       wsc_ref, out_ref, o1pad_ref, *,
                       stride, NB, Hs, Ho, Wo, Cin, Cp):
    s = stride
    M = NB * Ho * Wo

    # ---- conv1 (3x3, stride) + BN1 + ReLU : 9 shifted matmuls, f32 acc ----
    acc = jnp.zeros((M, Cp), jnp.float32)
    for kh in range(3):
        for kw in range(3):
            p = (kh % s) * s + (kw % s)          # parity plane of this tap
            oh, ow = kh // s, kw // s            # offset inside that plane
            win = xpar_ref[:, p * Hs + oh:p * Hs + oh + Ho, ow:ow + Wo, :]
            acc = acc + jnp.dot(win.reshape(M, Cin), w1_ref[kh * 3 + kw],
                                preferred_element_type=jnp.float32)
    out1 = jnp.maximum(acc + b1_ref[...], 0.0)   # f32; padded channels stay 0
    # TODO(synk): nn.Dropout modeled as identity (eval mode).

    # ---- stage out1 into a zero-bordered VMEM halo buffer (conv2 input) ----
    o1pad_ref[...] = jnp.zeros_like(o1pad_ref)
    o1pad_ref[:, 1:Ho + 1, 1:Wo + 1, :] = out1.reshape(NB, Ho, Wo, Cp)
    o1 = o1pad_ref[...].astype(jnp.bfloat16)     # single cast; windows below

    # ---- conv2 (3x3, stride 1) + BN2 + shortcut matmul + ReLU ----
    acc = jnp.zeros((M, Cp), jnp.float32)
    for kh in range(3):
        for kw in range(3):
            win = o1[:, kh:kh + Ho, kw:kw + Wo, :]
            acc = acc + jnp.dot(win.reshape(M, Cp), w2_ref[kh * 3 + kw],
                                preferred_element_type=jnp.float32)
    # Shortcut: conv1x1(stride)+BN_sc, or identity (wsc = I) — same matmul path.
    acc = acc + jnp.dot(xs_ref[...].reshape(M, Cin), wsc_ref[...],
                        preferred_element_type=jnp.float32)
    out2 = jnp.maximum(acc + b2_ref[...], 0.0)
    out_ref[...] = out2.reshape(NB, Ho, Wo, Cp).astype(out_ref.dtype)


# ----------------------------------------------------------------------------
# BN folding & parameter init
# ----------------------------------------------------------------------------
def fold_bn(gamma, beta, mean, var, eps=1e-5):
    scale = gamma / jnp.sqrt(var + eps)
    shift = beta - mean * scale
    return (scale.reshape(1, -1).astype(jnp.float32),
            shift.reshape(1, -1).astype(jnp.float32))


def make_bn_params(key, c):
    k1, k2, k3, k4 = jax.random.split(key, 4)
    gamma = jax.random.normal(k1, (c,), jnp.float32) * 0.1 + 1.0
    beta = jax.random.normal(k2, (c,), jnp.float32) * 0.1
    mean = jax.random.normal(k3, (c,), jnp.float32) * 0.1
    var = jnp.abs(jax.random.normal(k4, (c,), jnp.float32)) * 0.1 + 0.5
    return gamma, beta, mean, var


def init_basic_block_params(key, in_planes, planes, stride):
    ks = jax.random.split(key, 6)
    p = {}
    p["w1"] = jax.random.normal(ks[0], (3, 3, in_planes, planes), jnp.float32) * 0.1
    p["bn1"] = make_bn_params(ks[1], planes)
    p["w2"] = jax.random.normal(ks[2], (3, 3, planes, planes), jnp.float32) * 0.1
    p["bn2"] = make_bn_params(ks[3], planes)
    p["has_shortcut"] = (stride != 1) or (in_planes != planes)
    if p["has_shortcut"]:
        p["wsc"] = jax.random.normal(ks[4], (1, 1, in_planes, planes), jnp.float32) * 0.1
        p["bnsc"] = make_bn_params(ks[5], planes)
    return p


# ----------------------------------------------------------------------------
# BasicBlock forward (single fused pallas_call)
# ----------------------------------------------------------------------------
def basic_block_forward(x_nchw, params, stride):
    # NCHW -> NHWC at the module boundary only (keep NHWC end-to-end when chaining).
    x = jnp.transpose(x_nchw, (0, 2, 3, 1)).astype(jnp.float32)
    N, H, W, Cin = x.shape
    planes = params["w1"].shape[-1]
    Cp = round_up(planes, 128)                    # lane-dense output channels
    s = stride
    Ho = (H + 2 - 3) // s + 1
    Wo = (W + 2 - 3) // s + 1

    # Parity-split padded input (bf16) — conv1's only activation stream.
    xpar, Hs = split_parity(x.astype(jnp.bfloat16), s)        # (N, s*s*Hs, Ws, Cin)
    Ws = xpar.shape[2]

    # Shortcut stream: x at the strided output locations (bf16), no concat.
    xs = x[:, 0:(Ho - 1) * s + 1:s, 0:(Wo - 1) * s + 1:s, :].astype(jnp.bfloat16)

    # Fold BN scale into weights, BN shift into the epilogue add.
    sc1, sh1 = fold_bn(*params["bn1"])
    w1 = (params["w1"] * sc1).reshape(9, Cin, planes)
    sc2, sh2 = fold_bn(*params["bn2"])
    w2 = (params["w2"] * sc2).reshape(9, planes, planes)
    if params["has_shortcut"]:
        scs, shs = fold_bn(*params["bnsc"])
        wsc = params["wsc"].reshape(Cin, planes) * scs
        shift2 = sh2 + shs
    else:
        # Identity shortcut expressed as a matmul with I (exact in bf16).
        wsc = jnp.eye(Cin, planes, dtype=jnp.float32)
        shift2 = sh2

    w1p = pad_last(w1, Cp).astype(jnp.bfloat16)                                  # (9, Cin, Cp)
    w2p = pad_last(jnp.pad(w2, ((0, 0), (0, Cp - planes), (0, 0))), Cp)          # (9, Cp, Cp)
    w2p = w2p.astype(jnp.bfloat16)
    wscp = pad_last(wsc, Cp).astype(jnp.bfloat16)                                # (Cin, Cp)
    shift1 = pad_last(sh1, Cp)                                                   # (1, Cp) f32
    shift2 = pad_last(shift2, Cp)                                                # (1, Cp) f32

    NB = pick_nb(N, Ho, Wo)
    grid = (N // NB,)
    npar = s * s

    kernel = functools.partial(
        basic_block_kernel,
        stride=s, NB=NB, Hs=Hs, Ho=Ho, Wo=Wo, Cin=Cin, Cp=Cp)

    out = pl.pallas_call(
        kernel,
        out_shape=jax.ShapeDtypeStruct((N, Ho, Wo, Cp), jnp.bfloat16),
        grid_spec=pltpu.PrefetchScalarGridSpec(
            num_scalar_prefetch=0,
            grid=grid,
            in_specs=[
                pl.BlockSpec((NB, npar * Hs, Ws, Cin), lambda i: (i, 0, 0, 0)),  # xpar
                pl.BlockSpec((NB, Ho, Wo, Cin), lambda i: (i, 0, 0, 0)),         # xs
                pl.BlockSpec((9, Cin, Cp), lambda i: (0, 0, 0)),                 # w1
                pl.BlockSpec((1, Cp), lambda i: (0, 0)),                         # shift1
                pl.BlockSpec((9, Cp, Cp), lambda i: (0, 0, 0)),                  # w2
                pl.BlockSpec((1, Cp), lambda i: (0, 0)),                         # shift2
                pl.BlockSpec((Cin, Cp), lambda i: (0, 0)),                       # wsc / I
            ],
            out_specs=pl.BlockSpec((NB, Ho, Wo, Cp), lambda i: (i, 0, 0, 0)),
            scratch_shapes=[pltpu.VMEM((NB, Ho + 2, Wo + 2, Cp), jnp.float32)],
        ),
        compiler_params=pltpu.CompilerParams(
            dimension_semantics=("parallel",),
            vmem_limit_bytes=48 * 1024 * 1024,
        ),
    )(xpar, xs, w1p, shift1, w2p, shift2, wscp)

    out = out[..., :planes].astype(jnp.float32)           # boundary slice + upcast
    return jnp.transpose(out, (0, 3, 1, 2))               # NHWC -> NCHW


# ----------------------------------------------------------------------------
# Pure-JAX reference (lax.conv, f32) for correctness check
# ----------------------------------------------------------------------------
def ref_forward(x_nchw, params, stride):
    x = jnp.transpose(x_nchw, (0, 2, 3, 1)).astype(jnp.float32)
    dn = ("NHWC", "HWIO", "NHWC")

    def conv(inp, w, s):
        return lax.conv_general_dilated(
            inp, w, (s, s),
            [(w.shape[0] // 2,) * 2, (w.shape[1] // 2,) * 2],
            dimension_numbers=dn)

    def bn(y, bnp):
        g, b, m, v = bnp
        return (y - m) / jnp.sqrt(v + 1e-5) * g + b

    out = jax.nn.relu(bn(conv(x, params["w1"], stride), params["bn1"]))
    out = bn(conv(out, params["w2"], 1), params["bn2"])
    if params["has_shortcut"]:
        sc = bn(conv(x, params["wsc"], stride), params["bnsc"])
    else:
        sc = x
    out = jax.nn.relu(out + sc)
    return jnp.transpose(out, (0, 3, 1, 2))


if __name__ == "__main__":
    key = jax.random.PRNGKey(0)
    k_x, k_p = jax.random.split(key)

    # BasicBlock(in_planes=4, planes=8, stride=2) -> exercises the conv shortcut
    N, Cin, H, W = 2, 4, 16, 16
    planes, stride = 8, 2

    x = jax.random.normal(k_x, (N, Cin, H, W), jnp.float32)
    params = init_basic_block_params(k_p, Cin, planes, stride)

    out = jax.block_until_ready(basic_block_forward(x, params, stride))
    ref = jax.block_until_ready(ref_forward(x, params, stride))

    assert out.shape == (N, planes, H // stride, W // stride), out.shape
    # bf16 streams / f32 accumulation vs. full-f32 reference -> loosened tolerance.
    err = float(jnp.max(jnp.abs(out - ref)))
    assert jnp.allclose(out, ref, atol=5e-2, rtol=5e-2), err

    print("KERNEL_OK")
</pallas_src>

<mosaic_0001>
module attributes {stable_mosaic.version = 11 : i64} {
  func.func @basic_block_kernel(%arg0: i32, %arg1: memref<1x36x9x4xbf16, #tpu.memory_space<vmem>>, %arg2: memref<1x8x8x4xbf16, #tpu.memory_space<vmem>>, %arg3: memref<9x4x128xbf16, #tpu.memory_space<vmem>>, %arg4: memref<1x128xf32, #tpu.memory_space<vmem>>, %arg5: memref<9x128x128xbf16, #tpu.memory_space<vmem>>, %arg6: memref<1x128xf32, #tpu.memory_space<vmem>>, %arg7: memref<4x128xbf16, #tpu.memory_space<vmem>>, %arg8: memref<1x8x8x128xbf16, #tpu.memory_space<vmem>>, %arg9: memref<1x10x10x128xf32, #tpu.memory_space<vmem>>) attributes {dimension_semantics = [#tpu.dimension_semantics<parallel>], iteration_bounds = array<i64: 2>, scalar_prefetch = 0 : i64, scratch_operands = 1 : i64, tpu.core_type = #tpu.core_type<tc>, window_params = [{transform_indices = @transform_0, window_bounds = array<i64: 1, 36, 9, 4>}, {transform_indices = @transform_1, window_bounds = array<i64: 1, 8, 8, 4>}, {pipeline_mode = #tpu.pipeline_mode<synchronous>, transform_indices = @transform_2, window_bounds = array<i64: 9, 4, 128>}, {pipeline_mode = #tpu.pipeline_mode<synchronous>, transform_indices = @transform_3, window_bounds = array<i64: 1, 128>}, {pipeline_mode = #tpu.pipeline_mode<synchronous>, transform_indices = @transform_4, window_bounds = array<i64: 9, 128, 128>}, {pipeline_mode = #tpu.pipeline_mode<synchronous>, transform_indices = @transform_5, window_bounds = array<i64: 1, 128>}, {pipeline_mode = #tpu.pipeline_mode<synchronous>, transform_indices = @transform_6, window_bounds = array<i64: 4, 128>}, {transform_indices = @transform_7, window_bounds = array<i64: 1, 8, 8, 128>}]} {
    %cst = arith.constant 0.000000e+00 : f32
    %0 = vector.broadcast %cst : f32 to vector<64x128xf32>
    %c0 = arith.constant 0 : index
    %c0_0 = arith.constant 0 : index
    %c0_1 = arith.constant 0 : index
    %c0_2 = arith.constant 0 : index
    %1 = vector.load %arg1[%c0, %c0_0, %c0_1, %c0_2] : memref<1x36x9x4xbf16, #tpu.memory_space<vmem>>, vector<1x8x8x4xbf16>
    %2 = vector.shape_cast %1 : vector<1x8x8x4xbf16> to vector<64x4xbf16>
    %c0_3 = arith.constant 0 : index
    %c0_4 = arith.constant 0 : index
    %c0_5 = arith.constant 0 : index
    %3 = vector.load %arg3[%c0_3, %c0_4, %c0_5] : memref<9x4x128xbf16, #tpu.memory_space<vmem>>, vector<1x4x128xbf16>
    %4 = vector.shape_cast %3 : vector<1x4x128xbf16> to vector<4x128xbf16>
    %cst_6 = arith.constant dense<0.000000e+00> : vector<64x128xf32>
    %5 = tpu.matmul %2, %4, %cst_6 {dimension_numbers = #tpu.dot_dimension_numbers<[1], [0], [0], [1], [0, 0, 1, 1], [], []>} : vector<64x4xbf16>, vector<4x128xbf16>, vector<64x128xf32> -> vector<64x128xf32>
    %6 = arith.addf %0, %5 : vector<64x128xf32>
    %c0_7 = arith.constant 0 : index
    %c9 = arith.constant 9 : index
    %c0_8 = arith.constant 0 : index
    %c0_9 = arith.constant 0 : index
    %7 = vector.load %arg1[%c0_7, %c9, %c0_8, %c0_9] : memref<1x36x9x4xbf16, #tpu.memory_space<vmem>>, vector<1x8x8x4xbf16>
    %8 = vector.shape_cast %7 : vector<1x8x8x4xbf16> to vector<64x4xbf16>
    %c1 = arith.constant 1 : index
    %c0_10 = arith.constant 0 : index
    %c0_11 = arith.constant 0 : index
    %9 = vector.load %arg3[%c1, %c0_10, %c0_11] : memref<9x4x128xbf16, #tpu.memory_space<vmem>>, vector<1x4x128xbf16>
    %10 = vector.shape_cast %9 : vector<1x4x128xbf16> to vector<4x128xbf16>
    %cst_12 = arith.constant dense<0.000000e+00> : vector<64x128xf32>
    %11 = tpu.matmul %8, %10, %cst_12 {dimension_numbers = #tpu.dot_dimension_numbers<[1], [0], [0], [1], [0, 0, 1, 1], [], []>} : vector<64x4xbf16>, vector<4x128xbf16>, vector<64x128xf32> -> vector<64x128xf32>
    %12 = arith.addf %6, %11 : vector<64x128xf32>
    %c0_13 = arith.constant 0 : index
    %c0_14 = arith.constant 0 : index
    %c1_15 = arith.constant 1 : index
    %c0_16 = arith.constant 0 : index
    %13 = vector.load %arg1[%c0_13, %c0_14, %c1_15, %c0_16] : memref<1x36x9x4xbf16, #tpu.memory_space<vmem>>, vector<1x8x8x4xbf16>
    %14 = vector.shape_cast %13 : vector<1x8x8x4xbf16> to vector<64x4xbf16>
    %c2 = arith.constant 2 : index
    %c0_17 = arith.constant 0 : index
    %c0_18 = arith.constant 0 : index
    %15 = vector.load %arg3[%c2, %c0_17, %c0_18] : memref<9x4x128xbf16, #tpu.memory_space<vmem>>, vector<1x4x128xbf16>
    %16 = vector.shape_cast %15 : vector<1x4x128xbf16> to vector<4x128xbf16>
    %cst_19 = arith.constant dense<0.000000e+00> : vector<64x128xf32>
    %17 = tpu.matmul %14, %16, %cst_19 {dimension_numbers = #tpu.dot_dimension_numbers<[1], [0], [0], [1], [0, 0, 1, 1], [], []>} : vector<64x4xbf16>, vector<4x128xbf16>, vector<64x128xf32> -> vector<64x128xf32>
    %18 = arith.addf %12, %17 : vector<64x128xf32>
    %c0_20 = arith.constant 0 : index
    %c18 = arith.constant 18 : index
    %c0_21 = arith.constant 0 : index
    %c0_22 = arith.constant 0 : index
    %19 = vector.load %arg1[%c0_20, %c18, %c0_21, %c0_22] : memref<1x36x9x4xbf16, #tpu.memory_space<vmem>>, vector<1x8x8x4xbf16>
    %20 = vector.shape_cast %19 : vector<1x8x8x4xbf16> to vector<64x4xbf16>
    %c3 = arith.constant 3 : index
    %c0_23 = arith.constant 0 : index
    %c0_24 = arith.constant 0 : index
    %21 = vector.load %arg3[%c3, %c0_23, %c0_24] : memref<9x4x128xbf16, #tpu.memory_space<vmem>>, vector<1x4x128xbf16>
    %22 = vector.shape_cast %21 : vector<1x4x128xbf16> to vector<4x128xbf16>
    %cst_25 = arith.constant dense<0.000000e+00> : vector<64x128xf32>
    %23 = tpu.matmul %20, %22, %cst_25 {dimension_numbers = #tpu.dot_dimension_numbers<[1], [0], [0], [1], [0, 0, 1, 1], [], []>} : vector<64x4xbf16>, vector<4x128xbf16>, vector<64x128xf32> -> vector<64x128xf32>
    %24 = arith.addf %18, %23 : vector<64x128xf32>
    %c0_26 = arith.constant 0 : index
    %c27 = arith.constant 27 : index
    %c0_27 = arith.constant 0 : index
    %c0_28 = arith.constant 0 : index
    %25 = vector.load %arg1[%c0_26, %c27, %c0_27, %c0_28] : memref<1x36x9x4xbf16, #tpu.memory_space<vmem>>, vector<1x8x8x4xbf16>
    %26 = vector.shape_cast %25 : vector<1x8x8x4xbf16> to vector<64x4xbf16>
    %c4 = arith.constant 4 : index
    %c0_29 = arith.constant 0 : index
    %c0_30 = arith.constant 0 : index
    %27 = vector.load %arg3[%c4, %c0_29, %c0_30] : memref<9x4x128xbf16, #tpu.memory_space<vmem>>, vector<1x4x128xbf16>
    %28 = vector.shape_cast %27 : vector<1x4x128xbf16> to vector<4x128xbf16>
    %cst_31 = arith.constant dense<0.000000e+00> : vector<64x128xf32>
    %29 = tpu.matmul %26, %28, %cst_31 {dimension_numbers = #tpu.dot_dimension_numbers<[1], [0], [0], [1], [0, 0, 1, 1], [], []>} : vector<64x4xbf16>, vector<4x128xbf16>, vector<64x128xf32> -> vector<64x128xf32>
    %30 = arith.addf %24, %29 : vector<64x128xf32>
    %c0_32 = arith.constant 0 : index
    %c18_33 = arith.constant 18 : index
    %c1_34 = arith.constant 1 : index
    %c0_35 = arith.constant 0 : index
    %31 = vector.load %arg1[%c0_32, %c18_33, %c1_34, %c0_35] : memref<1x36x9x4xbf16, #tpu.memory_space<vmem>>, vector<1x8x8x4xbf16>
    %32 = vector.shape_cast %31 : vector<1x8x8x4xbf16> to vector<64x4xbf16>
    %c5 = arith.constant 5 : index
    %c0_36 = arith.constant 0 : index
    %c0_37 = arith.constant 0 : index
    %33 = vector.load %arg3[%c5, %c0_36, %c0_37] : memref<9x4x128xbf16, #tpu.memory_space<vmem>>, vector<1x4x128xbf16>
    %34 = vector.shape_cast %33 : vector<1x4x128xbf16> to vector<4x128xbf16>
    %cst_38 = arith.constant dense<0.000000e+00> : vector<64x128xf32>
    %35 = tpu.matmul %32, %34, %cst_38 {dimension_numbers = #tpu.dot_dimension_numbers<[1], [0], [0], [1], [0, 0, 1, 1], [], []>} : vector<64x4xbf16>, vector<4x128xbf16>, vector<64x128xf32> -> vector<64x128xf32>
    %36 = arith.addf %30, %35 : vector<64x128xf32>
    %c0_39 = arith.constant 0 : index
    %c1_40 = arith.constant 1 : index
    %c0_41 = arith.constant 0 : index
    %c0_42 = arith.constant 0 : index
    %37 = vector.load %arg1[%c0_39, %c1_40, %c0_41, %c0_42] : memref<1x36x9x4xbf16, #tpu.memory_space<vmem>>, vector<1x8x8x4xbf16>
    %38 = vector.shape_cast %37 : vector<1x8x8x4xbf16> to vector<64x4xbf16>
    %c6 = arith.constant 6 : index
    %c0_43 = arith.constant 0 : index
    %c0_44 = arith.constant 0 : index
    %39 = vector.load %arg3[%c6, %c0_43, %c0_44] : memref<9x4x128xbf16, #tpu.memory_space<vmem>>, vector<1x4x128xbf16>
    %40 = vector.shape_cast %39 : vector<1x4x128xbf16> to vector<4x128xbf16>
    %cst_45 = arith.constant dense<0.000000e+00> : vector<64x128xf32>
    %41 = tpu.matmul %38, %40, %cst_45 {dimension_numbers = #tpu.dot_dimension_numbers<[1], [0], [0], [1], [0, 0, 1, 1], [], []>} : vector<64x4xbf16>, vector<4x128xbf16>, vector<64x128xf32> -> vector<64x128xf32>
    %42 = arith.addf %36, %41 : vector<64x128xf32>
    %c0_46 = arith.constant 0 : index
    %c10 = arith.constant 10 : index
    %c0_47 = arith.constant 0 : index
    %c0_48 = arith.constant 0 : index
    %43 = vector.load %arg1[%c0_46, %c10, %c0_47, %c0_48] : memref<1x36x9x4xbf16, #tpu.memory_space<vmem>>, vector<1x8x8x4xbf16>
    %44 = vector.shape_cast %43 : vector<1x8x8x4xbf16> to vector<64x4xbf16>
    %c7 = arith.constant 7 : index
    %c0_49 = arith.constant 0 : index
    %c0_50 = arith.constant 0 : index
    %45 = vector.load %arg3[%c7, %c0_49, %c0_50] : memref<9x4x128xbf16, #tpu.memory_space<vmem>>, vector<1x4x128xbf16>
    %46 = vector.shape_cast %45 : vector<1x4x128xbf16> to vector<4x128xbf16>
    %cst_51 = arith.constant dense<0.000000e+00> : vector<64x128xf32>
    %47 = tpu.matmul %44, %46, %cst_51 {dimension_numbers = #tpu.dot_dimension_numbers<[1], [0], [0], [1], [0, 0, 1, 1], [], []>} : vector<64x4xbf16>, vector<4x128xbf16>, vector<64x128xf32> -> vector<64x128xf32>
    %48 = arith.addf %42, %47 : vector<64x128xf32>
    %c0_52 = arith.constant 0 : index
    %c1_53 = arith.constant 1 : index
    %c1_54 = arith.constant 1 : index
    %c0_55 = arith.constant 0 : index
    %49 = vector.load %arg1[%c0_52, %c1_53, %c1_54, %c0_55] : memref<1x36x9x4xbf16, #tpu.memory_space<vmem>>, vector<1x8x8x4xbf16>
    %50 = vector.shape_cast %49 : vector<1x8x8x4xbf16> to vector<64x4xbf16>
    %c8 = arith.constant 8 : index
    %c0_56 = arith.constant 0 : index
    %c0_57 = arith.constant 0 : index
    %51 = vector.load %arg3[%c8, %c0_56, %c0_57] : memref<9x4x128xbf16, #tpu.memory_space<vmem>>, vector<1x4x128xbf16>
    %52 = vector.shape_cast %51 : vector<1x4x128xbf16> to vector<4x128xbf16>
    %cst_58 = arith.constant dense<0.000000e+00> : vector<64x128xf32>
    %53 = tpu.matmul %50, %52, %cst_58 {dimension_numbers = #tpu.dot_dimension_numbers<[1], [0], [0], [1], [0, 0, 1, 1], [], []>} : vector<64x4xbf16>, vector<4x128xbf16>, vector<64x128xf32> -> vector<64x128xf32>
    %54 = arith.addf %48, %53 : vector<64x128xf32>
    %c0_59 = arith.constant 0 : index
    %c0_60 = arith.constant 0 : index
    %55 = vector.load %arg4[%c0_59, %c0_60] : memref<1x128xf32, #tpu.memory_space<vmem>>, vector<1x128xf32>
    %56 = vector.broadcast %55 : vector<1x128xf32> to vector<64x128xf32>
    %57 = arith.addf %54, %56 : vector<64x128xf32>
    %cst_61 = arith.constant 0.000000e+00 : f32
    %58 = vector.broadcast %cst_61 : f32 to vector<64x128xf32>
    %59 = arith.maximumf %57, %58 : vector<64x128xf32>
    %cst_62 = arith.constant 0.000000e+00 : f32
    %60 = vector.broadcast %cst_62 : f32 to vector<1x10x10x128xf32>
    %c0_63 = arith.constant 0 : index
    %c0_64 = arith.constant 0 : index
    %c0_65 = arith.constant 0 : index
    %c0_66 = arith.constant 0 : index
    %61 = vector.load %arg9[%c0_63, %c0_64, %c0_65, %c0_66] : memref<1x10x10x128xf32, #tpu.memory_space<vmem>>, vector<1x10x10x128xf32>
    tpu.vector_store %arg9[%c0_63, %c0_64, %c0_65, %c0_66], %60 {strides = array<i32>} : memref<1x10x10x128xf32, #tpu.memory_space<vmem>>, vector<1x10x10x128xf32>,
    %62 = vector.shape_cast %59 : vector<64x128xf32> to vector<1x8x8x128xf32>
    %c0_67 = arith.constant 0 : index
    %c1_68 = arith.constant 1 : index
    %c1_69 = arith.constant 1 : index
    %c0_70 = arith.constant 0 : index
    %63 = vector.load %arg9[%c0_67, %c1_68, %c1_69, %c0_70] : memref<1x10x10x128xf32, #tpu.memory_space<vmem>>, vector<1x8x8x128xf32>
    tpu.vector_store %arg9[%c0_67, %c1_68, %c1_69, %c0_70], %62 {strides = array<i32>} : memref<1x10x10x128xf32, #tpu.memory_space<vmem>>, vector<1x8x8x128xf32>,
    %c0_71 = arith.constant 0 : index
    %c0_72 = arith.constant 0 : index
    %c0_73 = arith.constant 0 : index
    %c0_74 = arith.constant 0 : index
    %64 = vector.load %arg9[%c0_71, %c0_72, %c0_73, %c0_74] : memref<1x10x10x128xf32, #tpu.memory_space<vmem>>, vector<1x10x10x128xf32>
    %65 = arith.truncf %64 : vector<1x10x10x128xf32> to vector<1x10x10x128xbf16>
    %cst_75 = arith.constant 0.000000e+00 : f32
    %66 = vector.broadcast %cst_75 : f32 to vector<64x128xf32>
    %67 = vector.extract_strided_slice %65 {offsets = [0, 0, 0, 0], sizes = [1, 8, 8, 128], strides = [1, 1, 1, 1]} : vector<1x10x10x128xbf16> to vector<1x8x8x128xbf16>
    %68 = vector.shape_cast %67 : vector<1x8x8x128xbf16> to vector<64x128xbf16>
    %c0_76 = arith.constant 0 : index
    %c0_77 = arith.constant 0 : index
    %c0_78 = arith.constant 0 : index
    %69 = vector.load %arg5[%c0_76, %c0_77, %c0_78] : memref<9x128x128xbf16, #tpu.memory_space<vmem>>, vector<1x128x128xbf16>
    %70 = vector.shape_cast %69 : vector<1x128x128xbf16> to vector<128x128xbf16>
    %cst_79 = arith.constant dense<0.000000e+00> : vector<64x128xf32>
    %71 = tpu.matmul %68, %70, %cst_79 {dimension_numbers = #tpu.dot_dimension_numbers<[1], [0], [0], [1], [0, 0, 1, 1], [], []>} : vector<64x128xbf16>, vector<128x128xbf16>, vector<64x128xf32> -> vector<64x128xf32>
    %72 = arith.addf %66, %71 : vector<64x128xf32>
    %73 = vector.extract_strided_slice %65 {offsets = [0, 0, 1, 0], sizes = [1, 8, 8, 128], strides = [1, 1, 1, 1]} : vector<1x10x10x128xbf16> to vector<1x8x8x128xbf16>
    %74 = vector.shape_cast %73 : vector<1x8x8x128xbf16> to vector<64x128xbf16>
    %c1_80 = arith.constant 1 : index
    %c0_81 = arith.constant 0 : index
    %c0_82 = arith.constant 0 : index
    %75 = vector.load %arg5[%c1_80, %c0_81, %c0_82] : memref<9x128x128xbf16, #tpu.memory_space<vmem>>, vector<1x128x128xbf16>
    %76 = vector.shape_cast %75 : vector<1x128x128xbf16> to vector<128x128xbf16>
    %cst_83 = arith.constant dense<0.000000e+00> : vector<64x128xf32>
    %77 = tpu.matmul %74, %76, %cst_83 {dimension_numbers = #tpu.dot_dimension_numbers<[1], [0], [0], [1], [0, 0, 1, 1], [], []>} : vector<64x128xbf16>, vector<128x128xbf16>, vector<64x128xf32> -> vector<64x128xf32>
    %78 = arith.addf %72, %77 : vector<64x128xf32>
    %79 = vector.extract_strided_slice %65 {offsets = [0, 0, 2, 0], sizes = [1, 8, 8, 128], strides = [1, 1, 1, 1]} : vector<1x10x10x128xbf16> to vector<1x8x8x128xbf16>
    %80 = vector.shape_cast %79 : vector<1x8x8x128xbf16> to vector<64x128xbf16>
    %c2_84 = arith.constant 2 : index
    %c0_85 = arith.constant 0 : index
    %c0_86 = arith.constant 0 : index
    %81 = vector.load %arg5[%c2_84, %c0_85, %c0_86] : memref<9x128x128xbf16, #tpu.memory_space<vmem>>, vector<1x128x128xbf16>
    %82 = vector.shape_cast %81 : vector<1x128x128xbf16> to vector<128x128xbf16>
    %cst_87 = arith.constant dense<0.000000e+00> : vector<64x128xf32>
    %83 = tpu.matmul %80, %82, %cst_87 {dimension_numbers = #tpu.dot_dimension_numbers<[1], [0], [0], [1], [0, 0, 1, 1], [], []>} : vector<64x128xbf16>, vector<128x128xbf16>, vector<64x128xf32> -> vector<64x128xf32>
    %84 = arith.addf %78, %83 : vector<64x128xf32>
    %85 = vector.extract_strided_slice %65 {offsets = [0, 1, 0, 0], sizes = [1, 8, 8, 128], strides = [1, 1, 1, 1]} : vector<1x10x10x128xbf16> to vector<1x8x8x128xbf16>
    %86 = vector.shape_cast %85 : vector<1x8x8x128xbf16> to vector<64x128xbf16>
    %c3_88 = arith.constant 3 : index
    %c0_89 = arith.constant 0 : index
    %c0_90 = arith.constant 0 : index
    %87 = vector.load %arg5[%c3_88, %c0_89, %c0_90] : memref<9x128x128xbf16, #tpu.memory_space<vmem>>, vector<1x128x128xbf16>
    %88 = vector.shape_cast %87 : vector<1x128x128xbf16> to vector<128x128xbf16>
    %cst_91 = arith.constant dense<0.000000e+00> : vector<64x128xf32>
    %89 = tpu.matmul %86, %88, %cst_91 {dimension_numbers = #tpu.dot_dimension_numbers<[1], [0], [0], [1], [0, 0, 1, 1], [], []>} : vector<64x128xbf16>, vector<128x128xbf16>, vector<64x128xf32> -> vector<64x128xf32>
    %90 = arith.addf %84, %89 : vector<64x128xf32>
    %91 = vector.extract_strided_slice %65 {offsets = [0, 1, 1, 0], sizes = [1, 8, 8, 128], strides = [1, 1, 1, 1]} : vector<1x10x10x128xbf16> to vector<1x8x8x128xbf16>
    %92 = vector.shape_cast %91 : vector<1x8x8x128xbf16> to vector<64x128xbf16>
    %c4_92 = arith.constant 4 : index
    %c0_93 = arith.constant 0 : index
    %c0_94 = arith.constant 0 : index
    %93 = vector.load %arg5[%c4_92, %c0_93, %c0_94] : memref<9x128x128xbf16, #tpu.memory_space<vmem>>, vector<1x128x128xbf16>
    %94 = vector.shape_cast %93 : vector<1x128x128xbf16> to vector<128x128xbf16>
    %cst_95 = arith.constant dense<0.000000e+00> : vector<64x128xf32>
    %95 = tpu.matmul %92, %94, %cst_95 {dimension_numbers = #tpu.dot_dimension_numbers<[1], [0], [0], [1], [0, 0, 1, 1], [], []>} : vector<64x128xbf16>, vector<128x128xbf16>, vector<64x128xf32> -> vector<64x128xf32>
    %96 = arith.addf %90, %95 : vector<64x128xf32>
    %97 = vector.extract_strided_slice %65 {offsets = [0, 1, 2, 0], sizes = [1, 8, 8, 128], strides = [1, 1, 1, 1]} : vector<1x10x10x128xbf16> to vector<1x8x8x128xbf16>
    %98 = vector.shape_cast %97 : vector<1x8x8x128xbf16> to vector<64x128xbf16>
    %c5_96 = arith.constant 5 : index
    %c0_97 = arith.constant 0 : index
    %c0_98 = arith.constant 0 : index
    %99 = vector.load %arg5[%c5_96, %c0_97, %c0_98] : memref<9x128x128xbf16, #tpu.memory_space<vmem>>, vector<1x128x128xbf16>
    %100 = vector.shape_cast %99 : vector<1x128x128xbf16> to vector<128x128xbf16>
    %cst_99 = arith.constant dense<0.000000e+00> : vector<64x128xf32>
    %101 = tpu.matmul %98, %100, %cst_99 {dimension_numbers = #tpu.dot_dimension_numbers<[1], [0], [0], [1], [0, 0, 1, 1], [], []>} : vector<64x128xbf16>, vector<128x128xbf16>, vector<64x128xf32> -> vector<64x128xf32>
    %102 = arith.addf %96, %101 : vector<64x128xf32>
    %103 = vector.extract_strided_slice %65 {offsets = [0, 2, 0, 0], sizes = [1, 8, 8, 128], strides = [1, 1, 1, 1]} : vector<1x10x10x128xbf16> to vector<1x8x8x128xbf16>
    %104 = vector.shape_cast %103 : vector<1x8x8x128xbf16> to vector<64x128xbf16>
    %c6_100 = arith.constant 6 : index
    %c0_101 = arith.constant 0 : index
    %c0_102 = arith.constant 0 : index
    %105 = vector.load %arg5[%c6_100, %c0_101, %c0_102] : memref<9x128x128xbf16, #tpu.memory_space<vmem>>, vector<1x128x128xbf16>
    %106 = vector.shape_cast %105 : vector<1x128x128xbf16> to vector<128x128xbf16>
    %cst_103 = arith.constant dense<0.000000e+00> : vector<64x128xf32>
    %107 = tpu.matmul %104, %106, %cst_103 {dimension_numbers = #tpu.dot_dimension_numbers<[1], [0], [0], [1], [0, 0, 1, 1], [], []>} : vector<64x128xbf16>, vector<128x128xbf16>, vector<64x128xf32> -> vector<64x128xf32>
    %108 = arith.addf %102, %107 : vector<64x128xf32>
    %109 = vector.extract_strided_slice %65 {offsets = [0, 2, 1, 0], sizes = [1, 8, 8, 128], strides = [1, 1, 1, 1]} : vector<1x10x10x128xbf16> to vector<1x8x8x128xbf16>
    %110 = vector.shape_cast %109 : vector<1x8x8x128xbf16> to vector<64x128xbf16>
    %c7_104 = arith.constant 7 : index
    %c0_105 = arith.constant 0 : index
    %c0_106 = arith.constant 0 : index
    %111 = vector.load %arg5[%c7_104, %c0_105, %c0_106] : memref<9x128x128xbf16, #tpu.memory_space<vmem>>, vector<1x128x128xbf16>
    %112 = vector.shape_cast %111 : vector<1x128x128xbf16> to vector<128x128xbf16>
    %cst_107 = arith.constant dense<0.000000e+00> : vector<64x128xf32>
    %113 = tpu.matmul %110, %112, %cst_107 {dimension_numbers = #tpu.dot_dimension_numbers<[1], [0], [0], [1], [0, 0, 1, 1], [], []>} : vector<64x128xbf16>, vector<128x128xbf16>, vector<64x128xf32> -> vector<64x128xf32>
    %114 = arith.addf %108, %113 : vector<64x128xf32>
    %115 = vector.extract_strided_slice %65 {offsets = [0, 2, 2, 0], sizes = [1, 8, 8, 128], strides = [1, 1, 1, 1]} : vector<1x10x10x128xbf16> to vector<1x8x8x128xbf16>
    %116 = vector.shape_cast %115 : vector<1x8x8x128xbf16> to vector<64x128xbf16>
    %c8_108 = arith.constant 8 : index
    %c0_109 = arith.constant 0 : index
    %c0_110 = arith.constant 0 : index
    %117 = vector.load %arg5[%c8_108, %c0_109, %c0_110] : memref<9x128x128xbf16, #tpu.memory_space<vmem>>, vector<1x128x128xbf16>
    %118 = vector.shape_cast %117 : vector<1x128x128xbf16> to vector<128x128xbf16>
    %cst_111 = arith.constant dense<0.000000e+00> : vector<64x128xf32>
    %119 = tpu.matmul %116, %118, %cst_111 {dimension_numbers = #tpu.dot_dimension_numbers<[1], [0], [0], [1], [0, 0, 1, 1], [], []>} : vector<64x128xbf16>, vector<128x128xbf16>, vector<64x128xf32> -> vector<64x128xf32>
    %120 = arith.addf %114, %119 : vector<64x128xf32>
    %c0_112 = arith.constant 0 : index
    %c0_113 = arith.constant 0 : index
    %c0_114 = arith.constant 0 : index
    %c0_115 = arith.constant 0 : index
    %121 = vector.load %arg2[%c0_112, %c0_113, %c0_114, %c0_115] : memref<1x8x8x4xbf16, #tpu.memory_space<vmem>>, vector<1x8x8x4xbf16>
    %122 = vector.shape_cast %121 : vector<1x8x8x4xbf16> to vector<64x4xbf16>
    %c0_116 = arith.constant 0 : index
    %c0_117 = arith.constant 0 : index
    %123 = vector.load %arg7[%c0_116, %c0_117] : memref<4x128xbf16, #tpu.memory_space<vmem>>, vector<4x128xbf16>
    %cst_118 = arith.constant dense<0.000000e+00> : vector<64x128xf32>
    %124 = tpu.matmul %122, %123, %cst_118 {dimension_numbers = #tpu.dot_dimension_numbers<[1], [0], [0], [1], [0, 0, 1, 1], [], []>} : vector<64x4xbf16>, vector<4x128xbf16>, vector<64x128xf32> -> vector<64x128xf32>
    %125 = arith.addf %120, %124 : vector<64x128xf32>
    %c0_119 = arith.constant 0 : index
    %c0_120 = arith.constant 0 : index
    %126 = vector.load %arg6[%c0_119, %c0_120] : memref<1x128xf32, #tpu.memory_space<vmem>>, vector<1x128xf32>
    %127 = vector.broadcast %126 : vector<1x128xf32> to vector<64x128xf32>
    %128 = arith.addf %125, %127 : vector<64x128xf32>
    %cst_121 = arith.constant 0.000000e+00 : f32
    %129 = vector.broadcast %cst_121 : f32 to vector<64x128xf32>
    %130 = arith.maximumf %128, %129 : vector<64x128xf32>
    %131 = vector.shape_cast %130 : vector<64x128xf32> to vector<1x8x8x128xf32>
    %132 = arith.truncf %131 : vector<1x8x8x128xf32> to vector<1x8x8x128xbf16>
    %c0_122 = arith.constant 0 : index
    %c0_123 = arith.constant 0 : index
    %c0_124 = arith.constant 0 : index
    %c0_125 = arith.constant 0 : index
    %133 = vector.load %arg8[%c0_122, %c0_123, %c0_124, %c0_125] : memref<1x8x8x128xbf16, #tpu.memory_space<vmem>>, vector<1x8x8x128xbf16>
    tpu.vector_store %arg8[%c0_122, %c0_123, %c0_124, %c0_125], %132 {strides = array<i32>} : memref<1x8x8x128xbf16, #tpu.memory_space<vmem>>, vector<1x8x8x128xbf16>,
    return
  }
  func.func @transform_0(%arg0: i32) -> (i32, i32, i32, i32) {
    %c0_i32 = arith.constant 0 : i32
    %c0_i32_0 = arith.constant 0 : i32
    %c0_i32_1 = arith.constant 0 : i32
    %c0_i32_2 = arith.constant 0 : i32
    return %arg0, %c0_i32, %c0_i32_0, %c0_i32_1 : i32, i32, i32, i32
  }
  func.func @transform_1(%arg0: i32) -> (i32, i32, i32, i32) {
    %c0_i32 = arith.constant 0 : i32
    %c0_i32_0 = arith.constant 0 : i32
    %c0_i32_1 = arith.constant 0 : i32
    %c0_i32_2 = arith.constant 0 : i32
    return %arg0, %c0_i32, %c0_i32_0, %c0_i32_1 : i32, i32, i32, i32
  }
  func.func @transform_2(%arg0: i32) -> (i32, i32, i32) {
    %c0_i32 = arith.constant 0 : i32
    %c0_i32_0 = arith.constant 0 : i32
    %c0_i32_1 = arith.constant 0 : i32
    %c0_i32_2 = arith.constant 0 : i32
    return %c0_i32, %c0_i32_0, %c0_i32_1 : i32, i32, i32
  }
  func.func @transform_3(%arg0: i32) -> (i32, i32) {
    %c0_i32 = arith.constant 0 : i32
    %c0_i32_0 = arith.constant 0 : i32
    %c0_i32_1 = arith.constant 0 : i32
    return %c0_i32, %c0_i32_0 : i32, i32
  }
  func.func @transform_4(%arg0: i32) -> (i32, i32, i32) {
    %c0_i32 = arith.constant 0 : i32
    %c0_i32_0 = arith.constant 0 : i32
    %c0_i32_1 = arith.constant 0 : i32
    %c0_i32_2 = arith.constant 0 : i32
    return %c0_i32, %c0_i32_0, %c0_i32_1 : i32, i32, i32
  }
  func.func @transform_5(%arg0: i32) -> (i32, i32) {
    %c0_i32 = arith.constant 0 : i32
    %c0_i32_0 = arith.constant 0 : i32
    %c0_i32_1 = arith.constant 0 : i32
    return %c0_i32, %c0_i32_0 : i32, i32
  }
  func.func @transform_6(%arg0: i32) -> (i32, i32) {
    %c0_i32 = arith.constant 0 : i32
    %c0_i32_0 = arith.constant 0 : i32
    %c0_i32_1 = arith.constant 0 : i32
    return %c0_i32, %c0_i32_0 : i32, i32
  }
  func.func @transform_7(%arg0: i32) -> (i32, i32, i32, i32) {
    %c0_i32 = arith.constant 0 : i32
    %c0_i32_0 = arith.constant 0 : i32
    %c0_i32_1 = arith.constant 0 : i32
    %c0_i32_2 = arith.constant 0 : i32
    return %arg0, %c0_i32, %c0_i32_0, %c0_i32_1 : i32, i32, i32, i32
  }
}

</mosaic_0001>

<llo_original>
// kernel: tpu_custom_call.1
$region0: #{tpu_custom_call.1}
  #allocation0 [shape = 'u32[]', space=smem, size = 0x4, offset = 0x4, fixed_abs, tag = 'smem constant byte address 0x4 - core index']
  #allocation1 [shape = 'u32[144,128]{1,0:T(1,128)}', space=vmem, size = 0x12000, scoped, tag = 'internal scratch']
  #allocation2 [shape = 'f32[1,10,10,128]{3,2,1,0:T(8,128)}', space=vmem, size = 0x14000, scoped, tag = 'scratch operand']
  %s0 = inlined_call_operand.vmem [shape: bf16[2,36,9,4], index: 0, kind: input, shape index: {}]
  %s1 = inlined_call_operand.vmem [shape: bf16[2,8,8,4], index: 1, kind: input, shape index: {}]
  %s2 = inlined_call_operand.vmem [shape: bf16[9,4,128], index: 2, kind: input, shape index: {}]
  %s3 = inlined_call_operand.vmem [shape: f32[1,128], index: 3, kind: input, shape index: {}]
  %s4 = inlined_call_operand.vmem [shape: bf16[9,128,128], index: 4, kind: input, shape index: {}]
  %s5 = inlined_call_operand.vmem [shape: f32[1,128], index: 5, kind: input, shape index: {}]
  %s6 = inlined_call_operand.vmem [shape: bf16[4,128], index: 6, kind: input, shape index: {}]
  %s7 = inlined_call_operand.hbm [shape: bf16[2,8,8,128], index: 7, kind: output, shape index: {}]
  %s8 = sld [smem:[#allocation0]]
  $region61: #{tpu_custom_call.1} parent=0
    _
  %s10 = ssub.s32 1, %s8
  %s11 = scalar_select 0, %s10, %s8
  $region1: #{tpu_custom_call.1} parent=0
    #allocation3 [shape = 'u8[32768]{0}', space=vmem, size = 0x8000, scoped, tag = 'output window, operand 0']
    #allocation4 [shape = 's32[2]{0}', space=sflag, size = 0x8, scoped, tag = 'scoped memory for tpu_custom_call.1']
    %12 = vsyncpa [#allocation4], 0
    %s13 = scalar_lea.sflag [#allocation4], 1
    %14 = vsyncpa %s13, 0
    loop: start=0, step=1, limit=4
    $region2: #{tpu_custom_call.1} parent=1 // loop_pre_header
      _
    $region3: #{tpu_custom_call.1} parent=1 // loop_header
      %s16 = sphi 0, %s20
      %p17 = scmp.ge.s32.totalorder %s16, 4
      %s26 = sphi 0, %s28
      %s29 = sphi 0, %s26
      %s30 = sphi 0, %s29
      %s46 = sphi 0, %s30
      %s52 = sphi 0, %s54
      %s55 = sphi 0, %s52
      %s56 = sphi 0, %s55
      %s72 = sphi 0, %s56
      %s76 = sphi 0, %s76
      %s78 = sphi 0, %s76
      %s79 = sphi 0, %s78
      %s93 = sphi 0, %s79
      %s97 = sphi 0, %s97
      %s99 = sphi 0, %s97
      %s100 = sphi 0, %s99
      %s114 = sphi 0, %s100
      %s118 = sphi 0, %s118
      %s120 = sphi 0, %s118
      %s121 = sphi 0, %s120
      %s135 = sphi 0, %s121
      %s139 = sphi 0, %s139
      %s141 = sphi 0, %s139
      %s142 = sphi 0, %s141
      %s156 = sphi 0, %s142
      %s160 = sphi 0, %s160
      %s162 = sphi 0, %s160
      %s163 = sphi 0, %s162
      %s177 = sphi 0, %s163
      %s183 = sphi 0, %s185
      %s186 = sphi 0, %s183
      %s187 = sphi 0, %s186
      %s203 = sphi 0, %s187
    $region4: #{tpu_custom_call.1} parent=1 // loop_header_branch
      %19 = sbr.rel (%p17) target = $region8
    $region5: #{tpu_custom_call.1} parent=1 // loop_body
      %s21 = ssub.s32 %s16, 1
      %s22 = ssub.s32 %s16, 2
      %s23 = sadd.s32 %s16, 1
      %s24 = ssub.s32 %s16, %s23
      %p25 = scmp.eq.s32.totalorder %s24, 0
      %s27 = sadd.s32 %s26, 1
      %s28 = scalar_select %p25, %s26, %s27
      %p31 = pneg %p25
      %p32 = scmp.eq.s32.totalorder %s16, 1
      %p33 = por %p31, %p32
      %p34 = scmp.ne.s32.totalorder %s26, %s29
      %p35 = scmp.eq.s32.totalorder %s16, 0
      %p36 = por %p34, %p35
      %p37 = scmp.ne.s32.totalorder %s26, %s29
      %p38 = scmp.eq.s32.totalorder %s21, 1
      %p39 = por %p37, %p38
      %p40 = scmp.ne.s32.totalorder %s29, %s30
      %p41 = scmp.eq.s32.totalorder %s21, 0
      %p42 = por %p40, %p41
      %p43 = scmp.ne.s32.totalorder %s29, %s30
      %p44 = scmp.eq.s32.totalorder %s22, 1
      %p45 = por %p43, %p44
      %p47 = scmp.ne.s32.totalorder %s30, %s46
      %p48 = scmp.eq.s32.totalorder %s22, 0
      %p49 = por %p47, %p48
      %s50 = ssub.s32 %s16, %s23
      %p51 = scmp.eq.s32.totalorder %s50, 0
      %s53 = sadd.s32 %s52, 1
      %s54 = scalar_select %p51, %s52, %s53
      %p57 = pneg %p51
      %p58 = scmp.eq.s32.totalorder %s16, 1
      %p59 = por %p57, %p58
      %p60 = scmp.ne.s32.totalorder %s52, %s55
      %p61 = scmp.eq.s32.totalorder %s16, 0
      %p62 = por %p60, %p61
      %p63 = scmp.ne.s32.totalorder %s52, %s55
      %p64 = scmp.eq.s32.totalorder %s21, 1
      %p65 = por %p63, %p64
      %p66 = scmp.ne.s32.totalorder %s55, %s56
      %p67 = scmp.eq.s32.totalorder %s21, 0
      %p68 = por %p66, %p67
      %p69 = scmp.ne.s32.totalorder %s55, %s56
      %p70 = scmp.eq.s32.totalorder %s22, 1
      %p71 = por %p69, %p70
      %p73 = scmp.ne.s32.totalorder %s56, %s72
      %p74 = scmp.eq.s32.totalorder %s22, 0
      %p75 = por %p73, %p74
      %s77 = sadd.s32 %s76, 1
      %p80 = scmp.eq.s32.totalorder %s16, 1
      %p81 = scmp.ne.s32.totalorder %s76, %s78
      %p82 = scmp.eq.s32.totalorder %s16, 0
      %p83 = por %p81, %p82
      %p84 = scmp.ne.s32.totalorder %s76, %s78
      %p85 = scmp.eq.s32.totalorder %s21, 1
      %p86 = por %p84, %p85
      %p87 = scmp.ne.s32.totalorder %s78, %s79
      %p88 = scmp.eq.s32.totalorder %s21, 0
      %p89 = por %p87, %p88
      %p90 = scmp.ne.s32.totalorder %s78, %s79
      %p91 = scmp.eq.s32.totalorder %s22, 1
      %p92 = por %p90, %p91
      %p94 = scmp.ne.s32.totalorder %s79, %s93
      %p95 = scmp.eq.s32.totalorder %s22, 0
      %p96 = por %p94, %p95
      %s98 = sadd.s32 %s97, 1
      %p101 = scmp.eq.s32.totalorder %s16, 1
      %p102 = scmp.ne.s32.totalorder %s97, %s99
      %p103 = scmp.eq.s32.totalorder %s16, 0
      %p104 = por %p102, %p103
      %p105 = scmp.ne.s32.totalorder %s97, %s99
      %p106 = scmp.eq.s32.totalorder %s21, 1
      %p107 = por %p105, %p106
      %p108 = scmp.ne.s32.totalorder %s99, %s100
      %p109 = scmp.eq.s32.totalorder %s21, 0
      %p110 = por %p108, %p109
      %p111 = scmp.ne.s32.totalorder %s99, %s100
      %p112 = scmp.eq.s32.totalorder %s22, 1
      %p113 = por %p111, %p112
      %p115 = scmp.ne.s32.totalorder %s100, %s114
      %p116 = scmp.eq.s32.totalorder %s22, 0
      %p117 = por %p115, %p116
      %s119 = sadd.s32 %s118, 1
      %p122 = scmp.eq.s32.totalorder %s16, 1
      %p123 = scmp.ne.s32.totalorder %s118, %s120
      %p124 = scmp.eq.s32.totalorder %s16, 0
      %p125 = por %p123, %p124
      %p126 = scmp.ne.s32.totalorder %s118, %s120
      %p127 = scmp.eq.s32.totalorder %s21, 1
      %p128 = por %p126, %p127
      %p129 = scmp.ne.s32.totalorder %s120, %s121
      %p130 = scmp.eq.s32.totalorder %s21, 0
      %p131 = por %p129, %p130
      %p132 = scmp.ne.s32.totalorder %s120, %s121
      %p133 = scmp.eq.s32.totalorder %s22, 1
      %p134 = por %p132, %p133
      %p136 = scmp.ne.s32.totalorder %s121, %s135
      %p137 = scmp.eq.s32.totalorder %s22, 0
      %p138 = por %p136, %p137
      %s140 = sadd.s32 %s139, 1
      %p143 = scmp.eq.s32.totalorder %s16, 1
      %p144 = scmp.ne.s32.totalorder %s139, %s141
      %p145 = scmp.eq.s32.totalorder %s16, 0
      %p146 = por %p144, %p145
      %p147 = scmp.ne.s32.totalorder %s139, %s141
      %p148 = scmp.eq.s32.totalorder %s21, 1
      %p149 = por %p147, %p148
      %p150 = scmp.ne.s32.totalorder %s141, %s142
      %p151 = scmp.eq.s32.totalorder %s21, 0
      %p152 = por %p150, %p151
      %p153 = scmp.ne.s32.totalorder %s141, %s142
      %p154 = scmp.eq.s32.totalorder %s22, 1
      %p155 = por %p153, %p154
      %p157 = scmp.ne.s32.totalorder %s142, %s156
      %p158 = scmp.eq.s32.totalorder %s22, 0
      %p159 = por %p157, %p158
      %s161 = sadd.s32 %s160, 1
      %p164 = scmp.eq.s32.totalorder %s16, 1
      %p165 = scmp.ne.s32.totalorder %s160, %s162
      %p166 = scmp.eq.s32.totalorder %s16, 0
      %p167 = por %p165, %p166
      %p168 = scmp.ne.s32.totalorder %s160, %s162
      %p169 = scmp.eq.s32.totalorder %s21, 1
      %p170 = por %p168, %p169
      %p171 = scmp.ne.s32.totalorder %s162, %s163
      %p172 = scmp.eq.s32.totalorder %s21, 0
      %p173 = por %p171, %p172
      %p174 = scmp.ne.s32.totalorder %s162, %s163
      %p175 = scmp.eq.s32.totalorder %s22, 1
      %p176 = por %p174, %p175
      %p178 = scmp.ne.s32.totalorder %s163, %s177
      %p179 = scmp.eq.s32.totalorder %s22, 0
      %p180 = por %p178, %p179
      %s181 = ssub.s32 %s16, %s23
      %p182 = scmp.eq.s32.totalorder %s181, 0
      %s184 = sadd.s32 %s183, 1
      %s185 = scalar_select %p182, %s183, %s184
      %p188 = pneg %p182
      %p189 = scmp.eq.s32.totalorder %s16, 1
      %p190 = por %p188, %p189
      %p191 = scmp.ne.s32.totalorder %s183, %s186
      %p192 = scmp.eq.s32.totalorder %s16, 0
      %p193 = por %p191, %p192
      %p194 = scmp.ne.s32.totalorder %s183, %s186
      %p195 = scmp.eq.s32.totalorder %s21, 1
      %p196 = por %p194, %p195
      %p197 = scmp.ne.s32.totalorder %s186, %s187
      %p198 = scmp.eq.s32.totalorder %s21, 0
      %p199 = por %p197, %p198
      %p200 = scmp.ne.s32.totalorder %s186, %s187
      %p201 = scmp.eq.s32.totalorder %s22, 1
      %p202 = por %p200, %p201
      %p204 = scmp.ne.s32.totalorder %s187, %s203
      %p205 = scmp.eq.s32.totalorder %s22, 0
      %p206 = por %p204, %p205
      %p207 = scmp.le.s32.totalorder 1, %s16
      %p208 = scmp.lt.s32.totalorder %s16, 3
      %p209 = pnand %p207, %p208
      %p210 = pneg %p209
      // Predicated region
      $region9: #{tpu_custom_call.1} parent=5 // pred_check
        _
      $region10: #{tpu_custom_call.1} parent=5 // pred_check_branch
        %212 = sbr.rel (%p209) target = $region12
      $region11: #{tpu_custom_call.1} parent=5 // pred_region
        %s213 = ssub.s32 %s16, 1
        // Predicated region
        $region13: #{tpu_custom_call.1} parent=11 // pred_check
          %p214 = pneg %p89
        $region14: #{tpu_custom_call.1} parent=11 // pred_check_branch
          %216 = sbr.rel (%p214) target = $region16
        $region15: #{tpu_custom_call.1} parent=11 // pred_region
          _
        $region16: #{tpu_custom_call.1} parent=11 // pred_fallthru
          _
        // Predicated region
        $region17: #{tpu_custom_call.1} parent=11 // pred_check
          %p217 = pneg %p110
        $region18: #{tpu_custom_call.1} parent=11 // pred_check_branch
          %219 = sbr.rel (%p217) target = $region20
        $region19: #{tpu_custom_call.1} parent=11 // pred_region
          _
        $region20: #{tpu_custom_call.1} parent=11 // pred_fallthru
          _
        // Predicated region
        $region21: #{tpu_custom_call.1} parent=11 // pred_check
          %p220 = pneg %p131
        $region22: #{tpu_custom_call.1} parent=11 // pred_check_branch
          %222 = sbr.rel (%p220) target = $region24
        $region23: #{tpu_custom_call.1} parent=11 // pred_region
          _
        $region24: #{tpu_custom_call.1} parent=11 // pred_fallthru
          _
        // Predicated region
        $region25: #{tpu_custom_call.1} parent=11 // pred_check
          %p223 = pneg %p152
        $region26: #{tpu_custom_call.1} parent=11 // pred_check_branch
          %225 = sbr.rel (%p223) target = $region28
        $region27: #{tpu_custom_call.1} parent=11 // pred_region
          _
        $region28: #{tpu_custom_call.1} parent=11 // pred_fallthru
          _
        // Predicated region
        $region29: #{tpu_custom_call.1} parent=11 // pred_check
          %p226 = pneg %p173
        $region30: #{tpu_custom_call.1} parent=11 // pred_check_branch
          %228 = sbr.rel (%p226) target = $region32
        $region31: #{tpu_custom_call.1} parent=11 // pred_region
          _
        $region32: #{tpu_custom_call.1} parent=11 // pred_fallthru
          _
      $region12: #{tpu_custom_call.1} parent=5 // pred_fallthru
        _
      %p229 = scmp.lt.s32.totalorder %s16, 2
      // Predicated region
      $region33: #{tpu_custom_call.1} parent=5 // pred_check
        %p230 = pneg %p229
      $region34: #{tpu_custom_call.1} parent=5 // pred_check_branch
        %232 = sbr.rel (%p230) target = $region36
      $region35: #{tpu_custom_call.1} parent=5 // pred_region
        // Predicated region
        $region37: #{tpu_custom_call.1} parent=35 // pred_check
          %p233 = pneg %p36
        $region38: #{tpu_custom_call.1} parent=35 // pred_check_branch
          %235 = sbr.rel (%p233) target = $region40
        $region39: #{tpu_custom_call.1} parent=35 // pred_region
          %p236 = scmp.lt.s32.totalorder %s16, 1
          %s237 = scalar_select %p236, %s16, 1
          %s238 = smul.addr %s237, 72
          %s239 = smul.addr %s238, 4
          %s240 = scalar_lea.vmem %s0, %s239
        $region40: #{tpu_custom_call.1} parent=35 // pred_fallthru
          _
        // Predicated region
        $region41: #{tpu_custom_call.1} parent=35 // pred_check
          %p241 = pneg %p62
        $region42: #{tpu_custom_call.1} parent=35 // pred_check_branch
          %243 = sbr.rel (%p241) target = $region44
        $region43: #{tpu_custom_call.1} parent=35 // pred_region
          %p244 = scmp.lt.s32.totalorder %s16, 1
          %s245 = scalar_select %p244, %s16, 1
          %s246 = smul.addr %s245, 8
          %s247 = smul.addr %s246, 4
          %s248 = scalar_lea.vmem %s1, %s247
        $region44: #{tpu_custom_call.1} parent=35 // pred_fallthru
          _
      $region36: #{tpu_custom_call.1} parent=5 // pred_fallthru
        _
      %p249 = scmp.le.s32.totalorder 1, %s16
      %p250 = scmp.lt.s32.totalorder %s16, 3
      %p251 = pnand %p249, %p250
      %p252 = pneg %p251
      // Predicated region
      $region45: #{tpu_custom_call.1} parent=5 // pred_check
        _
      $region46: #{tpu_custom_call.1} parent=5 // pred_check_branch
        %254 = sbr.rel (%p251) target = $region48
      $region47: #{tpu_custom_call.1} parent=5 // pred_region
        %s255 = ssub.s32 %s16, 1
        %p256 = scmp.lt.s32.totalorder %s21, 1
        %s257 = scalar_select %p256, %s21, 1
        %s258 = smul.addr %s257, 72
        %s259 = smul.addr %s258, 4
        %s260 = scalar_lea.vmem %s0, %s259
        %p261 = pneg %p42
        %p262 = pneg %p39
        %p263 = scmp.lt.s32.totalorder %s21, 1
        %s264 = scalar_select %p263, %s21, 1
        %s265 = smul.addr %s264, 8
        %s266 = smul.addr %s265, 4
        %s267 = scalar_lea.vmem %s1, %s266
        %p268 = pneg %p68
        %p269 = pneg %p65
        %p270 = pneg %p89
        %p271 = pneg %p86
        %p272 = pneg %p110
        %p273 = pneg %p107
        %p274 = pneg %p131
        %p275 = pneg %p128
        %p276 = pneg %p152
        %p277 = pneg %p149
        %p278 = pneg %p173
        %p279 = pneg %p170
        %p280 = pneg %p199
        %p281 = pneg %p196
        %s282 = sand.u32 %s186, 1
        %s283 = scalar_lea.sflag [#allocation4], %s282
        %s284 = sand.u32 %s186, 1
        %s285 = smul.addr %s284, 32
        %s286 = scalar_lea.vmem [#allocation3], %s285
        %p287 = scmp.lt.s32.totalorder %s21, 1
        %s288 = scalar_select %p287, %s21, 1
        %s289 = smul.addr %s288, 72
        %s290 = smul.addr %s289, 4
        %s291 = scalar_lea.vmem %s0, %s290
        %p292 = scmp.lt.s32.totalorder %s21, 1
        %s293 = scalar_select %p292, %s21, 1
        %s294 = smul.addr %s293, 8
        %s295 = smul.addr %s294, 4
        %s296 = scalar_lea.vmem %s1, %s295
        %v298 = vld [vmem:[%s291] sm:$0xf]
        %v299 = vld [vmem:[%s291 + $0x8] sm:$0xf]
        %v300 = vld [vmem:[%s291 + $0x10] sm:$0xf]
        %v301 = vld [vmem:[%s291 + $0x18] sm:$0xf]
        %v302 = vld [vmem:[%s291 + $0x20] sm:$0xf]
        %v303 = vld [vmem:[%s291 + $0x28] sm:$0xf]
        %v304 = vld [vmem:[%s291 + $0x30] sm:$0xf]
        %v305 = vld [vmem:[%s291 + $0x38] sm:$0xf]
        %v306 = vld [vmem:[%s2] sm:$0x3]
        %s307 = scalar_lea.vmem %s291, 72
        %v308 = vld [vmem:[%s307] sm:$0xf]
        %v309 = vld [vmem:[%s307 + $0x8] sm:$0xf]
        %v310 = vld [vmem:[%s307 + $0x10] sm:$0xf]
        %v311 = vld [vmem:[%s307 + $0x18] sm:$0xf]
        %v312 = vld [vmem:[%s307 + $0x20] sm:$0xf]
        %v313 = vld [vmem:[%s307 + $0x28] sm:$0xf]
        %v314 = vld [vmem:[%s307 + $0x30] sm:$0xf]
        %v315 = vld [vmem:[%s307 + $0x38] sm:$0xf]
        %s316 = scalar_lea.vmem %s2, 2
        %v317 = vld [vmem:[%s316] sm:$0x3]
        %v326 = vunpack.c.l.b16 %v308
        %v327 = vunpack.c.l.b16 %v309
        %v328 = vunpack.c.l.b16 %v310
        %v329 = vunpack.c.l.b16 %v311
        %v330 = vunpack.c.l.b16 %v312
        %v331 = vunpack.c.l.b16 %v313
        %v332 = vunpack.c.l.b16 %v314
        %v333 = vunpack.c.l.b16 %v315
        %v334 = vpack.c.b16 %v327, %v326
        %v335 = vpack.c.b16 %v329, %v328
        %v336 = vpack.c.b16 %v331, %v330
        %v337 = vpack.c.b16 %v333, %v332
        %vm338 = vcmask 31744
        %v340 = vsel %vm338, %v334, 0
        %v343 = vsel %vm338, %v335, 0
        %v346 = vsel %vm338, %v336, 0
        %v349 = vsel %vm338, %v337, 0
        %vm351 = vcmask 1041408
        %v353 = vsel %vm351, %v317, 0
        %355 = vmatprep.subr.bf16.mxu0 0
        %356 = vmatpush1.bf16.msra.mxu0 %v353
        %357 = vmatprep.subr.bf16.mxu0 0
        %358 = vmatpush1.bf16.msra.mxu0 0
        %359 = vmatprep.subr.bf16.mxu0 0
        %360 = vmatpush1.bf16.msra.mxu0 0
        %361 = vmatprep.subr.bf16.mxu0 0
        %362 = vmatpush1.bf16.msra.mxu0 0
        %363 = vmatprep.subr.bf16.mxu0 0
        %364 = vmatpush1.bf16.msra.mxu0 0
        %365 = vmatprep.subr.bf16.mxu0 0
        %366 = vmatpush1.bf16.msra.mxu0 0
        %367 = vmatprep.subr.bf16.mxu0 0
        %368 = vmatpush1.bf16.msra.mxu0 0
        %369 = vmatprep.subr.bf16.mxu0 0
        %370 = vmatpush1.bf16.msra.mxu0 0
        %371 = vmatprep.subr.bf16.mxu0 0
        %372 = vmatpush1.bf16.msra.mxu0 0
        %373 = vmatprep.subr.bf16.mxu0 0
        %374 = vmatpush1.bf16.msra.mxu0 0
        %375 = vmatprep.subr.bf16.mxu0 0
        %376 = vmatpush1.bf16.msra.mxu0 0
        %377 = vmatprep.subr.bf16.mxu0 0
        %378 = vmatpush1.bf16.msra.mxu0 0
        %379 = vmatprep.subr.bf16.mxu0 0
        %380 = vmatpush1.bf16.msra.mxu0 0
        %381 = vmatprep.subr.bf16.mxu0 0
        %382 = vmatpush1.bf16.msra.mxu0 0
        %383 = vmatprep.subr.bf16.mxu0 0
        %384 = vmatpush1.bf16.msra.mxu0 0
        %385 = vmatprep.subr.bf16.mxu0 0
        %386 = vmatpush1.bf16.msra.mxu0 0
        %387 = vmatprep.mubr.bf16.mxu0 0
        %388 = vmatmul.mubr.bf16.gmra.mrb[0].mxu0 %v340
        %v389 = vpop.f32.mrb[0].mxu0
        %v390 = vadd.f32 0.0, %v389
        %v391 = vpop.f32.mrb[0].mxu0
        %v392 = vpop.f32.mrb[0].mxu0
        %v393 = vadd.f32 0.0, %v392
        %v394 = vpop.f32.mrb[0].mxu0
        %395 = vmatprep.mubr.bf16.mxu0 0
        %396 = vmatmul.mubr.bf16.gmra.mrb[0].mxu0 %v343
        %v397 = vpop.f32.mrb[0].mxu0
        %v398 = vadd.f32 0.0, %v397
        %v399 = vpop.f32.mrb[0].mxu0
        %v400 = vpop.f32.mrb[0].mxu0
        %v401 = vadd.f32 0.0, %v400
        %v402 = vpop.f32.mrb[0].mxu0
        %403 = vmatprep.mubr.bf16.mxu0 0
        %404 = vmatmul.mubr.bf16.gmra.mrb[0].mxu0 %v346
        %v405 = vpop.f32.mrb[0].mxu0
        %v406 = vadd.f32 0.0, %v405
        %v407 = vpop.f32.mrb[0].mxu0
        %v408 = vpop.f32.mrb[0].mxu0
        %v409 = vadd.f32 0.0, %v408
        %v410 = vpop.f32.mrb[0].mxu0
        %411 = vmatprep.mubr.bf16.mxu0 0
        %412 = vmatmul.mubr.bf16.gmra.mrb[0].mxu0 %v349
        %v413 = vpop.f32.mrb[0].mxu0
        %v414 = vadd.f32 0.0, %v413
        %v415 = vpop.f32.mrb[0].mxu0
        %v416 = vpop.f32.mrb[0].mxu0
        %v417 = vadd.f32 0.0, %v416
        %v418 = vpop.f32.mrb[0].mxu0
        %419 = vdwg.mxu0
        %v428 = vunpack.c.l.b16 %v298
        %v429 = vunpack.c.l.b16 %v299
        %v430 = vunpack.c.l.b16 %v300
        %v431 = vunpack.c.l.b16 %v301
        %v432 = vunpack.c.l.b16 %v302
        %v433 = vunpack.c.l.b16 %v303
        %v434 = vunpack.c.l.b16 %v304
        %v435 = vunpack.c.l.b16 %v305
        %v436 = vpack.c.b16 %v429, %v428
        %v437 = vpack.c.b16 %v431, %v430
        %v438 = vpack.c.b16 %v433, %v432
        %v439 = vpack.c.b16 %v435, %v434
        %v441 = vsel %vm338, %v436, 0
        %v444 = vsel %vm338, %v437, 0
        %v447 = vsel %vm338, %v438, 0
        %v450 = vsel %vm338, %v439, 0
        %v453 = vsel %vm351, %v306, 0
        %455 = vmatprep.subr.bf16.mxu0 0
        %456 = vmatpush1.bf16.msra.mxu0 %v453
        %457 = vmatprep.subr.bf16.mxu0 0
        %458 = vmatpush1.bf16.msra.mxu0 0
        %459 = vmatprep.subr.bf16.mxu0 0
        %460 = vmatpush1.bf16.msra.mxu0 0
        %461 = vmatprep.subr.bf16.mxu0 0
        %462 = vmatpush1.bf16.msra.mxu0 0
        %463 = vmatprep.subr.bf16.mxu0 0
        %464 = vmatpush1.bf16.msra.mxu0 0
        %465 = vmatprep.subr.bf16.mxu0 0
        %466 = vmatpush1.bf16.msra.mxu0 0
        %467 = vmatprep.subr.bf16.mxu0 0
        %468 = vmatpush1.bf16.msra.mxu0 0
        %469 = vmatprep.subr.bf16.mxu0 0
        %470 = vmatpush1.bf16.msra.mxu0 0
        %471 = vmatprep.subr.bf16.mxu0 0
        %472 = vmatpush1.bf16.msra.mxu0 0
        %473 = vmatprep.subr.bf16.mxu0 0
        %474 = vmatpush1.bf16.msra.mxu0 0
        %475 = vmatprep.subr.bf16.mxu0 0
        %476 = vmatpush1.bf16.msra.mxu0 0
        %477 = vmatprep.subr.bf16.mxu0 0
        %478 = vmatpush1.bf16.msra.mxu0 0
        %479 = vmatprep.subr.bf16.mxu0 0
        %480 = vmatpush1.bf16.msra.mxu0 0
        %481 = vmatprep.subr.bf16.mxu0 0
        %482 = vmatpush1.bf16.msra.mxu0 0
        %483 = vmatprep.subr.bf16.mxu0 0
        %484 = vmatpush1.bf16.msra.mxu0 0
        %485 = vmatprep.subr.bf16.mxu0 0
        %486 = vmatpush1.bf16.msra.mxu0 0
        %487 = vmatprep.mubr.bf16.mxu0 0
        %488 = vmatmul.mubr.bf16.gmra.mrb[0].mxu0 %v441
        %v489 = vpop.f32.mrb[0].mxu0
        %v490 = vadd.f32 %v390, %v489
        %v491 = vpop.f32.mrb[0].mxu0
        %v492 = vpop.f32.mrb[0].mxu0
        %v493 = vadd.f32 %v393, %v492
        %v494 = vpop.f32.mrb[0].mxu0
        %495 = vmatprep.mubr.bf16.mxu0 0
        %496 = vmatmul.mubr.bf16.gmra.mrb[0].mxu0 %v444
        %v497 = vpop.f32.mrb[0].mxu0
        %v498 = vadd.f32 %v398, %v497
        %v499 = vpop.f32.mrb[0].mxu0
        %v500 = vpop.f32.mrb[0].mxu0
        %v501 = vadd.f32 %v401, %v500
        %v502 = vpop.f32.mrb[0].mxu0
        %503 = vmatprep.mubr.bf16.mxu0 0
        %504 = vmatmul.mubr.bf16.gmra.mrb[0].mxu0 %v447
        %v505 = vpop.f32.mrb[0].mxu0
        %v506 = vadd.f32 %v406, %v505
        %v507 = vpop.f32.mrb[0].mxu0
        %v508 = vpop.f32.mrb[0].mxu0
        %v509 = vadd.f32 %v409, %v508
        %v510 = vpop.f32.mrb[0].mxu0
        %511 = vmatprep.mubr.bf16.mxu0 0
        %512 = vmatmul.mubr.bf16.gmra.mrb[0].mxu0 %v450
        %v513 = vpop.f32.mrb[0].mxu0
        %v514 = vadd.f32 %v414, %v513
        %v515 = vpop.f32.mrb[0].mxu0
        %v516 = vpop.f32.mrb[0].mxu0
        %v517 = vadd.f32 %v417, %v516
        %v518 = vpop.f32.mrb[0].mxu0
        %519 = vdwg.mxu0
        %v520 = vld [vmem:[%s291] sm:$0xf]
        %v521 = vld [vmem:[%s291 + $0x4] sm:$0x1]
        %v522 = vld [vmem:[%s291 + $0x8] sm:$0xf]
        %v523 = vld [vmem:[%s291 + $0xc] sm:$0x1]
        %v524 = vld [vmem:[%s291 + $0x10] sm:$0xf]
        %v525 = vld [vmem:[%s291 + $0x14] sm:$0x1]
        %v526 = vld [vmem:[%s291 + $0x18] sm:$0xf]
        %v527 = vld [vmem:[%s291 + $0x1c] sm:$0x1]
        %v528 = vld [vmem:[%s291 + $0x20] sm:$0xf]
        %v529 = vld [vmem:[%s291 + $0x24] sm:$0x1]
        %v530 = vld [vmem:[%s291 + $0x28] sm:$0xf]
        %v531 = vld [vmem:[%s291 + $0x2c] sm:$0x1]
        %v532 = vld [vmem:[%s291 + $0x30] sm:$0xf]
        %v533 = vld [vmem:[%s291 + $0x34] sm:$0x1]
        %v534 = vld [vmem:[%s291 + $0x38] sm:$0xf]
        %v535 = vld [vmem:[%s291 + $0x3c] sm:$0x1]
        %vm536 = vsmask.f32 3328
        %vm537 = vsmask.f32 7440
        %vm538 = vmor %vm536, %vm537
        %v540 = vshrl.u32 %v520, 16
        %v542 = vrot.slane %v540, 4
        %v543 = vshll.u32 %v520, 16
        %v545 = vrot.slane %v543, 5
        %v546 = vor.u32 %v542, %v545
        %v547 = vrot.slane %v546, 4
        %v549 = vshll.u32 %v521, 16
        %v551 = vrot.slane %v549, 5
        %v552 = vsel %vm538, %v547, %v551
        %v554 = vshrl.u32 %v522, 16
        %v556 = vrot.slane %v554, 4
        %v557 = vshll.u32 %v522, 16
        %v559 = vrot.slane %v557, 5
        %v560 = vor.u32 %v556, %v559
        %v561 = vrot.slane %v560, 4
        %v563 = vshll.u32 %v523, 16
        %v565 = vrot.slane %v563, 5
        %v566 = vsel %vm538, %v561, %v565
        %v568 = vshrl.u32 %v524, 16
        %v570 = vrot.slane %v568, 4
        %v571 = vshll.u32 %v524, 16
        %v573 = vrot.slane %v571, 5
        %v574 = vor.u32 %v570, %v573
        %v575 = vrot.slane %v574, 4
        %v577 = vshll.u32 %v525, 16
        %v579 = vrot.slane %v577, 5
        %v580 = vsel %vm538, %v575, %v579
        %v582 = vshrl.u32 %v526, 16
        %v584 = vrot.slane %v582, 4
        %v585 = vshll.u32 %v526, 16
        %v587 = vrot.slane %v585, 5
        %v588 = vor.u32 %v584, %v587
        %v589 = vrot.slane %v588, 4
        %v591 = vshll.u32 %v527, 16
        %v593 = vrot.slane %v591, 5
        %v594 = vsel %vm538, %v589, %v593
        %v596 = vshrl.u32 %v528, 16
        %v598 = vrot.slane %v596, 4
        %v599 = vshll.u32 %v528, 16
        %v601 = vrot.slane %v599, 5
        %v602 = vor.u32 %v598, %v601
        %v603 = vrot.slane %v602, 4
        %v605 = vshll.u32 %v529, 16
        %v607 = vrot.slane %v605, 5
        %v608 = vsel %vm538, %v603, %v607
        %v610 = vshrl.u32 %v530, 16
        %v612 = vrot.slane %v610, 4
        %v613 = vshll.u32 %v530, 16
        %v615 = vrot.slane %v613, 5
        %v616 = vor.u32 %v612, %v615
        %v617 = vrot.slane %v616, 4
        %v619 = vshll.u32 %v531, 16
        %v621 = vrot.slane %v619, 5
        %v622 = vsel %vm538, %v617, %v621
        %v624 = vshrl.u32 %v532, 16
        %v626 = vrot.slane %v624, 4
        %v627 = vshll.u32 %v532, 16
        %v629 = vrot.slane %v627, 5
        %v630 = vor.u32 %v626, %v629
        %v631 = vrot.slane %v630, 4
        %v633 = vshll.u32 %v533, 16
        %v635 = vrot.slane %v633, 5
        %v636 = vsel %vm538, %v631, %v635
        %v638 = vshrl.u32 %v534, 16
        %v640 = vrot.slane %v638, 4
        %v641 = vshll.u32 %v534, 16
        %v643 = vrot.slane %v641, 5
        %v644 = vor.u32 %v640, %v643
        %v645 = vrot.slane %v644, 4
        %v647 = vshll.u32 %v535, 16
        %v649 = vrot.slane %v647, 5
        %v650 = vsel %vm538, %v645, %v649
        %s651 = scalar_lea.vmem %s2, 4
        %v652 = vld [vmem:[%s651] sm:$0x3]
        %v653 = vunpack.c.l.b16 %v552
        %v654 = vunpack.c.l.b16 %v566
        %v655 = vunpack.c.l.b16 %v580
        %v656 = vunpack.c.l.b16 %v594
        %v657 = vunpack.c.l.b16 %v608
        %v658 = vunpack.c.l.b16 %v622
        %v659 = vunpack.c.l.b16 %v636
        %v660 = vunpack.c.l.b16 %v650
        %v661 = vpack.c.b16 %v654, %v653
        %v662 = vpack.c.b16 %v656, %v655
        %v663 = vpack.c.b16 %v658, %v657
        %v664 = vpack.c.b16 %v660, %v659
        %v666 = vsel %vm338, %v661, 0
        %v669 = vsel %vm338, %v662, 0
        %v672 = vsel %vm338, %v663, 0
        %v675 = vsel %vm338, %v664, 0
        %v678 = vsel %vm351, %v652, 0
        %680 = vmatprep.subr.bf16.mxu0 0
        %681 = vmatpush1.bf16.msra.mxu0 %v678
        %682 = vmatprep.subr.bf16.mxu0 0
        %683 = vmatpush1.bf16.msra.mxu0 0
        %684 = vmatprep.subr.bf16.mxu0 0
        %685 = vmatpush1.bf16.msra.mxu0 0
        %686 = vmatprep.subr.bf16.mxu0 0
        %687 = vmatpush1.bf16.msra.mxu0 0
        %688 = vmatprep.subr.bf16.mxu0 0
        %689 = vmatpush1.bf16.msra.mxu0 0
        %690 = vmatprep.subr.bf16.mxu0 0
        %691 = vmatpush1.bf16.msra.mxu0 0
        %692 = vmatprep.subr.bf16.mxu0 0
        %693 = vmatpush1.bf16.msra.mxu0 0
        %694 = vmatprep.subr.bf16.mxu0 0
        %695 = vmatpush1.bf16.msra.mxu0 0
        %696 = vmatprep.subr.bf16.mxu0 0
        %697 = vmatpush1.bf16.msra.mxu0 0
        %698 = vmatprep.subr.bf16.mxu0 0
        %699 = vmatpush1.bf16.msra.mxu0 0
        %700 = vmatprep.subr.bf16.mxu0 0
        %701 = vmatpush1.bf16.msra.mxu0 0
        %702 = vmatprep.subr.bf16.mxu0 0
        %703 = vmatpush1.bf16.msra.mxu0 0
        %704 = vmatprep.subr.bf16.mxu0 0
        %705 = vmatpush1.bf16.msra.mxu0 0
        %706 = vmatprep.subr.bf16.mxu0 0
        %707 = vmatpush1.bf16.msra.mxu0 0
        %708 = vmatprep.subr.bf16.mxu0 0
        %709 = vmatpush1.bf16.msra.mxu0 0
        %710 = vmatprep.subr.bf16.mxu0 0
        %711 = vmatpush1.bf16.msra.mxu0 0
        %712 = vmatprep.mubr.bf16.mxu0 0
        %713 = vmatmul.mubr.bf16.gmra.mrb[0].mxu0 %v666
        %v714 = vpop.f32.mrb[0].mxu0
        %v715 = vadd.f32 0.0, %v714
        %v716 = vpop.f32.mrb[0].mxu0
        %v717 = vpop.f32.mrb[0].mxu0
        %v718 = vadd.f32 0.0, %v717
        %v719 = vpop.f32.mrb[0].mxu0
        %720 = vmatprep.mubr.bf16.mxu0 0
        %721 = vmatmul.mubr.bf16.gmra.mrb[0].mxu0 %v669
        %v722 = vpop.f32.mrb[0].mxu0
        %v723 = vadd.f32 0.0, %v722
        %v724 = vpop.f32.mrb[0].mxu0
        %v725 = vpop.f32.mrb[0].mxu0
        %v726 = vadd.f32 0.0, %v725
        %v727 = vpop.f32.mrb[0].mxu0
        %728 = vmatprep.mubr.bf16.mxu0 0
        %729 = vmatmul.mubr.bf16.gmra.mrb[0].mxu0 %v672
        %v730 = vpop.f32.mrb[0].mxu0
        %v731 = vadd.f32 0.0, %v730
        %v732 = vpop.f32.mrb[0].mxu0
        %v733 = vpop.f32.mrb[0].mxu0
        %v734 = vadd.f32 0.0, %v733
        %v735 = vpop.f32.mrb[0].mxu0
        %736 = vmatprep.mubr.bf16.mxu0 0
        %737 = vmatmul.mubr.bf16.gmra.mrb[0].mxu0 %v675
        %v738 = vpop.f32.mrb[0].mxu0
        %v739 = vadd.f32 0.0, %v738
        %v740 = vpop.f32.mrb[0].mxu0
        %v741 = vpop.f32.mrb[0].mxu0
        %v742 = vadd.f32 0.0, %v741
        %v743 = vpop.f32.mrb[0].mxu0
        %744 = vdwg.mxu0
        %v745 = vadd.f32 %v490, %v715
        %v746 = vadd.f32 %v493, %v718
        %v747 = vadd.f32 %v498, %v723
        %v748 = vadd.f32 %v501, %v726
        %v749 = vadd.f32 %v506, %v731
        %v750 = vadd.f32 %v509, %v734
        %v751 = vadd.f32 %v514, %v739
        %v752 = vadd.f32 %v517, %v742
        %s753 = scalar_lea.vmem %s291, 144
        %v754 = vld [vmem:[%s753] sm:$0xf]
        %v755 = vld [vmem:[%s753 + $0x8] sm:$0xf]
        %v756 = vld [vmem:[%s753 + $0x10] sm:$0xf]
        %v757 = vld [vmem:[%s753 + $0x18] sm:$0xf]
        %v758 = vld [vmem:[%s753 + $0x20] sm:$0xf]
        %v759 = vld [vmem:[%s753 + $0x28] sm:$0xf]
        %v760 = vld [vmem:[%s753 + $0x30] sm:$0xf]
        %v761 = vld [vmem:[%s753 + $0x38] sm:$0xf]
        %s762 = scalar_lea.vmem %s2, 6
        %v763 = vld [vmem:[%s762] sm:$0x3]
        %v772 = vunpack.c.l.b16 %v754
        %v773 = vunpack.c.l.b16 %v755
        %v774 = vunpack.c.l.b16 %v756
        %v775 = vunpack.c.l.b16 %v757
        %v776 = vunpack.c.l.b16 %v758
        %v777 = vunpack.c.l.b16 %v759
        %v778 = vunpack.c.l.b16 %v760
        %v779 = vunpack.c.l.b16 %v761
        %v780 = vpack.c.b16 %v773, %v772
        %v781 = vpack.c.b16 %v775, %v774
        %v782 = vpack.c.b16 %v777, %v776
        %v783 = vpack.c.b16 %v779, %v778
        %v785 = vsel %vm338, %v780, 0
        %v788 = vsel %vm338, %v781, 0
        %v791 = vsel %vm338, %v782, 0
        %v794 = vsel %vm338, %v783, 0
        %v797 = vsel %vm351, %v763, 0
        %799 = vmatprep.subr.bf16.mxu0 0
        %800 = vmatpush1.bf16.msra.mxu0 %v797
        %801 = vmatprep.subr.bf16.mxu0 0
        %802 = vmatpush1.bf16.msra.mxu0 0
        %803 = vmatprep.subr.bf16.mxu0 0
        %804 = vmatpush1.bf16.msra.mxu0 0
        %805 = vmatprep.subr.bf16.mxu0 0
        %806 = vmatpush1.bf16.msra.mxu0 0
        %807 = vmatprep.subr.bf16.mxu0 0
        %808 = vmatpush1.bf16.msra.mxu0 0
        %809 = vmatprep.subr.bf16.mxu0 0
        %810 = vmatpush1.bf16.msra.mxu0 0
        %811 = vmatprep.subr.bf16.mxu0 0
        %812 = vmatpush1.bf16.msra.mxu0 0
        %813 = vmatprep.subr.bf16.mxu0 0
        %814 = vmatpush1.bf16.msra.mxu0 0
        %815 = vmatprep.subr.bf16.mxu0 0
        %816 = vmatpush1.bf16.msra.mxu0 0
        %817 = vmatprep.subr.bf16.mxu0 0
        %818 = vmatpush1.bf16.msra.mxu0 0
        %819 = vmatprep.subr.bf16.mxu0 0
        %820 = vmatpush1.bf16.msra.mxu0 0
        %821 = vmatprep.subr.bf16.mxu0 0
        %822 = vmatpush1.bf16.msra.mxu0 0
        %823 = vmatprep.subr.bf16.mxu0 0
        %824 = vmatpush1.bf16.msra.mxu0 0
        %825 = vmatprep.subr.bf16.mxu0 0
        %826 = vmatpush1.bf16.msra.mxu0 0
        %827 = vmatprep.subr.bf16.mxu0 0
        %828 = vmatpush1.bf16.msra.mxu0 0
        %829 = vmatprep.subr.bf16.mxu0 0
        %830 = vmatpush1.bf16.msra.mxu0 0
        %831 = vmatprep.mubr.bf16.mxu0 0
        %832 = vmatmul.mubr.bf16.gmra.mrb[0].mxu0 %v785
        %v833 = vpop.f32.mrb[0].mxu0
        %v834 = vadd.f32 0.0, %v833
        %v835 = vpop.f32.mrb[0].mxu0
        %v836 = vpop.f32.mrb[0].mxu0
        %v837 = vadd.f32 0.0, %v836
        %v838 = vpop.f32.mrb[0].mxu0
        %839 = vmatprep.mubr.bf16.mxu0 0
        %840 = vmatmul.mubr.bf16.gmra.mrb[0].mxu0 %v788
        %v841 = vpop.f32.mrb[0].mxu0
        %v842 = vadd.f32 0.0, %v841
        %v843 = vpop.f32.mrb[0].mxu0
        %v844 = vpop.f32.mrb[0].mxu0
        %v845 = vadd.f32 0.0, %v844
        %v846 = vpop.f32.mrb[0].mxu0
        %847 = vmatprep.mubr.bf16.mxu0 0
        %848 = vmatmul.mubr.bf16.gmra.mrb[0].mxu0 %v791
        %v849 = vpop.f32.mrb[0].mxu0
        %v850 = vadd.f32 0.0, %v849
        %v851 = vpop.f32.mrb[0].mxu0
        %v852 = vpop.f32.mrb[0].mxu0
        %v853 = vadd.f32 0.0, %v852
        %v854 = vpop.f32.mrb[0].mxu0
        %855 = vmatprep.mubr.bf16.mxu0 0
        %856 = vmatmul.mubr.bf16.gmra.mrb[0].mxu0 %v794
        %v857 = vpop.f32.mrb[0].mxu0
        %v858 = vadd.f32 0.0, %v857
        %v859 = vpop.f32.mrb[0].mxu0
        %v860 = vpop.f32.mrb[0].mxu0
        %v861 = vadd.f32 0.0, %v860
        %v862 = vpop.f32.mrb[0].mxu0
        %863 = vdwg.mxu0
        %v864 = vadd.f32 %v745, %v834
        %v865 = vadd.f32 %v746, %v837
        %v866 = vadd.f32 %v747, %v842
        %v867 = vadd.f32 %v748, %v845
        %v868 = vadd.f32 %v749, %v850
        %v869 = vadd.f32 %v750, %v853
        %v870 = vadd.f32 %v751, %v858
        %v871 = vadd.f32 %v752, %v861
        %s872 = scalar_lea.vmem %s291, 216
        %v873 = vld [vmem:[%s872] sm:$0xf]
        %v874 = vld [vmem:[%s872 + $0x8] sm:$0xf]
        %v875 = vld [vmem:[%s872 + $0x10] sm:$0xf]
        %v876 = vld [vmem:[%s872 + $0x18] sm:$0xf]
        %v877 = vld [vmem:[%s872 + $0x20] sm:$0xf]
        %v878 = vld [vmem:[%s872 + $0x28] sm:$0xf]
        %v879 = vld [vmem:[%s872 + $0x30] sm:$0xf]
        %v880 = vld [vmem:[%s872 + $0x38] sm:$0xf]
        %s881 = scalar_lea.vmem %s2, 8
        %v882 = vld [vmem:[%s881] sm:$0x3]
        %v891 = vunpack.c.l.b16 %v873
        %v892 = vunpack.c.l.b16 %v874
        %v893 = vunpack.c.l.b16 %v875
        %v894 = vunpack.c.l.b16 %v876
        %v895 = vunpack.c.l.b16 %v877
        %v896 = vunpack.c.l.b16 %v878
        %v897 = vunpack.c.l.b16 %v879
        %v898 = vunpack.c.l.b16 %v880
        %v899 = vpack.c.b16 %v892, %v891
        %v900 = vpack.c.b16 %v894, %v893
        %v901 = vpack.c.b16 %v896, %v895
        %v902 = vpack.c.b16 %v898, %v897
        %v904 = vsel %vm338, %v899, 0
        %v907 = vsel %vm338, %v900, 0
        %v910 = vsel %vm338, %v901, 0
        %v913 = vsel %vm338, %v902, 0
        %v916 = vsel %vm351, %v882, 0
        %918 = vmatprep.subr.bf16.mxu0 0
        %919 = vmatpush1.bf16.msra.mxu0 %v916
        %920 = vmatprep.subr.bf16.mxu0 0
        %921 = vmatpush1.bf16.msra.mxu0 0
        %922 = vmatprep.subr.bf16.mxu0 0
        %923 = vmatpush1.bf16.msra.mxu0 0
        %924 = vmatprep.subr.bf16.mxu0 0
        %925 = vmatpush1.bf16.msra.mxu0 0
        %926 = vmatprep.subr.bf16.mxu0 0
        %927 = vmatpush1.bf16.msra.mxu0 0
        %928 = vmatprep.subr.bf16.mxu0 0
        %929 = vmatpush1.bf16.msra.mxu0 0
        %930 = vmatprep.subr.bf16.mxu0 0
        %931 = vmatpush1.bf16.msra.mxu0 0
        %932 = vmatprep.subr.bf16.mxu0 0
        %933 = vmatpush1.bf16.msra.mxu0 0
        %934 = vmatprep.subr.bf16.mxu0 0
        %935 = vmatpush1.bf16.msra.mxu0 0
        %936 = vmatprep.subr.bf16.mxu0 0
        %937 = vmatpush1.bf16.msra.mxu0 0
        %938 = vmatprep.subr.bf16.mxu0 0
        %939 = vmatpush1.bf16.msra.mxu0 0
        %940 = vmatprep.subr.bf16.mxu0 0
        %941 = vmatpush1.bf16.msra.mxu0 0
        %942 = vmatprep.subr.bf16.mxu0 0
        %943 = vmatpush1.bf16.msra.mxu0 0
        %944 = vmatprep.subr.bf16.mxu0 0
        %945 = vmatpush1.bf16.msra.mxu0 0
        %946 = vmatprep.subr.bf16.mxu0 0
        %947 = vmatpush1.bf16.msra.mxu0 0
        %948 = vmatprep.subr.bf16.mxu0 0
        %949 = vmatpush1.bf16.msra.mxu0 0
        %950 = vmatprep.mubr.bf16.mxu0 0
        %951 = vmatmul.mubr.bf16.gmra.mrb[0].mxu0 %v904
        %v952 = vpop.f32.mrb[0].mxu0
        %v953 = vadd.f32 0.0, %v952
        %v954 = vpop.f32.mrb[0].mxu0
        %v955 = vpop.f32.mrb[0].mxu0
        %v956 = vadd.f32 0.0, %v955
        %v957 = vpop.f32.mrb[0].mxu0
        %958 = vmatprep.mubr.bf16.mxu0 0
        %959 = vmatmul.mubr.bf16.gmra.mrb[0].mxu0 %v907
        %v960 = vpop.f32.mrb[0].mxu0
        %v961 = vadd.f32 0.0, %v960
        %v962 = vpop.f32.mrb[0].mxu0
        %v963 = vpop.f32.mrb[0].mxu0
        %v964 = vadd.f32 0.0, %v963
        %v965 = vpop.f32.mrb[0].mxu0
        %966 = vmatprep.mubr.bf16.mxu0 0
        %967 = vmatmul.mubr.bf16.gmra.mrb[0].mxu0 %v910
        %v968 = vpop.f32.mrb[0].mxu0
        %v969 = vadd.f32 0.0, %v968
        %v970 = vpop.f32.mrb[0].mxu0
        %v971 = vpop.f32.mrb[0].mxu0
        %v972 = vadd.f32 0.0, %v971
        %v973 = vpop.f32.mrb[0].mxu0
        %974 = vmatprep.mubr.bf16.mxu0 0
        %975 = vmatmul.mubr.bf16.gmra.mrb[0].mxu0 %v913
        %v976 = vpop.f32.mrb[0].mxu0
        %v977 = vadd.f32 0.0, %v976
        %v978 = vpop.f32.mrb[0].mxu0
        %v979 = vpop.f32.mrb[0].mxu0
        %v980 = vadd.f32 0.0, %v979
        %v981 = vpop.f32.mrb[0].mxu0
        %982 = vdwg.mxu0
        %v983 = vadd.f32 %v864, %v953
        %v984 = vadd.f32 %v865, %v956
        %v985 = vadd.f32 %v866, %v961
        %v986 = vadd.f32 %v867, %v964
        %v987 = vadd.f32 %v868, %v969
        %v988 = vadd.f32 %v869, %v972
        %v989 = vadd.f32 %v870, %v977
        %v990 = vadd.f32 %v871, %v980
        %v991 = vld [vmem:[%s753] sm:$0xf]
        %v992 = vld [vmem:[%s753 + $0x4] sm:$0x1]
        %v993 = vld [vmem:[%s753 + $0x8] sm:$0xf]
        %v994 = vld [vmem:[%s753 + $0xc] sm:$0x1]
        %v995 = vld [vmem:[%s753 + $0x10] sm:$0xf]
        %v996 = vld [vmem:[%s753 + $0x14] sm:$0x1]
        %v997 = vld [vmem:[%s753 + $0x18] sm:$0xf]
        %v998 = vld [vmem:[%s753 + $0x1c] sm:$0x1]
        %v999 = vld [vmem:[%s753 + $0x20] sm:$0xf]
        %v1000 = vld [vmem:[%s753 + $0x24] sm:$0x1]
        %v1001 = vld [vmem:[%s753 + $0x28] sm:$0xf]
        %v1002 = vld [vmem:[%s753 + $0x2c] sm:$0x1]
        %v1003 = vld [vmem:[%s753 + $0x30] sm:$0xf]
        %v1004 = vld [vmem:[%s753 + $0x34] sm:$0x1]
        %v1005 = vld [vmem:[%s753 + $0x38] sm:$0xf]
        %v1006 = vld [vmem:[%s753 + $0x3c] sm:$0x1]
        %v1008 = vshrl.u32 %v991, 16
        %v1010 = vrot.slane %v1008, 4
        %v1011 = vshll.u32 %v991, 16
        %v1013 = vrot.slane %v1011, 5
        %v1014 = vor.u32 %v1010, %v1013
        %v1015 = vrot.slane %v1014, 4
        %v1017 = vshll.u32 %v992, 16
        %v1019 = vrot.slane %v1017, 5
        %v1020 = vsel %vm538, %v1015, %v1019
        %v1022 = vshrl.u32 %v993, 16
        %v1024 = vrot.slane %v1022, 4
        %v1025 = vshll.u32 %v993, 16
        %v1027 = vrot.slane %v1025, 5
        %v1028 = vor.u32 %v1024, %v1027
        %v1029 = vrot.slane %v1028, 4
        %v1031 = vshll.u32 %v994, 16
        %v1033 = vrot.slane %v1031, 5
        %v1034 = vsel %vm538, %v1029, %v1033
        %v1036 = vshrl.u32 %v995, 16
        %v1038 = vrot.slane %v1036, 4
        %v1039 = vshll.u32 %v995, 16
        %v1041 = vrot.slane %v1039, 5
        %v1042 = vor.u32 %v1038, %v1041
        %v1043 = vrot.slane %v1042, 4
        %v1045 = vshll.u32 %v996, 16
        %v1047 = vrot.slane %v1045, 5
        %v1048 = vsel %vm538, %v1043, %v1047
        %v1050 = vshrl.u32 %v997, 16
        %v1052 = vrot.slane %v1050, 4
        %v1053 = vshll.u32 %v997, 16
        %v1055 = vrot.slane %v1053, 5
        %v1056 = vor.u32 %v1052, %v1055
        %v1057 = vrot.slane %v1056, 4
        %v1059 = vshll.u32 %v998, 16
        %v1061 = vrot.slane %v1059, 5
        %v1062 = vsel %vm538, %v1057, %v1061
        %v1064 = vshrl.u32 %v999, 16
        %v1066 = vrot.slane %v1064, 4
        %v1067 = vshll.u32 %v999, 16
        %v1069 = vrot.slane %v1067, 5
        %v1070 = vor.u32 %v1066, %v1069
        %v1071 = vrot.slane %v1070, 4
        %v1073 = vshll.u32 %v1000, 16
        %v1075 = vrot.slane %v1073, 5
        %v1076 = vsel %vm538, %v1071, %v1075
        %v1078 = vshrl.u32 %v1001, 16
        %v1080 = vrot.slane %v1078, 4
        %v1081 = vshll.u32 %v1001, 16
        %v1083 = vrot.slane %v1081, 5
        %v1084 = vor.u32 %v1080, %v1083
        %v1085 = vrot.slane %v1084, 4
        %v1087 = vshll.u32 %v1002, 16
        %v1089 = vrot.slane %v1087, 5
        %v1090 = vsel %vm538, %v1085, %v1089
        %v1092 = vshrl.u32 %v1003, 16
        %v1094 = vrot.slane %v1092, 4
        %v1095 = vshll.u32 %v1003, 16
        %v1097 = vrot.slane %v1095, 5
        %v1098 = vor.u32 %v1094, %v1097
        %v1099 = vrot.slane %v1098, 4
        %v1101 = vshll.u32 %v1004, 16
        %v1103 = vrot.slane %v1101, 5
        %v1104 = vsel %vm538, %v1099, %v1103
        %v1106 = vshrl.u32 %v1005, 16
        %v1108 = vrot.slane %v1106, 4
        %v1109 = vshll.u32 %v1005, 16
        %v1111 = vrot.slane %v1109, 5
        %v1112 = vor.u32 %v1108, %v1111
        %v1113 = vrot.slane %v1112, 4
        %v1115 = vshll.u32 %v1006, 16
        %v1117 = vrot.slane %v1115, 5
        %v1118 = vsel %vm538, %v1113, %v1117
        %s1119 = scalar_lea.vmem %s2, 10
        %v1120 = vld [vmem:[%s1119] sm:$0x3]
        %v1121 = vunpack.c.l.b16 %v1020
        %v1122 = vunpack.c.l.b16 %v1034
        %v1123 = vunpack.c.l.b16 %v1048
        %v1124 = vunpack.c.l.b16 %v1062
        %v1125 = vunpack.c.l.b16 %v1076
        %v1126 = vunpack.c.l.b16 %v1090
        %v1127 = vunpack.c.l.b16 %v1104
        %v1128 = vunpack.c.l.b16 %v1118
        %v1129 = vpack.c.b16 %v1122, %v1121
        %v1130 = vpack.c.b16 %v1124, %v1123
        %v1131 = vpack.c.b16 %v1126, %v1125
        %v1132 = vpack.c.b16 %v1128, %v1127
        %v1134 = vsel %vm338, %v1129, 0
        %v1137 = vsel %vm338, %v1130, 0
        %v1140 = vsel %vm338, %v1131, 0
        %v1143 = vsel %vm338, %v1132, 0
        %v1146 = vsel %vm351, %v1120, 0
        %1148 = vmatprep.subr.bf16.mxu0 0
        %1149 = vmatpush1.bf16.msra.mxu0 %v1146
        %1150 = vmatprep.subr.bf16.mxu0 0
        %1151 = vmatpush1.bf16.msra.mxu0 0
        %1152 = vmatprep.subr.bf16.mxu0 0
        %1153 = vmatpush1.bf16.msra.mxu0 0
        %1154 = vmatprep.subr.bf16.mxu0 0
        %1155 = vmatpush1.bf16.msra.mxu0 0
        %1156 = vmatprep.subr.bf16.mxu0 0
        %1157 = vmatpush1.bf16.msra.mxu0 0
        %1158 = vmatprep.subr.bf16.mxu0 0
        %1159 = vmatpush1.bf16.msra.mxu0 0
        %1160 = vmatprep.subr.bf16.mxu0 0
        %1161 = vmatpush1.bf16.msra.mxu0 0
        %1162 = vmatprep.subr.bf16.mxu0 0
        %1163 = vmatpush1.bf16.msra.mxu0 0
        %1164 = vmatprep.subr.bf16.mxu0 0
        %1165 = vmatpush1.bf16.msra.mxu0 0
        %1166 = vmatprep.subr.bf16.mxu0 0
        %1167 = vmatpush1.bf16.msra.mxu0 0
        %1168 = vmatprep.subr.bf16.mxu0 0
        %1169 = vmatpush1.bf16.msra.mxu0 0
        %1170 = vmatprep.subr.bf16.mxu0 0
        %1171 = vmatpush1.bf16.msra.mxu0 0
        %1172 = vmatprep.subr.bf16.mxu0 0
        %1173 = vmatpush1.bf16.msra.mxu0 0
        %1174 = vmatprep.subr.bf16.mxu0 0
        %1175 = vmatpush1.bf16.msra.mxu0 0
        %1176 = vmatprep.subr.bf16.mxu0 0
        %1177 = vmatpush1.bf16.msra.mxu0 0
        %1178 = vmatprep.subr.bf16.mxu0 0
        %1179 = vmatpush1.bf16.msra.mxu0 0
        %1180 = vmatprep.mubr.bf16.mxu0 0
        %1181 = vmatmul.mubr.bf16.gmra.mrb[0].mxu0 %v1134
        %v1182 = vpop.f32.mrb[0].mxu0
        %v1183 = vadd.f32 0.0, %v1182
        %v1184 = vpop.f32.mrb[0].mxu0
        %v1185 = vpop.f32.mrb[0].mxu0
        %v1186 = vadd.f32 0.0, %v1185
        %v1187 = vpop.f32.mrb[0].mxu0
        %1188 = vmatprep.mubr.bf16.mxu0 0
        %1189 = vmatmul.mubr.bf16.gmra.mrb[0].mxu0 %v1137
        %v1190 = vpop.f32.mrb[0].mxu0
        %v1191 = vadd.f32 0.0, %v1190
        %v1192 = vpop.f32.mrb[0].mxu0
        %v1193 = vpop.f32.mrb[0].mxu0
        %v1194 = vadd.f32 0.0, %v1193
        %v1195 = vpop.f32.mrb[0].mxu0
        %1196 = vmatprep.mubr.bf16.mxu0 0
        %1197 = vmatmul.mubr.bf16.gmra.mrb[0].mxu0 %v1140
        %v1198 = vpop.f32.mrb[0].mxu0
        %v1199 = vadd.f32 0.0, %v1198
        %v1200 = vpop.f32.mrb[0].mxu0
        %v1201 = vpop.f32.mrb[0].mxu0
        %v1202 = vadd.f32 0.0, %v1201
        %v1203 = vpop.f32.mrb[0].mxu0
        %1204 = vmatprep.mubr.bf16.mxu0 0
        %1205 = vmatmul.mubr.bf16.gmra.mrb[0].mxu0 %v1143
        %v1206 = vpop.f32.mrb[0].mxu0
        %v1207 = vadd.f32 0.0, %v1206
        %v1208 = vpop.f32.mrb[0].mxu0
        %v1209 = vpop.f32.mrb[0].mxu0
        %v1210 = vadd.f32 0.0, %v1209
        %v1211 = vpop.f32.mrb[0].mxu0
        %1212 = vdwg.mxu0
        %v1213 = vadd.f32 %v983, %v1183
        %v1214 = vadd.f32 %v984, %v1186
        %v1215 = vadd.f32 %v985, %v1191
        %v1216 = vadd.f32 %v986, %v1194
        %v1217 = vadd.f32 %v987, %v1199
        %v1218 = vadd.f32 %v988, %v1202
        %v1219 = vadd.f32 %v989, %v1207
        %v1220 = vadd.f32 %v990, %v1210
        %s1221 = scalar_lea.vmem %s291, 8
        %v1222 = vld [vmem:[%s1221] sm:$0xf]
        %v1223 = vld [vmem:[%s1221 + $0x8] sm:$0xf]
        %v1224 = vld [vmem:[%s1221 + $0x10] sm:$0xf]
        %v1225 = vld [vmem:[%s1221 + $0x18] sm:$0xf]
        %v1226 = vld [vmem:[%s1221 + $0x20] sm:$0xf]
        %v1227 = vld [vmem:[%s1221 + $0x28] sm:$0xf]
        %v1228 = vld [vmem:[%s1221 + $0x30] sm:$0xf]
        %v1229 = vld [vmem:[%s1221 + $0x38] sm:$0xf]
        %s1230 = scalar_lea.vmem %s2, 12
        %v1231 = vld [vmem:[%s1230] sm:$0x3]
        %v1240 = vunpack.c.l.b16 %v1222
        %v1241 = vunpack.c.l.b16 %v1223
        %v1242 = vunpack.c.l.b16 %v1224
        %v1243 = vunpack.c.l.b16 %v1225
        %v1244 = vunpack.c.l.b16 %v1226
        %v1245 = vunpack.c.l.b16 %v1227
        %v1246 = vunpack.c.l.b16 %v1228
        %v1247 = vunpack.c.l.b16 %v1229
        %v1248 = vpack.c.b16 %v1241, %v1240
        %v1249 = vpack.c.b16 %v1243, %v1242
        %v1250 = vpack.c.b16 %v1245, %v1244
        %v1251 = vpack.c.b16 %v1247, %v1246
        %v1253 = vsel %vm338, %v1248, 0
        %v1256 = vsel %vm338, %v1249, 0
        %v1259 = vsel %vm338, %v1250, 0
        %v1262 = vsel %vm338, %v1251, 0
        %v1265 = vsel %vm351, %v1231, 0
        %1267 = vmatprep.subr.bf16.mxu0 0
        %1268 = vmatpush1.bf16.msra.mxu0 %v1265
        %1269 = vmatprep.subr.bf16.mxu0 0
        %1270 = vmatpush1.bf16.msra.mxu0 0
        %1271 = vmatprep.subr.bf16.mxu0 0
        %1272 = vmatpush1.bf16.msra.mxu0 0
        %1273 = vmatprep.subr.bf16.mxu0 0
        %1274 = vmatpush1.bf16.msra.mxu0 0
        %1275 = vmatprep.subr.bf16.mxu0 0
        %1276 = vmatpush1.bf16.msra.mxu0 0
        %1277 = vmatprep.subr.bf16.mxu0 0
        %1278 = vmatpush1.bf16.msra.mxu0 0
        %1279 = vmatprep.subr.bf16.mxu0 0
        %1280 = vmatpush1.bf16.msra.mxu0 0
        %1281 = vmatprep.subr.bf16.mxu0 0
        %1282 = vmatpush1.bf16.msra.mxu0 0
        %1283 = vmatprep.subr.bf16.mxu0 0
        %1284 = vmatpush1.bf16.msra.mxu0 0
        %1285 = vmatprep.subr.bf16.mxu0 0
        %1286 = vmatpush1.bf16.msra.mxu0 0
        %1287 = vmatprep.subr.bf16.mxu0 0
        %1288 = vmatpush1.bf16.msra.mxu0 0
        %1289 = vmatprep.subr.bf16.mxu0 0
        %1290 = vmatpush1.bf16.msra.mxu0 0
        %1291 = vmatprep.subr.bf16.mxu0 0
        %1292 = vmatpush1.bf16.msra.mxu0 0
        %1293 = vmatprep.subr.bf16.mxu0 0
        %1294 = vmatpush1.bf16.msra.mxu0 0
        %1295 = vmatprep.subr.bf16.mxu0 0
        %1296 = vmatpush1.bf16.msra.mxu0 0
        %1297 = vmatprep.subr.bf16.mxu0 0
        %1298 = vmatpush1.bf16.msra.mxu0 0
        %1299 = vmatprep.mubr.bf16.mxu0 0
        %1300 = vmatmul.mubr.bf16.gmra.mrb[0].mxu0 %v1253
        %v1301 = vpop.f32.mrb[0].mxu0
        %v1302 = vadd.f32 0.0, %v1301
        %v1303 = vpop.f32.mrb[0].mxu0
        %v1304 = vpop.f32.mrb[0].mxu0
        %v1305 = vadd.f32 0.0, %v1304
        %v1306 = vpop.f32.mrb[0].mxu0
        %1307 = vmatprep.mubr.bf16.mxu0 0
        %1308 = vmatmul.mubr.bf16.gmra.mrb[0].mxu0 %v1256
        %v1309 = vpop.f32.mrb[0].mxu0
        %v1310 = vadd.f32 0.0, %v1309
        %v1311 = vpop.f32.mrb[0].mxu0
        %v1312 = vpop.f32.mrb[0].mxu0
        %v1313 = vadd.f32 0.0, %v1312
        %v1314 = vpop.f32.mrb[0].mxu0
        %1315 = vmatprep.mubr.bf16.mxu0 0
        %1316 = vmatmul.mubr.bf16.gmra.mrb[0].mxu0 %v1259
        %v1317 = vpop.f32.mrb[0].mxu0
        %v1318 = vadd.f32 0.0, %v1317
        %v1319 = vpop.f32.mrb[0].mxu0
        %v1320 = vpop.f32.mrb[0].mxu0
        %v1321 = vadd.f32 0.0, %v1320
        %v1322 = vpop.f32.mrb[0].mxu0
        %1323 = vmatprep.mubr.bf16.mxu0 0
        %1324 = vmatmul.mubr.bf16.gmra.mrb[0].mxu0 %v1262
        %v1325 = vpop.f32.mrb[0].mxu0
        %v1326 = vadd.f32 0.0, %v1325
        %v1327 = vpop.f32.mrb[0].mxu0
        %v1328 = vpop.f32.mrb[0].mxu0
        %v1329 = vadd.f32 0.0, %v1328
        %v1330 = vpop.f32.mrb[0].mxu0
        %1331 = vdwg.mxu0
        %v1332 = vadd.f32 %v1213, %v1302
        %v1333 = vadd.f32 %v1214, %v1305
        %v1334 = vadd.f32 %v1215, %v1310
        %v1335 = vadd.f32 %v1216, %v1313
        %v1336 = vadd.f32 %v1217, %v1318
        %v1337 = vadd.f32 %v1218, %v1321
        %v1338 = vadd.f32 %v1219, %v1326
        %v1339 = vadd.f32 %v1220, %v1329
        %s1340 = scalar_lea.vmem %s291, 80
        %v1341 = vld [vmem:[%s1340] sm:$0xf]
        %v1342 = vld [vmem:[%s1340 + $0x8] sm:$0xf]
        %v1343 = vld [vmem:[%s1340 + $0x10] sm:$0xf]
        %v1344 = vld [vmem:[%s1340 + $0x18] sm:$0xf]
        %v1345 = vld [vmem:[%s1340 + $0x20] sm:$0xf]
        %v1346 = vld [vmem:[%s1340 + $0x28] sm:$0xf]
        %v1347 = vld [vmem:[%s1340 + $0x30] sm:$0xf]
        %v1348 = vld [vmem:[%s1340 + $0x38] sm:$0xf]
        %s1349 = scalar_lea.vmem %s2, 14
        %v1350 = vld [vmem:[%s1349] sm:$0x3]
        %v1359 = vunpack.c.l.b16 %v1341
        %v1360 = vunpack.c.l.b16 %v1342
        %v1361 = vunpack.c.l.b16 %v1343
        %v1362 = vunpack.c.l.b16 %v1344
        %v1363 = vunpack.c.l.b16 %v1345
        %v1364 = vunpack.c.l.b16 %v1346
        %v1365 = vunpack.c.l.b16 %v1347
        %v1366 = vunpack.c.l.b16 %v1348
        %v1367 = vpack.c.b16 %v1360, %v1359
        %v1368 = vpack.c.b16 %v1362, %v1361
        %v1369 = vpack.c.b16 %v1364, %v1363
        %v1370 = vpack.c.b16 %v1366, %v1365
        %v1372 = vsel %vm338, %v1367, 0
        %v1375 = vsel %vm338, %v1368, 0
        %v1378 = vsel %vm338, %v1369, 0
        %v1381 = vsel %vm338, %v1370, 0
        %v1384 = vsel %vm351, %v1350, 0
        %1386 = vmatprep.subr.bf16.mxu0 0
        %1387 = vmatpush1.bf16.msra.mxu0 %v1384
        %1388 = vmatprep.subr.bf16.mxu0 0
        %1389 = vmatpush1.bf16.msra.mxu0 0
        %1390 = vmatprep.subr.bf16.mxu0 0
        %1391 = vmatpush1.bf16.msra.mxu0 0
        %1392 = vmatprep.subr.bf16.mxu0 0
        %1393 = vmatpush1.bf16.msra.mxu0 0
        %1394 = vmatprep.subr.bf16.mxu0 0
        %1395 = vmatpush1.bf16.msra.mxu0 0
        %1396 = vmatprep.subr.bf16.mxu0 0
        %1397 = vmatpush1.bf16.msra.mxu0 0
        %1398 = vmatprep.subr.bf16.mxu0 0
        %1399 = vmatpush1.bf16.msra.mxu0 0
        %1400 = vmatprep.subr.bf16.mxu0 0
        %1401 = vmatpush1.bf16.msra.mxu0 0
        %1402 = vmatprep.subr.bf16.mxu0 0
        %1403 = vmatpush1.bf16.msra.mxu0 0
        %1404 = vmatprep.subr.bf16.mxu0 0
        %1405 = vmatpush1.bf16.msra.mxu0 0
        %1406 = vmatprep.subr.bf16.mxu0 0
        %1407 = vmatpush1.bf16.msra.mxu0 0
        %1408 = vmatprep.subr.bf16.mxu0 0
        %1409 = vmatpush1.bf16.msra.mxu0 0
        %1410 = vmatprep.subr.bf16.mxu0 0
        %1411 = vmatpush1.bf16.msra.mxu0 0
        %1412 = vmatprep.subr.bf16.mxu0 0
        %1413 = vmatpush1.bf16.msra.mxu0 0
        %1414 = vmatprep.subr.bf16.mxu0 0
        %1415 = vmatpush1.bf16.msra.mxu0 0
        %1416 = vmatprep.subr.bf16.mxu0 0
        %1417 = vmatpush1.bf16.msra.mxu0 0
        %1418 = vmatprep.mubr.bf16.mxu0 0
        %1419 = vmatmul.mubr.bf16.gmra.mrb[0].mxu0 %v1372
        %v1420 = vpop.f32.mrb[0].mxu0
        %v1421 = vadd.f32 0.0, %v1420
        %v1422 = vpop.f32.mrb[0].mxu0
        %v1423 = vpop.f32.mrb[0].mxu0
        %v1424 = vadd.f32 0.0, %v1423
        %v1425 = vpop.f32.mrb[0].mxu0
        %1426 = vmatprep.mubr.bf16.mxu0 0
        %1427 = vmatmul.mubr.bf16.gmra.mrb[0].mxu0 %v1375
        %v1428 = vpop.f32.mrb[0].mxu0
        %v1429 = vadd.f32 0.0, %v1428
        %v1430 = vpop.f32.mrb[0].mxu0
        %v1431 = vpop.f32.mrb[0].mxu0
        %v1432 = vadd.f32 0.0, %v1431
        %v1433 = vpop.f32.mrb[0].mxu0
        %1434 = vmatprep.mubr.bf16.mxu0 0
        %1435 = vmatmul.mubr.bf16.gmra.mrb[0].mxu0 %v1378
        %v1436 = vpop.f32.mrb[0].mxu0
        %v1437 = vadd.f32 0.0, %v1436
        %v1438 = vpop.f32.mrb[0].mxu0
        %v1439 = vpop.f32.mrb[0].mxu0
        %v1440 = vadd.f32 0.0, %v1439
        %v1441 = vpop.f32.mrb[0].mxu0
        %1442 = vmatprep.mubr.bf16.mxu0 0
        %1443 = vmatmul.mubr.bf16.gmra.mrb[0].mxu0 %v1381
        %v1444 = vpop.f32.mrb[0].mxu0
        %v1445 = vadd.f32 0.0, %v1444
        %v1446 = vpop.f32.mrb[0].mxu0
        %v1447 = vpop.f32.mrb[0].mxu0
        %v1448 = vadd.f32 0.0, %v1447
        %v1449 = vpop.f32.mrb[0].mxu0
        %1450 = vdwg.mxu0
        %v1451 = vadd.f32 %v1332, %v1421
        %v1452 = vadd.f32 %v1333, %v1424
        %v1453 = vadd.f32 %v1334, %v1429
        %v1454 = vadd.f32 %v1335, %v1432
        %v1455 = vadd.f32 %v1336, %v1437
        %v1456 = vadd.f32 %v1337, %v1440
        %v1457 = vadd.f32 %v1338, %v1445
        %v1458 = vadd.f32 %v1339, %v1448
        %v1459 = vld [vmem:[%s1221] sm:$0xf]
        %v1460 = vld [vmem:[%s1221 + $0x4] sm:$0x1]
        %v1461 = vld [vmem:[%s1221 + $0x8] sm:$0xf]
        %v1462 = vld [vmem:[%s1221 + $0xc] sm:$0x1]
        %v1463 = vld [vmem:[%s1221 + $0x10] sm:$0xf]
        %v1464 = vld [vmem:[%s1221 + $0x14] sm:$0x1]
        %v1465 = vld [vmem:[%s1221 + $0x18] sm:$0xf]
        %v1466 = vld [vmem:[%s1221 + $0x1c] sm:$0x1]
        %v1467 = vld [vmem:[%s1221 + $0x20] sm:$0xf]
        %v1468 = vld [vmem:[%s1221 + $0x24] sm:$0x1]
        %v1469 = vld [vmem:[%s1221 + $0x28] sm:$0xf]
        %v1470 = vld [vmem:[%s1221 + $0x2c] sm:$0x1]
        %v1471 = vld [vmem:[%s1221 + $0x30] sm:$0xf]
        %v1472 = vld [vmem:[%s1221 + $0x34] sm:$0x1]
        %v1473 = vld [vmem:[%s1221 + $0x38] sm:$0xf]
        %v1474 = vld [vmem:[%s1221 + $0x3c] sm:$0x1]
        %v1476 = vshrl.u32 %v1459, 16
        %v1478 = vrot.slane %v1476, 4
        %v1479 = vshll.u32 %v1459, 16
        %v1481 = vrot.slane %v1479, 5
        %v1482 = vor.u32 %v1478, %v1481
        %v1483 = vrot.slane %v1482, 4
        %v1485 = vshll.u32 %v1460, 16
        %v1487 = vrot.slane %v1485, 5
        %v1488 = vsel %vm538, %v1483, %v1487
        %v1490 = vshrl.u32 %v1461, 16
        %v1492 = vrot.slane %v1490, 4
        %v1493 = vshll.u32 %v1461, 16
        %v1495 = vrot.slane %v1493, 5
        %v1496 = vor.u32 %v1492, %v1495
        %v1497 = vrot.slane %v1496, 4
        %v1499 = vshll.u32 %v1462, 16
        %v1501 = vrot.slane %v1499, 5
        %v1502 = vsel %vm538, %v1497, %v1501
        %v1504 = vshrl.u32 %v1463, 16
        %v1506 = vrot.slane %v1504, 4
        %v1507 = vshll.u32 %v1463, 16
        %v1509 = vrot.slane %v1507, 5
        %v1510 = vor.u32 %v1506, %v1509
        %v1511 = vrot.slane %v1510, 4
        %v1513 = vshll.u32 %v1464, 16
        %v1515 = vrot.slane %v1513, 5
        %v1516 = vsel %vm538, %v1511, %v1515
        %v1518 = vshrl.u32 %v1465, 16
        %v1520 = vrot.slane %v1518, 4
        %v1521 = vshll.u32 %v1465, 16
        %v1523 = vrot.slane %v1521, 5
        %v1524 = vor.u32 %v1520, %v1523
        %v1525 = vrot.slane %v1524, 4
        %v1527 = vshll.u32 %v1466, 16
        %v1529 = vrot.slane %v1527, 5
        %v1530 = vsel %vm538, %v1525, %v1529
        %v1532 = vshrl.u32 %v1467, 16
        %v1534 = vrot.slane %v1532, 4
        %v1535 = vshll.u32 %v1467, 16
        %v1537 = vrot.slane %v1535, 5
        %v1538 = vor.u32 %v1534, %v1537
        %v1539 = vrot.slane %v1538, 4
        %v1541 = vshll.u32 %v1468, 16
        %v1543 = vrot.slane %v1541, 5
        %v1544 = vsel %vm538, %v1539, %v1543
        %v1546 = vshrl.u32 %v1469, 16
        %v1548 = vrot.slane %v1546, 4
        %v1549 = vshll.u32 %v1469, 16
        %v1551 = vrot.slane %v1549, 5
        %v1552 = vor.u32 %v1548, %v1551
        %v1553 = vrot.slane %v1552, 4
        %v1555 = vshll.u32 %v1470, 16
        %v1557 = vrot.slane %v1555, 5
        %v1558 = vsel %vm538, %v1553, %v1557
        %v1560 = vshrl.u32 %v1471, 16
        %v1562 = vrot.slane %v1560, 4
        %v1563 = vshll.u32 %v1471, 16
        %v1565 = vrot.slane %v1563, 5
        %v1566 = vor.u32 %v1562, %v1565
        %v1567 = vrot.slane %v1566, 4
        %v1569 = vshll.u32 %v1472, 16
        %v1571 = vrot.slane %v1569, 5
        %v1572 = vsel %vm538, %v1567, %v1571
        %v1574 = vshrl.u32 %v1473, 16
        %v1576 = vrot.slane %v1574, 4
        %v1577 = vshll.u32 %v1473, 16
        %v1579 = vrot.slane %v1577, 5
        %v1580 = vor.u32 %v1576, %v1579
        %v1581 = vrot.slane %v1580, 4
        %v1583 = vshll.u32 %v1474, 16
        %v1585 = vrot.slane %v1583, 5
        %v1586 = vsel %vm538, %v1581, %v1585
        %s1587 = scalar_lea.vmem %s2, 16
        %v1588 = vld [vmem:[%s1587] sm:$0x3]
        %v1589 = vunpack.c.l.b16 %v1488
        %v1590 = vunpack.c.l.b16 %v1502
        %v1591 = vunpack.c.l.b16 %v1516
        %v1592 = vunpack.c.l.b16 %v1530
        %v1593 = vunpack.c.l.b16 %v1544
        %v1594 = vunpack.c.l.b16 %v1558
        %v1595 = vunpack.c.l.b16 %v1572
        %v1596 = vunpack.c.l.b16 %v1586
        %v1597 = vpack.c.b16 %v1590, %v1589
        %v1598 = vpack.c.b16 %v1592, %v1591
        %v1599 = vpack.c.b16 %v1594, %v1593
        %v1600 = vpack.c.b16 %v1596, %v1595
        %v1602 = vsel %vm338, %v1597, 0
        %v1605 = vsel %vm338, %v1598, 0
        %v1608 = vsel %vm338, %v1599, 0
        %v1611 = vsel %vm338, %v1600, 0
        %v1614 = vsel %vm351, %v1588, 0
        %1616 = vmatprep.subr.bf16.mxu0 0
        %1617 = vmatpush1.bf16.msra.mxu0 %v1614
        %1618 = vmatprep.subr.bf16.mxu0 0
        %1619 = vmatpush1.bf16.msra.mxu0 0
        %1620 = vmatprep.subr.bf16.mxu0 0
        %1621 = vmatpush1.bf16.msra.mxu0 0
        %1622 = vmatprep.subr.bf16.mxu0 0
        %1623 = vmatpush1.bf16.msra.mxu0 0
        %1624 = vmatprep.subr.bf16.mxu0 0
        %1625 = vmatpush1.bf16.msra.mxu0 0
        %1626 = vmatprep.subr.bf16.mxu0 0
        %1627 = vmatpush1.bf16.msra.mxu0 0
        %1628 = vmatprep.subr.bf16.mxu0 0
        %1629 = vmatpush1.bf16.msra.mxu0 0
        %1630 = vmatprep.subr.bf16.mxu0 0
        %1631 = vmatpush1.bf16.msra.mxu0 0
        %1632 = vmatprep.subr.bf16.mxu0 0
        %1633 = vmatpush1.bf16.msra.mxu0 0
        %1634 = vmatprep.subr.bf16.mxu0 0
        %1635 = vmatpush1.bf16.msra.mxu0 0
        %1636 = vmatprep.subr.bf16.mxu0 0
        %1637 = vmatpush1.bf16.msra.mxu0 0
        %1638 = vmatprep.subr.bf16.mxu0 0
        %1639 = vmatpush1.bf16.msra.mxu0 0
        %1640 = vmatprep.subr.bf16.mxu0 0
        %1641 = vmatpush1.bf16.msra.mxu0 0
        %1642 = vmatprep.subr.bf16.mxu0 0
        %1643 = vmatpush1.bf16.msra.mxu0 0
        %1644 = vmatprep.subr.bf16.mxu0 0
        %1645 = vmatpush1.bf16.msra.mxu0 0
        %1646 = vmatprep.subr.bf16.mxu0 0
        %1647 = vmatpush1.bf16.msra.mxu0 0
        %1648 = vmatprep.mubr.bf16.mxu0 0
        %1649 = vmatmul.mubr.bf16.gmra.mrb[0].mxu0 %v1602
        %v1650 = vpop.f32.mrb[0].mxu0
        %v1651 = vadd.f32 0.0, %v1650
        %v1652 = vpop.f32.mrb[0].mxu0
        %v1653 = vpop.f32.mrb[0].mxu0
        %v1654 = vadd.f32 0.0, %v1653
        %v1655 = vpop.f32.mrb[0].mxu0
        %1656 = vmatprep.mubr.bf16.mxu0 0
        %1657 = vmatmul.mubr.bf16.gmra.mrb[0].mxu0 %v1605
        %v1658 = vpop.f32.mrb[0].mxu0
        %v1659 = vadd.f32 0.0, %v1658
        %v1660 = vpop.f32.mrb[0].mxu0
        %v1661 = vpop.f32.mrb[0].mxu0
        %v1662 = vadd.f32 0.0, %v1661
        %v1663 = vpop.f32.mrb[0].mxu0
        %1664 = vmatprep.mubr.bf16.mxu0 0
        %1665 = vmatmul.mubr.bf16.gmra.mrb[0].mxu0 %v1608
        %v1666 = vpop.f32.mrb[0].mxu0
        %v1667 = vadd.f32 0.0, %v1666
        %v1668 = vpop.f32.mrb[0].mxu0
        %v1669 = vpop.f32.mrb[0].mxu0
        %v1670 = vadd.f32 0.0, %v1669
        %v1671 = vpop.f32.mrb[0].mxu0
        %1672 = vmatprep.mubr.bf16.mxu0 0
        %1673 = vmatmul.mubr.bf16.gmra.mrb[0].mxu0 %v1611
        %v1674 = vpop.f32.mrb[0].mxu0
        %v1675 = vadd.f32 0.0, %v1674
        %v1676 = vpop.f32.mrb[0].mxu0
        %v1677 = vpop.f32.mrb[0].mxu0
        %v1678 = vadd.f32 0.0, %v1677
        %v1679 = vpop.f32.mrb[0].mxu0
        %1680 = vdwg.mxu0
        %v1681 = vadd.f32 %v1451, %v1651
        %v1682 = vadd.f32 %v1452, %v1654
        %v1683 = vadd.f32 %v1453, %v1659
        %v1684 = vadd.f32 %v1454, %v1662
        %v1685 = vadd.f32 %v1455, %v1667
        %v1686 = vadd.f32 %v1456, %v1670
        %v1687 = vadd.f32 %v1457, %v1675
        %v1688 = vadd.f32 %v1458, %v1678
        %v1689 = vld [vmem:[%s3] sm:$0x1]
        %v1691 = vlaneseq
        %v1692 = vshrl.u32 %v1691, 7
        %v1693 = vsub.s32 0, %v1692
        %v1694 = vrot.slane %v1689, %v1693
        %v1696 = vadd.f32 %v1681, %v1694
        %v1697 = vadd.f32 %v1682, %v1694
        %v1698 = vadd.f32 %v1683, %v1694
        %v1699 = vadd.f32 %v1684, %v1694
        %v1700 = vadd.f32 %v1685, %v1694
        %v1701 = vadd.f32 %v1686, %v1694
        %v1702 = vadd.f32 %v1687, %v1694
        %v1703 = vadd.f32 %v1688, %v1694
        %v1704 = vmax.f32 %v1696, 0.0
        %v1705 = vmax.f32 %v1697, 0.0
        %v1706 = vmax.f32 %v1698, 0.0
        %v1707 = vmax.f32 %v1699, 0.0
        %v1708 = vmax.f32 %v1700, 0.0
        %v1709 = vmax.f32 %v1701, 0.0
        %v1710 = vmax.f32 %v1702, 0.0
        %v1711 = vmax.f32 %v1703, 0.0
        %1712 = vst [vmem:[#allocation2] sm:$0xff] 0.0
        %1713 = vst [vmem:[#allocation2 + $0x8] sm:$0x3] 0.0
        %1714 = vst [vmem:[#allocation2 + $0x10] sm:$0xff] 0.0
        %1715 = vst [vmem:[#allocation2 + $0x18] sm:$0x3] 0.0
        %1716 = vst [vmem:[#allocation2 + $0x20] sm:$0xff] 0.0
        %1717 = vst [vmem:[#allocation2 + $0x28] sm:$0x3] 0.0
        %1718 = vst [vmem:[#allocation2 + $0x30] sm:$0xff] 0.0
        %1719 = vst [vmem:[#allocation2 + $0x38] sm:$0x3] 0.0
        %1720 = vst [vmem:[#allocation2 + $0x40] sm:$0xff] 0.0
        %1721 = vst [vmem:[#allocation2 + $0x48] sm:$0x3] 0.0
        %1722 = vst [vmem:[#allocation2 + $0x50] sm:$0xff] 0.0
        %1723 = vst [vmem:[#allocation2 + $0x58] sm:$0x3] 0.0
        %1724 = vst [vmem:[#allocation2 + $0x60] sm:$0xff] 0.0
        %1725 = vst [vmem:[#allocation2 + $0x68] sm:$0x3] 0.0
        %1726 = vst [vmem:[#allocation2 + $0x70] sm:$0xff] 0.0
        %1727 = vst [vmem:[#allocation2 + $0x78] sm:$0x3] 0.0
        %1728 = vst [vmem:[#allocation2 + $0x80] sm:$0xff] 0.0
        %1729 = vst [vmem:[#allocation2 + $0x88] sm:$0x3] 0.0
        %1730 = vst [vmem:[#allocation2 + $0x90] sm:$0xff] 0.0
        %1731 = vst [vmem:[#allocation2 + $0x98] sm:$0x3] 0.0
        %s1732 = scalar_lea.vmem [#allocation2], 16
        %1733 = vst [vmem:[%s1732 + $0x1] sm:$0xff] %v1704
        %1734 = vst [vmem:[%s1732 + $0x11] sm:$0xff] %v1705
        %1735 = vst [vmem:[%s1732 + $0x21] sm:$0xff] %v1706
        %1736 = vst [vmem:[%s1732 + $0x31] sm:$0xff] %v1707
        %1737 = vst [vmem:[%s1732 + $0x41] sm:$0xff] %v1708
        %1738 = vst [vmem:[%s1732 + $0x51] sm:$0xff] %v1709
        %1739 = vst [vmem:[%s1732 + $0x61] sm:$0xff] %v1710
        %1740 = vst [vmem:[%s1732 + $0x71] sm:$0xff] %v1711
        %v1741 = vld [vmem:[#allocation2] sm:$0xff]
        %v1742 = vld [vmem:[#allocation2 + $0x8] sm:$0x3]
        %v1743 = vld [vmem:[#allocation2 + $0x10] sm:$0xff]
        %v1744 = vld [vmem:[#allocation2 + $0x18] sm:$0x3]
        %v1745 = vld [vmem:[#allocation2 + $0x20] sm:$0xff]
        %v1746 = vld [vmem:[#allocation2 + $0x28] sm:$0x3]
        %v1747 = vld [vmem:[#allocation2 + $0x30] sm:$0xff]
        %v1748 = vld [vmem:[#allocation2 + $0x38] sm:$0x3]
        %v1749 = vld [vmem:[#allocation2 + $0x40] sm:$0xff]
        %v1750 = vld [vmem:[#allocation2 + $0x48] sm:$0x3]
        %v1751 = vld [vmem:[#allocation2 + $0x50] sm:$0xff]
        %v1752 = vld [vmem:[#allocation2 + $0x58] sm:$0x3]
        %v1753 = vld [vmem:[#allocation2 + $0x60] sm:$0xff]
        %v1754 = vld [vmem:[#allocation2 + $0x68] sm:$0x3]
        %v1755 = vld [vmem:[#allocation2 + $0x70] sm:$0xff]
        %v1756 = vld [vmem:[#allocation2 + $0x78] sm:$0x3]
        %v1757 = vld [vmem:[#allocation2 + $0x80] sm:$0xff]
        %v1758 = vld [vmem:[#allocation2 + $0x88] sm:$0x3]
        %v1759 = vld [vmem:[#allocation2 + $0x90] sm:$0xff]
        %v1760 = vld [vmem:[#allocation2 + $0x98] sm:$0x3]
        %v1761 = vpack.c.bf16 %v1742, %v1741
        %v1762 = vpack.c.bf16 %v1744, %v1743
        %v1763 = vpack.c.bf16 %v1746, %v1745
        %v1764 = vpack.c.bf16 %v1748, %v1747
        %v1765 = vpack.c.bf16 %v1750, %v1749
        %v1766 = vpack.c.bf16 %v1752, %v1751
        %v1767 = vpack.c.bf16 %v1754, %v1753
        %v1768 = vpack.c.bf16 %v1756, %v1755
        %v1769 = vpack.c.bf16 %v1758, %v1757
        %v1770 = vpack.c.bf16 %v1760, %v1759
        %v1771 = vld [vmem:[%s4] sm:$0xf]
        %v1772 = vld [vmem:[%s4 + $0x4] sm:$0xf]
        %v1773 = vld [vmem:[%s4 + $0x8] sm:$0xf]
        %v1774 = vld [vmem:[%s4 + $0xc] sm:$0xf]
        %v1775 = vld [vmem:[%s4 + $0x10] sm:$0xf]
        %v1776 = vld [vmem:[%s4 + $0x14] sm:$0xf]
        %v1777 = vld [vmem:[%s4 + $0x18] sm:$0xf]
        %v1778 = vld [vmem:[%s4 + $0x1c] sm:$0xf]
        %v1779 = vld [vmem:[%s4 + $0x20] sm:$0xf]
        %v1780 = vld [vmem:[%s4 + $0x24] sm:$0xf]
        %v1781 = vld [vmem:[%s4 + $0x28] sm:$0xf]
        %v1782 = vld [vmem:[%s4 + $0x2c] sm:$0xf]
        %v1783 = vld [vmem:[%s4 + $0x30] sm:$0xf]
        %v1784 = vld [vmem:[%s4 + $0x34] sm:$0xf]
        %v1785 = vld [vmem:[%s4 + $0x38] sm:$0xf]
        %v1786 = vld [vmem:[%s4 + $0x3c] sm:$0xf]
        %v1795 = vunpack.c.l.b16 %v1761
        %v1796 = vunpack.c.h.b16 %v1761
        %v1797 = vunpack.c.l.b16 %v1762
        %v1798 = vunpack.c.h.b16 %v1762
        %v1799 = vunpack.c.l.b16 %v1763
        %v1800 = vunpack.c.h.b16 %v1763
        %v1801 = vunpack.c.l.b16 %v1764
        %v1802 = vunpack.c.h.b16 %v1764
        %v1803 = vunpack.c.l.b16 %v1765
        %v1804 = vunpack.c.h.b16 %v1765
        %v1805 = vunpack.c.l.b16 %v1766
        %v1806 = vunpack.c.h.b16 %v1766
        %v1807 = vunpack.c.l.b16 %v1767
        %v1808 = vunpack.c.h.b16 %v1767
        %v1809 = vunpack.c.l.b16 %v1768
        %v1810 = vunpack.c.h.b16 %v1768
        %v1811 = vpack.c.b16 %v1795, %v1795
        %v1812 = vpack.c.b16 %v1796, %v1796
        %v1813 = vpack.c.b16 %v1797, %v1797
        %v1814 = vpack.c.b16 %v1798, %v1798
        %v1815 = vpack.c.b16 %v1799, %v1799
        %v1816 = vpack.c.b16 %v1800, %v1800
        %v1817 = vpack.c.b16 %v1801, %v1801
        %v1818 = vpack.c.b16 %v1802, %v1802
        %v1819 = vpack.c.b16 %v1803, %v1803
        %v1820 = vpack.c.b16 %v1804, %v1804
        %v1821 = vpack.c.b16 %v1805, %v1805
        %v1822 = vpack.c.b16 %v1806, %v1806
        %v1823 = vpack.c.b16 %v1807, %v1807
        %v1824 = vpack.c.b16 %v1808, %v1808
        %v1825 = vpack.c.b16 %v1809, %v1809
        %v1826 = vpack.c.b16 %v1810, %v1810
        %v1828 = vshrl.u32 %v1811, 16
        %v1830 = vrot.slane %v1828, 4
        %v1831 = vshll.u32 %v1811, 16
        %v1833 = vrot.slane %v1831, 5
        %v1834 = vor.u32 %v1830, %v1833
        %v1835 = vrot.slane %v1834, 4
        %v1837 = vshll.u32 %v1812, 16
        %v1839 = vrot.slane %v1837, 5
        %v1840 = vsel %vm538, %v1835, %v1839
        %v1842 = vshrl.u32 %v1813, 16
        %v1844 = vrot.slane %v1842, 4
        %v1845 = vshll.u32 %v1813, 16
        %v1847 = vrot.slane %v1845, 5
        %v1848 = vor.u32 %v1844, %v1847
        %v1849 = vrot.slane %v1848, 4
        %v1851 = vshll.u32 %v1814, 16
        %v1853 = vrot.slane %v1851, 5
        %v1854 = vsel %vm538, %v1849, %v1853
        %v1856 = vshrl.u32 %v1815, 16
        %v1858 = vrot.slane %v1856, 4
        %v1859 = vshll.u32 %v1815, 16
        %v1861 = vrot.slane %v1859, 5
        %v1862 = vor.u32 %v1858, %v1861
        %v1863 = vrot.slane %v1862, 4
        %v1865 = vshll.u32 %v1816, 16
        %v1867 = vrot.slane %v1865, 5
        %v1868 = vsel %vm538, %v1863, %v1867
        %v1870 = vshrl.u32 %v1817, 16
        %v1872 = vrot.slane %v1870, 4
        %v1873 = vshll.u32 %v1817, 16
        %v1875 = vrot.slane %v1873, 5
        %v1876 = vor.u32 %v1872, %v1875
        %v1877 = vrot.slane %v1876, 4
        %v1879 = vshll.u32 %v1818, 16
        %v1881 = vrot.slane %v1879, 5
        %v1882 = vsel %vm538, %v1877, %v1881
        %v1884 = vshrl.u32 %v1819, 16
        %v1886 = vrot.slane %v1884, 4
        %v1887 = vshll.u32 %v1819, 16
        %v1889 = vrot.slane %v1887, 5
        %v1890 = vor.u32 %v1886, %v1889
        %v1891 = vrot.slane %v1890, 4
        %v1893 = vshll.u32 %v1820, 16
        %v1895 = vrot.slane %v1893, 5
        %v1896 = vsel %vm538, %v1891, %v1895
        %v1898 = vshrl.u32 %v1821, 16
        %v1900 = vrot.slane %v1898, 4
        %v1901 = vshll.u32 %v1821, 16
        %v1903 = vrot.slane %v1901, 5
        %v1904 = vor.u32 %v1900, %v1903
        %v1905 = vrot.slane %v1904, 4
        %v1907 = vshll.u32 %v1822, 16
        %v1909 = vrot.slane %v1907, 5
        %v1910 = vsel %vm538, %v1905, %v1909
        %v1912 = vshrl.u32 %v1823, 16
        %v1914 = vrot.slane %v1912, 4
        %v1915 = vshll.u32 %v1823, 16
        %v1917 = vrot.slane %v1915, 5
        %v1918 = vor.u32 %v1914, %v1917
        %v1919 = vrot.slane %v1918, 4
        %v1921 = vshll.u32 %v1824, 16
        %v1923 = vrot.slane %v1921, 5
        %v1924 = vsel %vm538, %v1919, %v1923
        %v1926 = vshrl.u32 %v1825, 16
        %v1928 = vrot.slane %v1926, 4
        %v1929 = vshll.u32 %v1825, 16
        %v1931 = vrot.slane %v1929, 5
        %v1932 = vor.u32 %v1928, %v1931
        %v1933 = vrot.slane %v1932, 4
        %v1935 = vshll.u32 %v1826, 16
        %v1937 = vrot.slane %v1935, 5
        %v1938 = vsel %vm538, %v1933, %v1937
        %s1939 = scalar_lea.vmem %s4, 64
        %v1940 = vld [vmem:[%s1939] sm:$0xf]
        %v1941 = vld [vmem:[%s1939 + $0x4] sm:$0xf]
        %v1942 = vld [vmem:[%s1939 + $0x8] sm:$0xf]
        %v1943 = vld [vmem:[%s1939 + $0xc] sm:$0xf]
        %v1944 = vld [vmem:[%s1939 + $0x10] sm:$0xf]
        %v1945 = vld [vmem:[%s1939 + $0x14] sm:$0xf]
        %v1946 = vld [vmem:[%s1939 + $0x18] sm:$0xf]
        %v1947 = vld [vmem:[%s1939 + $0x1c] sm:$0xf]
        %v1948 = vld [vmem:[%s1939 + $0x20] sm:$0xf]
        %v1949 = vld [vmem:[%s1939 + $0x24] sm:$0xf]
        %v1950 = vld [vmem:[%s1939 + $0x28] sm:$0xf]
        %v1951 = vld [vmem:[%s1939 + $0x2c] sm:$0xf]
        %v1952 = vld [vmem:[%s1939 + $0x30] sm:$0xf]
        %v1953 = vld [vmem:[%s1939 + $0x34] sm:$0xf]
        %v1954 = vld [vmem:[%s1939 + $0x38] sm:$0xf]
        %v1955 = vld [vmem:[%s1939 + $0x3c] sm:$0xf]
        %v1956 = vunpack.c.l.b16 %v1840
        %v1957 = vunpack.c.l.b16 %v1854
        %v1958 = vunpack.c.l.b16 %v1868
        %v1959 = vunpack.c.l.b16 %v1882
        %v1960 = vunpack.c.l.b16 %v1896
        %v1961 = vunpack.c.l.b16 %v1910
        %v1962 = vunpack.c.l.b16 %v1924
        %v1963 = vunpack.c.l.b16 %v1938
        %v1964 = vpack.c.b16 %v1957, %v1956
        %v1965 = vpack.c.b16 %v1959, %v1958
        %v1966 = vpack.c.b16 %v1961, %v1960
        %v1967 = vpack.c.b16 %v1963, %v1962
        %v1988 = vunpack.c.l.b16 %v1940
        %v1989 = vunpack.c.l.b16 %v1941
        %v1990 = vunpack.c.l.b16 %v1942
        %v1991 = vunpack.c.l.b16 %v1943
        %v1992 = vunpack.c.l.b16 %v1944
        %v1993 = vunpack.c.l.b16 %v1945
        %v1994 = vunpack.c.l.b16 %v1946
        %v1995 = vunpack.c.l.b16 %v1947
        %v1996 = vunpack.c.l.b16 %v1948
        %v1997 = vunpack.c.l.b16 %v1949
        %v1998 = vunpack.c.l.b16 %v1950
        %v1999 = vunpack.c.l.b16 %v1951
        %v2000 = vunpack.c.l.b16 %v1952
        %v2001 = vunpack.c.l.b16 %v1953
        %v2002 = vunpack.c.l.b16 %v1954
        %v2003 = vunpack.c.l.b16 %v1955
        %v2004 = vpack.c.b16 %v1989, %v1988
        %v2005 = vpack.c.b16 %v1991, %v1990
        %v2006 = vpack.c.b16 %v1993, %v1992
        %v2007 = vpack.c.b16 %v1995, %v1994
        %v2008 = vpack.c.b16 %v1997, %v1996
        %v2009 = vpack.c.b16 %v1999, %v1998
        %v2010 = vpack.c.b16 %v2001, %v2000
        %v2011 = vpack.c.b16 %v2003, %v2002
        %2020 = vmatprep.subr.bf16.mxu0 0
        %2021 = vmatpush1.bf16.msra.mxu0 %v2004
        %2022 = vmatprep.subr.bf16.mxu0 0
        %2023 = vmatpush1.bf16.msra.mxu0 %v2005
        %2024 = vmatprep.subr.bf16.mxu0 0
        %2025 = vmatpush1.bf16.msra.mxu0 %v2006
        %2026 = vmatprep.subr.bf16.mxu0 0
        %2027 = vmatpush1.bf16.msra.mxu0 %v2007
        %2028 = vmatprep.subr.bf16.mxu0 0
        %2029 = vmatpush1.bf16.msra.mxu0 %v2008
        %2030 = vmatprep.subr.bf16.mxu0 0
        %2031 = vmatpush1.bf16.msra.mxu0 %v2009
        %2032 = vmatprep.subr.bf16.mxu0 0
        %2033 = vmatpush1.bf16.msra.mxu0 %v2010
        %2034 = vmatprep.subr.bf16.mxu0 0
        %2035 = vmatpush1.bf16.msra.mxu0 %v2011
        %2036 = vmatprep.subr.bf16.mxu0 0
        %2037 = vmatpush1.bf16.msra.mxu0 0
        %2038 = vmatprep.subr.bf16.mxu0 0
        %2039 = vmatpush1.bf16.msra.mxu0 0
        %2040 = vmatprep.subr.bf16.mxu0 0
        %2041 = vmatpush1.bf16.msra.mxu0 0
        %2042 = vmatprep.subr.bf16.mxu0 0
        %2043 = vmatpush1.bf16.msra.mxu0 0
        %2044 = vmatprep.subr.bf16.mxu0 0
        %2045 = vmatpush1.bf16.msra.mxu0 0
        %2046 = vmatprep.subr.bf16.mxu0 0
        %2047 = vmatpush1.bf16.msra.mxu0 0
        %2048 = vmatprep.subr.bf16.mxu0 0
        %2049 = vmatpush1.bf16.msra.mxu0 0
        %2050 = vmatprep.subr.bf16.mxu0 0
        %2051 = vmatpush1.bf16.msra.mxu0 0
        %2052 = vmatprep.mubr.bf16.mxu0 0
        %2053 = vmatmul.mubr.bf16.gmra.mrb[0].mxu0 %v1964
        %v2054 = vpop.f32.mrb[0].mxu0
        %v2055 = vadd.f32 0.0, %v2054
        %v2056 = vpop.f32.mrb[0].mxu0
        %v2057 = vpop.f32.mrb[0].mxu0
        %v2058 = vadd.f32 0.0, %v2057
        %v2059 = vpop.f32.mrb[0].mxu0
        %2060 = vmatprep.mubr.bf16.mxu0 0
        %2061 = vmatmul.mubr.bf16.gmra.mrb[0].mxu0 %v1965
        %v2062 = vpop.f32.mrb[0].mxu0
        %v2063 = vadd.f32 0.0, %v2062
        %v2064 = vpop.f32.mrb[0].mxu0
        %v2065 = vpop.f32.mrb[0].mxu0
        %v2066 = vadd.f32 0.0, %v2065
        %v2067 = vpop.f32.mrb[0].mxu0
        %2068 = vmatprep.mubr.bf16.mxu0 0
        %2069 = vmatmul.mubr.bf16.gmra.mrb[0].mxu0 %v1966
        %v2070 = vpop.f32.mrb[0].mxu0
        %v2071 = vadd.f32 0.0, %v2070
        %v2072 = vpop.f32.mrb[0].mxu0
        %v2073 = vpop.f32.mrb[0].mxu0
        %v2074 = vadd.f32 0.0, %v2073
        %v2075 = vpop.f32.mrb[0].mxu0
        %2076 = vmatprep.mubr.bf16.mxu0 0
        %2077 = vmatmul.mubr.bf16.gmra.mrb[0].mxu0 %v1967
        %v2078 = vpop.f32.mrb[0].mxu0
        %v2079 = vadd.f32 0.0, %v2078
        %v2080 = vpop.f32.mrb[0].mxu0
        %v2081 = vpop.f32.mrb[0].mxu0
        %v2082 = vadd.f32 0.0, %v2081
        %v2083 = vpop.f32.mrb[0].mxu0
        %2084 = vdwg.mxu0
        %v2085 = vpack.c.b16 %v1797, %v1795
        %v2086 = vpack.c.b16 %v1801, %v1799
        %v2087 = vpack.c.b16 %v1805, %v1803
        %v2088 = vpack.c.b16 %v1809, %v1807
        %v2109 = vunpack.c.l.b16 %v1771
        %v2110 = vunpack.c.l.b16 %v1772
        %v2111 = vunpack.c.l.b16 %v1773
        %v2112 = vunpack.c.l.b16 %v1774
        %v2113 = vunpack.c.l.b16 %v1775
        %v2114 = vunpack.c.l.b16 %v1776
        %v2115 = vunpack.c.l.b16 %v1777
        %v2116 = vunpack.c.l.b16 %v1778
        %v2117 = vunpack.c.l.b16 %v1779
        %v2118 = vunpack.c.l.b16 %v1780
        %v2119 = vunpack.c.l.b16 %v1781
        %v2120 = vunpack.c.l.b16 %v1782
        %v2121 = vunpack.c.l.b16 %v1783
        %v2122 = vunpack.c.l.b16 %v1784
        %v2123 = vunpack.c.l.b16 %v1785
        %v2124 = vunpack.c.l.b16 %v1786
        %v2125 = vpack.c.b16 %v2110, %v2109
        %v2126 = vpack.c.b16 %v2112, %v2111
        %v2127 = vpack.c.b16 %v2114, %v2113
        %v2128 = vpack.c.b16 %v2116, %v2115
        %v2129 = vpack.c.b16 %v2118, %v2117
        %v2130 = vpack.c.b16 %v2120, %v2119
        %v2131 = vpack.c.b16 %v2122, %v2121
        %v2132 = vpack.c.b16 %v2124, %v2123
        %2141 = vmatprep.subr.bf16.mxu0 0
        %2142 = vmatpush1.bf16.msra.mxu0 %v2125
        %2143 = vmatprep.subr.bf16.mxu0 0
        %2144 = vmatpush1.bf16.msra.mxu0 %v2126
        %2145 = vmatprep.subr.bf16.mxu0 0
        %2146 = vmatpush1.bf16.msra.mxu0 %v2127
        %2147 = vmatprep.subr.bf16.mxu0 0
        %2148 = vmatpush1.bf16.msra.mxu0 %v2128
        %2149 = vmatprep.subr.bf16.mxu0 0
        %2150 = vmatpush1.bf16.msra.mxu0 %v2129
        %2151 = vmatprep.subr.bf16.mxu0 0
        %2152 = vmatpush1.bf16.msra.mxu0 %v2130
        %2153 = vmatprep.subr.bf16.mxu0 0
        %2154 = vmatpush1.bf16.msra.mxu0 %v2131
        %2155 = vmatprep.subr.bf16.mxu0 0
        %2156 = vmatpush1.bf16.msra.mxu0 %v2132
        %2157 = vmatprep.subr.bf16.mxu0 0
        %2158 = vmatpush1.bf16.msra.mxu0 0
        %2159 = vmatprep.subr.bf16.mxu0 0
        %2160 = vmatpush1.bf16.msra.mxu0 0
        %2161 = vmatprep.subr.bf16.mxu0 0
        %2162 = vmatpush1.bf16.msra.mxu0 0
        %2163 = vmatprep.subr.bf16.mxu0 0
        %2164 = vmatpush1.bf16.msra.mxu0 0
        %2165 = vmatprep.subr.bf16.mxu0 0
        %2166 = vmatpush1.bf16.msra.mxu0 0
        %2167 = vmatprep.subr.bf16.mxu0 0
        %2168 = vmatpush1.bf16.msra.mxu0 0
        %2169 = vmatprep.subr.bf16.mxu0 0
        %2170 = vmatpush1.bf16.msra.mxu0 0
        %2171 = vmatprep.subr.bf16.mxu0 0
        %2172 = vmatpush1.bf16.msra.mxu0 0
        %2173 = vmatprep.mubr.bf16.mxu0 0
        %2174 = vmatmul.mubr.bf16.gmra.mrb[0].mxu0 %v2085
        %v2175 = vpop.f32.mrb[0].mxu0
        %v2176 = vadd.f32 %v2055, %v2175
        %v2177 = vpop.f32.mrb[0].mxu0
        %v2178 = vpop.f32.mrb[0].mxu0
        %v2179 = vadd.f32 %v2058, %v2178
        %v2180 = vpop.f32.mrb[0].mxu0
        %2181 = vmatprep.mubr.bf16.mxu0 0
        %2182 = vmatmul.mubr.bf16.gmra.mrb[0].mxu0 %v2086
        %v2183 = vpop.f32.mrb[0].mxu0
        %v2184 = vadd.f32 %v2063, %v2183
        %v2185 = vpop.f32.mrb[0].mxu0
        %v2186 = vpop.f32.mrb[0].mxu0
        %v2187 = vadd.f32 %v2066, %v2186
        %v2188 = vpop.f32.mrb[0].mxu0
        %2189 = vmatprep.mubr.bf16.mxu0 0
        %2190 = vmatmul.mubr.bf16.gmra.mrb[0].mxu0 %v2087
        %v2191 = vpop.f32.mrb[0].mxu0
        %v2192 = vadd.f32 %v2071, %v2191
        %v2193 = vpop.f32.mrb[0].mxu0
        %v2194 = vpop.f32.mrb[0].mxu0
        %v2195 = vadd.f32 %v2074, %v2194
        %v2196 = vpop.f32.mrb[0].mxu0
        %2197 = vmatprep.mubr.bf16.mxu0 0
        %2198 = vmatmul.mubr.bf16.gmra.mrb[0].mxu0 %v2088
        %v2199 = vpop.f32.mrb[0].mxu0
        %v2200 = vadd.f32 %v2079, %v2199
        %v2201 = vpop.f32.mrb[0].mxu0
        %v2202 = vpop.f32.mrb[0].mxu0
        %v2203 = vadd.f32 %v2082, %v2202
        %v2204 = vpop.f32.mrb[0].mxu0
        %2205 = vdwg.mxu0
        %vm2206 = vcmask 1042432
        %vm2207 = vcmask 1046532
        %vm2208 = vmor %vm2206, %vm2207
        %v2209 = vrot.slane %v1811, 5
        %v2210 = vrot.slane %v2209, 4
        %v2211 = vrot.slane %v1812, 5
        %v2212 = vsel %vm2208, %v2210, %v2211
        %v2213 = vrot.slane %v1813, 5
        %v2214 = vrot.slane %v2213, 4
        %v2215 = vrot.slane %v1814, 5
        %v2216 = vsel %vm2208, %v2214, %v2215
        %v2217 = vrot.slane %v1815, 5
        %v2218 = vrot.slane %v2217, 4
        %v2219 = vrot.slane %v1816, 5
        %v2220 = vsel %vm2208, %v2218, %v2219
        %v2221 = vrot.slane %v1817, 5
        %v2222 = vrot.slane %v2221, 4
        %v2223 = vrot.slane %v1818, 5
        %v2224 = vsel %vm2208, %v2222, %v2223
        %v2225 = vrot.slane %v1819, 5
        %v2226 = vrot.slane %v2225, 4
        %v2227 = vrot.slane %v1820, 5
        %v2228 = vsel %vm2208, %v2226, %v2227
        %v2229 = vrot.slane %v1821, 5
        %v2230 = vrot.slane %v2229, 4
        %v2231 = vrot.slane %v1822, 5
        %v2232 = vsel %vm2208, %v2230, %v2231
        %v2233 = vrot.slane %v1823, 5
        %v2234 = vrot.slane %v2233, 4
        %v2235 = vrot.slane %v1824, 5
        %v2236 = vsel %vm2208, %v2234, %v2235
        %v2237 = vrot.slane %v1825, 5
        %v2238 = vrot.slane %v2237, 4
        %v2239 = vrot.slane %v1826, 5
        %v2240 = vsel %vm2208, %v2238, %v2239
        %s2241 = scalar_lea.vmem %s4, 128
        %v2242 = vld [vmem:[%s2241] sm:$0xf]
        %v2243 = vld [vmem:[%s2241 + $0x4] sm:$0xf]
        %v2244 = vld [vmem:[%s2241 + $0x8] sm:$0xf]
        %v2245 = vld [vmem:[%s2241 + $0xc] sm:$0xf]
        %v2246 = vld [vmem:[%s2241 + $0x10] sm:$0xf]
        %v2247 = vld [vmem:[%s2241 + $0x14] sm:$0xf]
        %v2248 = vld [vmem:[%s2241 + $0x18] sm:$0xf]
        %v2249 = vld [vmem:[%s2241 + $0x1c] sm:$0xf]
        %v2250 = vld [vmem:[%s2241 + $0x20] sm:$0xf]
        %v2251 = vld [vmem:[%s2241 + $0x24] sm:$0xf]
        %v2252 = vld [vmem:[%s2241 + $0x28] sm:$0xf]
        %v2253 = vld [vmem:[%s2241 + $0x2c] sm:$0xf]
        %v2254 = vld [vmem:[%s2241 + $0x30] sm:$0xf]
        %v2255 = vld [vmem:[%s2241 + $0x34] sm:$0xf]
        %v2256 = vld [vmem:[%s2241 + $0x38] sm:$0xf]
        %v2257 = vld [vmem:[%s2241 + $0x3c] sm:$0xf]
        %v2258 = vunpack.c.l.b16 %v2212
        %v2259 = vunpack.c.l.b16 %v2216
        %v2260 = vunpack.c.l.b16 %v2220
        %v2261 = vunpack.c.l.b16 %v2224
        %v2262 = vunpack.c.l.b16 %v2228
        %v2263 = vunpack.c.l.b16 %v2232
        %v2264 = vunpack.c.l.b16 %v2236
        %v2265 = vunpack.c.l.b16 %v2240
        %v2266 = vpack.c.b16 %v2259, %v2258
        %v2267 = vpack.c.b16 %v2261, %v2260
        %v2268 = vpack.c.b16 %v2263, %v2262
        %v2269 = vpack.c.b16 %v2265, %v2264
        %v2290 = vunpack.c.l.b16 %v2242
        %v2291 = vunpack.c.l.b16 %v2243
        %v2292 = vunpack.c.l.b16 %v2244
        %v2293 = vunpack.c.l.b16 %v2245
        %v2294 = vunpack.c.l.b16 %v2246
        %v2295 = vunpack.c.l.b16 %v2247
        %v2296 = vunpack.c.l.b16 %v2248
        %v2297 = vunpack.c.l.b16 %v2249
        %v2298 = vunpack.c.l.b16 %v2250
        %v2299 = vunpack.c.l.b16 %v2251
        %v2300 = vunpack.c.l.b16 %v2252
        %v2301 = vunpack.c.l.b16 %v2253
        %v2302 = vunpack.c.l.b16 %v2254
        %v2303 = vunpack.c.l.b16 %v2255
        %v2304 = vunpack.c.l.b16 %v2256
        %v2305 = vunpack.c.l.b16 %v2257
        %v2306 = vpack.c.b16 %v2291, %v2290
        %v2307 = vpack.c.b16 %v2293, %v2292
        %v2308 = vpack.c.b16 %v2295, %v2294
        %v2309 = vpack.c.b16 %v2297, %v2296
        %v2310 = vpack.c.b16 %v2299, %v2298
        %v2311 = vpack.c.b16 %v2301, %v2300
        %v2312 = vpack.c.b16 %v2303, %v2302
        %v2313 = vpack.c.b16 %v2305, %v2304
        %2322 = vmatprep.subr.bf16.mxu0 0
        %2323 = vmatpush1.bf16.msra.mxu0 %v2306
        %2324 = vmatprep.subr.bf16.mxu0 0
        %2325 = vmatpush1.bf16.msra.mxu0 %v2307
        %2326 = vmatprep.subr.bf16.mxu0 0
        %2327 = vmatpush1.bf16.msra.mxu0 %v2308
        %2328 = vmatprep.subr.bf16.mxu0 0
        %2329 = vmatpush1.bf16.msra.mxu0 %v2309
        %2330 = vmatprep.subr.bf16.mxu0 0
        %2331 = vmatpush1.bf16.msra.mxu0 %v2310
        %2332 = vmatprep.subr.bf16.mxu0 0
        %2333 = vmatpush1.bf16.msra.mxu0 %v2311
        %2334 = vmatprep.subr.bf16.mxu0 0
        %2335 = vmatpush1.bf16.msra.mxu0 %v2312
        %2336 = vmatprep.subr.bf16.mxu0 0
        %2337 = vmatpush1.bf16.msra.mxu0 %v2313
        %2338 = vmatprep.subr.bf16.mxu0 0
        %2339 = vmatpush1.bf16.msra.mxu0 0
        %2340 = vmatprep.subr.bf16.mxu0 0
        %2341 = vmatpush1.bf16.msra.mxu0 0
        %2342 = vmatprep.subr.bf16.mxu0 0
        %2343 = vmatpush1.bf16.msra.mxu0 0
        %2344 = vmatprep.subr.bf16.mxu0 0
        %2345 = vmatpush1.bf16.msra.mxu0 0
        %2346 = vmatprep.subr.bf16.mxu0 0
        %2347 = vmatpush1.bf16.msra.mxu0 0
        %2348 = vmatprep.subr.bf16.mxu0 0
        %2349 = vmatpush1.bf16.msra.mxu0 0
        %2350 = vmatprep.subr.bf16.mxu0 0
        %2351 = vmatpush1.bf16.msra.mxu0 0
        %2352 = vmatprep.subr.bf16.mxu0 0
        %2353 = vmatpush1.bf16.msra.mxu0 0
        %2354 = vmatprep.mubr.bf16.mxu0 0
        %2355 = vmatmul.mubr.bf16.gmra.mrb[0].mxu0 %v2266
        %v2356 = vpop.f32.mrb[0].mxu0
        %v2357 = vadd.f32 0.0, %v2356
        %v2358 = vpop.f32.mrb[0].mxu0
        %v2359 = vpop.f32.mrb[0].mxu0
        %v2360 = vadd.f32 0.0, %v2359
        %v2361 = vpop.f32.mrb[0].mxu0
        %2362 = vmatprep.mubr.bf16.mxu0 0
        %2363 = vmatmul.mubr.bf16.gmra.mrb[0].mxu0 %v2267
        %v2364 = vpop.f32.mrb[0].mxu0
        %v2365 = vadd.f32 0.0, %v2364
        %v2366 = vpop.f32.mrb[0].mxu0
        %v2367 = vpop.f32.mrb[0].mxu0
        %v2368 = vadd.f32 0.0, %v2367
        %v2369 = vpop.f32.mrb[0].mxu0
        %2370 = vmatprep.mubr.bf16.mxu0 0
        %2371 = vmatmul.mubr.bf16.gmra.mrb[0].mxu0 %v2268
        %v2372 = vpop.f32.mrb[0].mxu0
        %v2373 = vadd.f32 0.0, %v2372
        %v2374 = vpop.f32.mrb[0].mxu0
        %v2375 = vpop.f32.mrb[0].mxu0
        %v2376 = vadd.f32 0.0, %v2375
        %v2377 = vpop.f32.mrb[0].mxu0
        %2378 = vmatprep.mubr.bf16.mxu0 0
        %2379 = vmatmul.mubr.bf16.gmra.mrb[0].mxu0 %v2269
        %v2380 = vpop.f32.mrb[0].mxu0
        %v2381 = vadd.f32 0.0, %v2380
        %v2382 = vpop.f32.mrb[0].mxu0
        %v2383 = vpop.f32.mrb[0].mxu0
        %v2384 = vadd.f32 0.0, %v2383
        %v2385 = vpop.f32.mrb[0].mxu0
        %2386 = vdwg.mxu0
        %v2387 = vadd.f32 %v2176, %v2357
        %v2388 = vadd.f32 %v2179, %v2360
        %v2389 = vadd.f32 %v2184, %v2365
        %v2390 = vadd.f32 %v2187, %v2368
        %v2391 = vadd.f32 %v2192, %v2373
        %v2392 = vadd.f32 %v2195, %v2376
        %v2393 = vadd.f32 %v2200, %v2381
        %v2394 = vadd.f32 %v2203, %v2384
        %s2395 = scalar_lea.vmem %s4, 192
        %v2396 = vld [vmem:[%s2395] sm:$0xf]
        %v2397 = vld [vmem:[%s2395 + $0x4] sm:$0xf]
        %v2398 = vld [vmem:[%s2395 + $0x8] sm:$0xf]
        %v2399 = vld [vmem:[%s2395 + $0xc] sm:$0xf]
        %v2400 = vld [vmem:[%s2395 + $0x10] sm:$0xf]
        %v2401 = vld [vmem:[%s2395 + $0x14] sm:$0xf]
        %v2402 = vld [vmem:[%s2395 + $0x18] sm:$0xf]
        %v2403 = vld [vmem:[%s2395 + $0x1c] sm:$0xf]
        %v2404 = vld [vmem:[%s2395 + $0x20] sm:$0xf]
        %v2405 = vld [vmem:[%s2395 + $0x24] sm:$0xf]
        %v2406 = vld [vmem:[%s2395 + $0x28] sm:$0xf]
        %v2407 = vld [vmem:[%s2395 + $0x2c] sm:$0xf]
        %v2408 = vld [vmem:[%s2395 + $0x30] sm:$0xf]
        %v2409 = vld [vmem:[%s2395 + $0x34] sm:$0xf]
        %v2410 = vld [vmem:[%s2395 + $0x38] sm:$0xf]
        %v2411 = vld [vmem:[%s2395 + $0x3c] sm:$0xf]
        %v2413 = vunpack.c.l.b16 %v1769
        %v2414 = vpack.c.b16 %v1799, %v1797
        %v2415 = vpack.c.b16 %v1803, %v1801
        %v2416 = vpack.c.b16 %v1807, %v1805
        %v2417 = vpack.c.b16 %v2413, %v1809
        %v2438 = vunpack.c.l.b16 %v2396
        %v2439 = vunpack.c.l.b16 %v2397
        %v2440 = vunpack.c.l.b16 %v2398
        %v2441 = vunpack.c.l.b16 %v2399
        %v2442 = vunpack.c.l.b16 %v2400
        %v2443 = vunpack.c.l.b16 %v2401
        %v2444 = vunpack.c.l.b16 %v2402
        %v2445 = vunpack.c.l.b16 %v2403
        %v2446 = vunpack.c.l.b16 %v2404
        %v2447 = vunpack.c.l.b16 %v2405
        %v2448 = vunpack.c.l.b16 %v2406
        %v2449 = vunpack.c.l.b16 %v2407
        %v2450 = vunpack.c.l.b16 %v2408
        %v2451 = vunpack.c.l.b16 %v2409
        %v2452 = vunpack.c.l.b16 %v2410
        %v2453 = vunpack.c.l.b16 %v2411
        %v2454 = vpack.c.b16 %v2439, %v2438
        %v2455 = vpack.c.b16 %v2441, %v2440
        %v2456 = vpack.c.b16 %v2443, %v2442
        %v2457 = vpack.c.b16 %v2445, %v2444
        %v2458 = vpack.c.b16 %v2447, %v2446
        %v2459 = vpack.c.b16 %v2449, %v2448
        %v2460 = vpack.c.b16 %v2451, %v2450
        %v2461 = vpack.c.b16 %v2453, %v2452
        %2470 = vmatprep.subr.bf16.mxu0 0
        %2471 = vmatpush1.bf16.msra.mxu0 %v2454
        %2472 = vmatprep.subr.bf16.mxu0 0
        %2473 = vmatpush1.bf16.msra.mxu0 %v2455
        %2474 = vmatprep.subr.bf16.mxu0 0
        %2475 = vmatpush1.bf16.msra.mxu0 %v2456
        %2476 = vmatprep.subr.bf16.mxu0 0
        %2477 = vmatpush1.bf16.msra.mxu0 %v2457
        %2478 = vmatprep.subr.bf16.mxu0 0
        %2479 = vmatpush1.bf16.msra.mxu0 %v2458
        %2480 = vmatprep.subr.bf16.mxu0 0
        %2481 = vmatpush1.bf16.msra.mxu0 %v2459
        %2482 = vmatprep.subr.bf16.mxu0 0
        %2483 = vmatpush1.bf16.msra.mxu0 %v2460
        %2484 = vmatprep.subr.bf16.mxu0 0
        %2485 = vmatpush1.bf16.msra.mxu0 %v2461
        %2486 = vmatprep.subr.bf16.mxu0 0
        %2487 = vmatpush1.bf16.msra.mxu0 0
        %2488 = vmatprep.subr.bf16.mxu0 0
        %2489 = vmatpush1.bf16.msra.mxu0 0
        %2490 = vmatprep.subr.bf16.mxu0 0
        %2491 = vmatpush1.bf16.msra.mxu0 0
        %2492 = vmatprep.subr.bf16.mxu0 0
        %2493 = vmatpush1.bf16.msra.mxu0 0
        %2494 = vmatprep.subr.bf16.mxu0 0
        %2495 = vmatpush1.bf16.msra.mxu0 0
        %2496 = vmatprep.subr.bf16.mxu0 0
        %2497 = vmatpush1.bf16.msra.mxu0 0
        %2498 = vmatprep.subr.bf16.mxu0 0
        %2499 = vmatpush1.bf16.msra.mxu0 0
        %2500 = vmatprep.subr.bf16.mxu0 0
        %2501 = vmatpush1.bf16.msra.mxu0 0
        %2502 = vmatprep.mubr.bf16.mxu0 0
        %2503 = vmatmul.mubr.bf16.gmra.mrb[0].mxu0 %v2414
        %v2504 = vpop.f32.mrb[0].mxu0
        %v2505 = vadd.f32 0.0, %v2504
        %v2506 = vpop.f32.mrb[0].mxu0
        %v2507 = vpop.f32.mrb[0].mxu0
        %v2508 = vadd.f32 0.0, %v2507
        %v2509 = vpop.f32.mrb[0].mxu0
        %2510 = vmatprep.mubr.bf16.mxu0 0
        %2511 = vmatmul.mubr.bf16.gmra.mrb[0].mxu0 %v2415
        %v2512 = vpop.f32.mrb[0].mxu0
        %v2513 = vadd.f32 0.0, %v2512
        %v2514 = vpop.f32.mrb[0].mxu0
        %v2515 = vpop.f32.mrb[0].mxu0
        %v2516 = vadd.f32 0.0, %v2515
        %v2517 = vpop.f32.mrb[0].mxu0
        %2518 = vmatprep.mubr.bf16.mxu0 0
        %2519 = vmatmul.mubr.bf16.gmra.mrb[0].mxu0 %v2416
        %v2520 = vpop.f32.mrb[0].mxu0
        %v2521 = vadd.f32 0.0, %v2520
        %v2522 = vpop.f32.mrb[0].mxu0
        %v2523 = vpop.f32.mrb[0].mxu0
        %v2524 = vadd.f32 0.0, %v2523
        %v2525 = vpop.f32.mrb[0].mxu0
        %2526 = vmatprep.mubr.bf16.mxu0 0
        %2527 = vmatmul.mubr.bf16.gmra.mrb[0].mxu0 %v2417
        %v2528 = vpop.f32.mrb[0].mxu0
        %v2529 = vadd.f32 0.0, %v2528
        %v2530 = vpop.f32.mrb[0].mxu0
        %v2531 = vpop.f32.mrb[0].mxu0
        %v2532 = vadd.f32 0.0, %v2531
        %v2533 = vpop.f32.mrb[0].mxu0
        %2534 = vdwg.mxu0
        %v2535 = vadd.f32 %v2387, %v2505
        %v2536 = vadd.f32 %v2388, %v2508
        %v2537 = vadd.f32 %v2389, %v2513
        %v2538 = vadd.f32 %v2390, %v2516
        %v2539 = vadd.f32 %v2391, %v2521
        %v2540 = vadd.f32 %v2392, %v2524
        %v2541 = vadd.f32 %v2393, %v2529
        %v2542 = vadd.f32 %v2394, %v2532
        %v2543 = vunpack.c.h.b16 %v1769
        %v2544 = vpack.c.b16 %v2413, %v2413
        %v2545 = vpack.c.b16 %v2543, %v2543
        %v2547 = vshrl.u32 %v2544, 16
        %v2549 = vrot.slane %v2547, 4
        %v2550 = vshll.u32 %v2544, 16
        %v2552 = vrot.slane %v2550, 5
        %v2553 = vor.u32 %v2549, %v2552
        %v2554 = vrot.slane %v2553, 4
        %v2556 = vshll.u32 %v2545, 16
        %v2558 = vrot.slane %v2556, 5
        %v2559 = vsel %vm538, %v2554, %v2558
        %s2560 = scalar_lea.vmem %s4, 256
        %v2561 = vld [vmem:[%s2560] sm:$0xf]
        %v2562 = vld [vmem:[%s2560 + $0x4] sm:$0xf]
        %v2563 = vld [vmem:[%s2560 + $0x8] sm:$0xf]
        %v2564 = vld [vmem:[%s2560 + $0xc] sm:$0xf]
        %v2565 = vld [vmem:[%s2560 + $0x10] sm:$0xf]
        %v2566 = vld [vmem:[%s2560 + $0x14] sm:$0xf]
        %v2567 = vld [vmem:[%s2560 + $0x18] sm:$0xf]
        %v2568 = vld [vmem:[%s2560 + $0x1c] sm:$0xf]
        %v2569 = vld [vmem:[%s2560 + $0x20] sm:$0xf]
        %v2570 = vld [vmem:[%s2560 + $0x24] sm:$0xf]
        %v2571 = vld [vmem:[%s2560 + $0x28] sm:$0xf]
        %v2572 = vld [vmem:[%s2560 + $0x2c] sm:$0xf]
        %v2573 = vld [vmem:[%s2560 + $0x30] sm:$0xf]
        %v2574 = vld [vmem:[%s2560 + $0x34] sm:$0xf]
        %v2575 = vld [vmem:[%s2560 + $0x38] sm:$0xf]
        %v2576 = vld [vmem:[%s2560 + $0x3c] sm:$0xf]
        %v2577 = vunpack.c.l.b16 %v2559
        %v2578 = vpack.c.b16 %v1958, %v1957
        %v2579 = vpack.c.b16 %v1960, %v1959
        %v2580 = vpack.c.b16 %v1962, %v1961
        %v2581 = vpack.c.b16 %v2577, %v1963
        %v2602 = vunpack.c.l.b16 %v2561
        %v2603 = vunpack.c.l.b16 %v2562
        %v2604 = vunpack.c.l.b16 %v2563
        %v2605 = vunpack.c.l.b16 %v2564
        %v2606 = vunpack.c.l.b16 %v2565
        %v2607 = vunpack.c.l.b16 %v2566
        %v2608 = vunpack.c.l.b16 %v2567
        %v2609 = vunpack.c.l.b16 %v2568
        %v2610 = vunpack.c.l.b16 %v2569
        %v2611 = vunpack.c.l.b16 %v2570
        %v2612 = vunpack.c.l.b16 %v2571
        %v2613 = vunpack.c.l.b16 %v2572
        %v2614 = vunpack.c.l.b16 %v2573
        %v2615 = vunpack.c.l.b16 %v2574
        %v2616 = vunpack.c.l.b16 %v2575
        %v2617 = vunpack.c.l.b16 %v2576
        %v2618 = vpack.c.b16 %v2603, %v2602
        %v2619 = vpack.c.b16 %v2605, %v2604
        %v2620 = vpack.c.b16 %v2607, %v2606
        %v2621 = vpack.c.b16 %v2609, %v2608
        %v2622 = vpack.c.b16 %v2611, %v2610
        %v2623 = vpack.c.b16 %v2613, %v2612
        %v2624 = vpack.c.b16 %v2615, %v2614
        %v2625 = vpack.c.b16 %v2617, %v2616
        %2634 = vmatprep.subr.bf16.mxu0 0
        %2635 = vmatpush1.bf16.msra.mxu0 %v2618
        %2636 = vmatprep.subr.bf16.mxu0 0
        %2637 = vmatpush1.bf16.msra.mxu0 %v2619
        %2638 = vmatprep.subr.bf16.mxu0 0
        %2639 = vmatpush1.bf16.msra.mxu0 %v2620
        %2640 = vmatprep.subr.bf16.mxu0 0
        %2641 = vmatpush1.bf16.msra.mxu0 %v2621
        %2642 = vmatprep.subr.bf16.mxu0 0
        %2643 = vmatpush1.bf16.msra.mxu0 %v2622
        %2644 = vmatprep.subr.bf16.mxu0 0
        %2645 = vmatpush1.bf16.msra.mxu0 %v2623
        %2646 = vmatprep.subr.bf16.mxu0 0
        %2647 = vmatpush1.bf16.msra.mxu0 %v2624
        %2648 = vmatprep.subr.bf16.mxu0 0
        %2649 = vmatpush1.bf16.msra.mxu0 %v2625
        %2650 = vmatprep.subr.bf16.mxu0 0
        %2651 = vmatpush1.bf16.msra.mxu0 0
        %2652 = vmatprep.subr.bf16.mxu0 0
        %2653 = vmatpush1.bf16.msra.mxu0 0
        %2654 = vmatprep.subr.bf16.mxu0 0
        %2655 = vmatpush1.bf16.msra.mxu0 0
        %2656 = vmatprep.subr.bf16.mxu0 0
        %2657 = vmatpush1.bf16.msra.mxu0 0
        %2658 = vmatprep.subr.bf16.mxu0 0
        %2659 = vmatpush1.bf16.msra.mxu0 0
        %2660 = vmatprep.subr.bf16.mxu0 0
        %2661 = vmatpush1.bf16.msra.mxu0 0
        %2662 = vmatprep.subr.bf16.mxu0 0
        %2663 = vmatpush1.bf16.msra.mxu0 0
        %2664 = vmatprep.subr.bf16.mxu0 0
        %2665 = vmatpush1.bf16.msra.mxu0 0
        %2666 = vmatprep.mubr.bf16.mxu0 0
        %2667 = vmatmul.mubr.bf16.gmra.mrb[0].mxu0 %v2578
        %v2668 = vpop.f32.mrb[0].mxu0
        %v2669 = vadd.f32 0.0, %v2668
        %v2670 = vpop.f32.mrb[0].mxu0
        %v2671 = vpop.f32.mrb[0].mxu0
        %v2672 = vadd.f32 0.0, %v2671
        %v2673 = vpop.f32.mrb[0].mxu0
        %2674 = vmatprep.mubr.bf16.mxu0 0
        %2675 = vmatmul.mubr.bf16.gmra.mrb[0].mxu0 %v2579
        %v2676 = vpop.f32.mrb[0].mxu0
        %v2677 = vadd.f32 0.0, %v2676
        %v2678 = vpop.f32.mrb[0].mxu0
        %v2679 = vpop.f32.mrb[0].mxu0
        %v2680 = vadd.f32 0.0, %v2679
        %v2681 = vpop.f32.mrb[0].mxu0
        %2682 = vmatprep.mubr.bf16.mxu0 0
        %2683 = vmatmul.mubr.bf16.gmra.mrb[0].mxu0 %v2580
        %v2684 = vpop.f32.mrb[0].mxu0
        %v2685 = vadd.f32 0.0, %v2684
        %v2686 = vpop.f32.mrb[0].mxu0
        %v2687 = vpop.f32.mrb[0].mxu0
        %v2688 = vadd.f32 0.0, %v2687
        %v2689 = vpop.f32.mrb[0].mxu0
        %2690 = vmatprep.mubr.bf16.mxu0 0
        %2691 = vmatmul.mubr.bf16.gmra.mrb[0].mxu0 %v2581
        %v2692 = vpop.f32.mrb[0].mxu0
        %v2693 = vadd.f32 0.0, %v2692
        %v2694 = vpop.f32.mrb[0].mxu0
        %v2695 = vpop.f32.mrb[0].mxu0
        %v2696 = vadd.f32 0.0, %v2695
        %v2697 = vpop.f32.mrb[0].mxu0
        %2698 = vdwg.mxu0
        %v2699 = vadd.f32 %v2535, %v2669
        %v2700 = vadd.f32 %v2536, %v2672
        %v2701 = vadd.f32 %v2537, %v2677
        %v2702 = vadd.f32 %v2538, %v2680
        %v2703 = vadd.f32 %v2539, %v2685
        %v2704 = vadd.f32 %v2540, %v2688
        %v2705 = vadd.f32 %v2541, %v2693
        %v2706 = vadd.f32 %v2542, %v2696
        %v2707 = vrot.slane %v2544, 5
        %v2708 = vrot.slane %v2707, 4
        %v2709 = vrot.slane %v2545, 5
        %v2710 = vsel %vm2208, %v2708, %v2709
        %s2711 = scalar_lea.vmem %s4, 320
        %v2712 = vld [vmem:[%s2711] sm:$0xf]
        %v2713 = vld [vmem:[%s2711 + $0x4] sm:$0xf]
        %v2714 = vld [vmem:[%s2711 + $0x8] sm:$0xf]
        %v2715 = vld [vmem:[%s2711 + $0xc] sm:$0xf]
        %v2716 = vld [vmem:[%s2711 + $0x10] sm:$0xf]
        %v2717 = vld [vmem:[%s2711 + $0x14] sm:$0xf]
        %v2718 = vld [vmem:[%s2711 + $0x18] sm:$0xf]
        %v2719 = vld [vmem:[%s2711 + $0x1c] sm:$0xf]
        %v2720 = vld [vmem:[%s2711 + $0x20] sm:$0xf]
        %v2721 = vld [vmem:[%s2711 + $0x24] sm:$0xf]
        %v2722 = vld [vmem:[%s2711 + $0x28] sm:$0xf]
        %v2723 = vld [vmem:[%s2711 + $0x2c] sm:$0xf]
        %v2724 = vld [vmem:[%s2711 + $0x30] sm:$0xf]
        %v2725 = vld [vmem:[%s2711 + $0x34] sm:$0xf]
        %v2726 = vld [vmem:[%s2711 + $0x38] sm:$0xf]
        %v2727 = vld [vmem:[%s2711 + $0x3c] sm:$0xf]
        %v2728 = vunpack.c.l.b16 %v2710
        %v2729 = vpack.c.b16 %v2260, %v2259
        %v2730 = vpack.c.b16 %v2262, %v2261
        %v2731 = vpack.c.b16 %v2264, %v2263
        %v2732 = vpack.c.b16 %v2728, %v2265
        %v2753 = vunpack.c.l.b16 %v2712
        %v2754 = vunpack.c.l.b16 %v2713
        %v2755 = vunpack.c.l.b16 %v2714
        %v2756 = vunpack.c.l.b16 %v2715
        %v2757 = vunpack.c.l.b16 %v2716
        %v2758 = vunpack.c.l.b16 %v2717
        %v2759 = vunpack.c.l.b16 %v2718
        %v2760 = vunpack.c.l.b16 %v2719
        %v2761 = vunpack.c.l.b16 %v2720
        %v2762 = vunpack.c.l.b16 %v2721
        %v2763 = vunpack.c.l.b16 %v2722
        %v2764 = vunpack.c.l.b16 %v2723
        %v2765 = vunpack.c.l.b16 %v2724
        %v2766 = vunpack.c.l.b16 %v2725
        %v2767 = vunpack.c.l.b16 %v2726
        %v2768 = vunpack.c.l.b16 %v2727
        %v2769 = vpack.c.b16 %v2754, %v2753
        %v2770 = vpack.c.b16 %v2756, %v2755
        %v2771 = vpack.c.b16 %v2758, %v2757
        %v2772 = vpack.c.b16 %v2760, %v2759
        %v2773 = vpack.c.b16 %v2762, %v2761
        %v2774 = vpack.c.b16 %v2764, %v2763
        %v2775 = vpack.c.b16 %v2766, %v2765
        %v2776 = vpack.c.b16 %v2768, %v2767
        %2785 = vmatprep.subr.bf16.mxu0 0
        %2786 = vmatpush1.bf16.msra.mxu0 %v2769
        %2787 = vmatprep.subr.bf16.mxu0 0
        %2788 = vmatpush1.bf16.msra.mxu0 %v2770
        %2789 = vmatprep.subr.bf16.mxu0 0
        %2790 = vmatpush1.bf16.msra.mxu0 %v2771
        %2791 = vmatprep.subr.bf16.mxu0 0
        %2792 = vmatpush1.bf16.msra.mxu0 %v2772
        %2793 = vmatprep.subr.bf16.mxu0 0
        %2794 = vmatpush1.bf16.msra.mxu0 %v2773
        %2795 = vmatprep.subr.bf16.mxu0 0
        %2796 = vmatpush1.bf16.msra.mxu0 %v2774
        %2797 = vmatprep.subr.bf16.mxu0 0
        %2798 = vmatpush1.bf16.msra.mxu0 %v2775
        %2799 = vmatprep.subr.bf16.mxu0 0
        %2800 = vmatpush1.bf16.msra.mxu0 %v2776
        %2801 = vmatprep.subr.bf16.mxu0 0
        %2802 = vmatpush1.bf16.msra.mxu0 0
        %2803 = vmatprep.subr.bf16.mxu0 0
        %2804 = vmatpush1.bf16.msra.mxu0 0
        %2805 = vmatprep.subr.bf16.mxu0 0
        %2806 = vmatpush1.bf16.msra.mxu0 0
        %2807 = vmatprep.subr.bf16.mxu0 0
        %2808 = vmatpush1.bf16.msra.mxu0 0
        %2809 = vmatprep.subr.bf16.mxu0 0
        %2810 = vmatpush1.bf16.msra.mxu0 0
        %2811 = vmatprep.subr.bf16.mxu0 0
        %2812 = vmatpush1.bf16.msra.mxu0 0
        %2813 = vmatprep.subr.bf16.mxu0 0
        %2814 = vmatpush1.bf16.msra.mxu0 0
        %2815 = vmatprep.subr.bf16.mxu0 0
        %2816 = vmatpush1.bf16.msra.mxu0 0
        %2817 = vmatprep.mubr.bf16.mxu0 0
        %2818 = vmatmul.mubr.bf16.gmra.mrb[0].mxu0 %v2729
        %v2819 = vpop.f32.mrb[0].mxu0
        %v2820 = vadd.f32 0.0, %v2819
        %v2821 = vpop.f32.mrb[0].mxu0
        %v2822 = vpop.f32.mrb[0].mxu0
        %v2823 = vadd.f32 0.0, %v2822
        %v2824 = vpop.f32.mrb[0].mxu0
        %2825 = vmatprep.mubr.bf16.mxu0 0
        %2826 = vmatmul.mubr.bf16.gmra.mrb[0].mxu0 %v2730
        %v2827 = vpop.f32.mrb[0].mxu0
        %v2828 = vadd.f32 0.0, %v2827
        %v2829 = vpop.f32.mrb[0].mxu0
        %v2830 = vpop.f32.mrb[0].mxu0
        %v2831 = vadd.f32 0.0, %v2830
        %v2832 = vpop.f32.mrb[0].mxu0
        %2833 = vmatprep.mubr.bf16.mxu0 0
        %2834 = vmatmul.mubr.bf16.gmra.mrb[0].mxu0 %v2731
        %v2835 = vpop.f32.mrb[0].mxu0
        %v2836 = vadd.f32 0.0, %v2835
        %v2837 = vpop.f32.mrb[0].mxu0
        %v2838 = vpop.f32.mrb[0].mxu0
        %v2839 = vadd.f32 0.0, %v2838
        %v2840 = vpop.f32.mrb[0].mxu0
        %2841 = vmatprep.mubr.bf16.mxu0 0
        %2842 = vmatmul.mubr.bf16.gmra.mrb[0].mxu0 %v2732
        %v2843 = vpop.f32.mrb[0].mxu0
        %v2844 = vadd.f32 0.0, %v2843
        %v2845 = vpop.f32.mrb[0].mxu0
        %v2846 = vpop.f32.mrb[0].mxu0
        %v2847 = vadd.f32 0.0, %v2846
        %v2848 = vpop.f32.mrb[0].mxu0
        %2849 = vdwg.mxu0
        %v2850 = vadd.f32 %v2699, %v2820
        %v2851 = vadd.f32 %v2700, %v2823
        %v2852 = vadd.f32 %v2701, %v2828
        %v2853 = vadd.f32 %v2702, %v2831
        %v2854 = vadd.f32 %v2703, %v2836
        %v2855 = vadd.f32 %v2704, %v2839
        %v2856 = vadd.f32 %v2705, %v2844
        %v2857 = vadd.f32 %v2706, %v2847
        %s2858 = scalar_lea.vmem %s4, 384
        %v2859 = vld [vmem:[%s2858] sm:$0xf]
        %v2860 = vld [vmem:[%s2858 + $0x4] sm:$0xf]
        %v2861 = vld [vmem:[%s2858 + $0x8] sm:$0xf]
        %v2862 = vld [vmem:[%s2858 + $0xc] sm:$0xf]
        %v2863 = vld [vmem:[%s2858 + $0x10] sm:$0xf]
        %v2864 = vld [vmem:[%s2858 + $0x14] sm:$0xf]
        %v2865 = vld [vmem:[%s2858 + $0x18] sm:$0xf]
        %v2866 = vld [vmem:[%s2858 + $0x1c] sm:$0xf]
        %v2867 = vld [vmem:[%s2858 + $0x20] sm:$0xf]
        %v2868 = vld [vmem:[%s2858 + $0x24] sm:$0xf]
        %v2869 = vld [vmem:[%s2858 + $0x28] sm:$0xf]
        %v2870 = vld [vmem:[%s2858 + $0x2c] sm:$0xf]
        %v2871 = vld [vmem:[%s2858 + $0x30] sm:$0xf]
        %v2872 = vld [vmem:[%s2858 + $0x34] sm:$0xf]
        %v2873 = vld [vmem:[%s2858 + $0x38] sm:$0xf]
        %v2874 = vld [vmem:[%s2858 + $0x3c] sm:$0xf]
        %v2876 = vunpack.c.l.b16 %v1770
        %v2877 = vpack.c.b16 %v2876, %v2413
        %v2895 = vunpack.c.l.b16 %v2859
        %v2896 = vunpack.c.l.b16 %v2860
        %v2897 = vunpack.c.l.b16 %v2861
        %v2898 = vunpack.c.l.b16 %v2862
        %v2899 = vunpack.c.l.b16 %v2863
        %v2900 = vunpack.c.l.b16 %v2864
        %v2901 = vunpack.c.l.b16 %v2865
        %v2902 = vunpack.c.l.b16 %v2866
        %v2903 = vunpack.c.l.b16 %v2867
        %v2904 = vunpack.c.l.b16 %v2868
        %v2905 = vunpack.c.l.b16 %v2869
        %v2906 = vunpack.c.l.b16 %v2870
        %v2907 = vunpack.c.l.b16 %v2871
        %v2908 = vunpack.c.l.b16 %v2872
        %v2909 = vunpack.c.l.b16 %v2873
        %v2910 = vunpack.c.l.b16 %v2874
        %v2911 = vpack.c.b16 %v2896, %v2895
        %v2912 = vpack.c.b16 %v2898, %v2897
        %v2913 = vpack.c.b16 %v2900, %v2899
        %v2914 = vpack.c.b16 %v2902, %v2901
        %v2915 = vpack.c.b16 %v2904, %v2903
        %v2916 = vpack.c.b16 %v2906, %v2905
        %v2917 = vpack.c.b16 %v2908, %v2907
        %v2918 = vpack.c.b16 %v2910, %v2909
        %2927 = vmatprep.subr.bf16.mxu0 0
        %2928 = vmatpush1.bf16.msra.mxu0 %v2911
        %2929 = vmatprep.subr.bf16.mxu0 0
        %2930 = vmatpush1.bf16.msra.mxu0 %v2912
        %2931 = vmatprep.subr.bf16.mxu0 0
        %2932 = vmatpush1.bf16.msra.mxu0 %v2913
        %2933 = vmatprep.subr.bf16.mxu0 0
        %2934 = vmatpush1.bf16.msra.mxu0 %v2914
        %2935 = vmatprep.subr.bf16.mxu0 0
        %2936 = vmatpush1.bf16.msra.mxu0 %v2915
        %2937 = vmatprep.subr.bf16.mxu0 0
        %2938 = vmatpush1.bf16.msra.mxu0 %v2916
        %2939 = vmatprep.subr.bf16.mxu0 0
        %2940 = vmatpush1.bf16.msra.mxu0 %v2917
        %2941 = vmatprep.subr.bf16.mxu0 0
        %2942 = vmatpush1.bf16.msra.mxu0 %v2918
        %2943 = vmatprep.subr.bf16.mxu0 0
        %2944 = vmatpush1.bf16.msra.mxu0 0
        %2945 = vmatprep.subr.bf16.mxu0 0
        %2946 = vmatpush1.bf16.msra.mxu0 0
        %2947 = vmatprep.subr.bf16.mxu0 0
        %2948 = vmatpush1.bf16.msra.mxu0 0
        %2949 = vmatprep.subr.bf16.mxu0 0
        %2950 = vmatpush1.bf16.msra.mxu0 0
        %2951 = vmatprep.subr.bf16.mxu0 0
        %2952 = vmatpush1.bf16.msra.mxu0 0
        %2953 = vmatprep.subr.bf16.mxu0 0
        %2954 = vmatpush1.bf16.msra.mxu0 0
        %2955 = vmatprep.subr.bf16.mxu0 0
        %2956 = vmatpush1.bf16.msra.mxu0 0
        %2957 = vmatprep.subr.bf16.mxu0 0
        %2958 = vmatpush1.bf16.msra.mxu0 0
        %2959 = vmatprep.mubr.bf16.mxu0 0
        %2960 = vmatmul.mubr.bf16.gmra.mrb[0].mxu0 %v2086
        %v2961 = vpop.f32.mrb[0].mxu0
        %v2962 = vadd.f32 0.0, %v2961
        %v2963 = vpop.f32.mrb[0].mxu0
        %v2964 = vpop.f32.mrb[0].mxu0
        %v2965 = vadd.f32 0.0, %v2964
        %v2966 = vpop.f32.mrb[0].mxu0
        %2967 = vmatprep.mubr.bf16.mxu0 0
        %2968 = vmatmul.mubr.bf16.gmra.mrb[0].mxu0 %v2087
        %v2969 = vpop.f32.mrb[0].mxu0
        %v2970 = vadd.f32 0.0, %v2969
        %v2971 = vpop.f32.mrb[0].mxu0
        %v2972 = vpop.f32.mrb[0].mxu0
        %v2973 = vadd.f32 0.0, %v2972
        %v2974 = vpop.f32.mrb[0].mxu0
        %2975 = vmatprep.mubr.bf16.mxu0 0
        %2976 = vmatmul.mubr.bf16.gmra.mrb[0].mxu0 %v2088
        %v2977 = vpop.f32.mrb[0].mxu0
        %v2978 = vadd.f32 0.0, %v2977
        %v2979 = vpop.f32.mrb[0].mxu0
        %v2980 = vpop.f32.mrb[0].mxu0
        %v2981 = vadd.f32 0.0, %v2980
        %v2982 = vpop.f32.mrb[0].mxu0
        %2983 = vmatprep.mubr.bf16.mxu0 0
        %2984 = vmatmul.mubr.bf16.gmra.mrb[0].mxu0 %v2877
        %v2985 = vpop.f32.mrb[0].mxu0
        %v2986 = vadd.f32 0.0, %v2985
        %v2987 = vpop.f32.mrb[0].mxu0
        %v2988 = vpop.f32.mrb[0].mxu0
        %v2989 = vadd.f32 0.0, %v2988
        %v2990 = vpop.f32.mrb[0].mxu0
        %2991 = vdwg.mxu0
        %v2992 = vadd.f32 %v2850, %v2962
        %v2993 = vadd.f32 %v2851, %v2965
        %v2994 = vadd.f32 %v2852, %v2970
        %v2995 = vadd.f32 %v2853, %v2973
        %v2996 = vadd.f32 %v2854, %v2978
        %v2997 = vadd.f32 %v2855, %v2981
        %v2998 = vadd.f32 %v2856, %v2986
        %v2999 = vadd.f32 %v2857, %v2989
        %v3000 = vunpack.c.h.b16 %v1770
        %v3001 = vpack.c.b16 %v2876, %v2876
        %v3002 = vpack.c.b16 %v3000, %v3000
        %v3004 = vshrl.u32 %v3001, 16
        %v3006 = vrot.slane %v3004, 4
        %v3007 = vshll.u32 %v3001, 16
        %v3009 = vrot.slane %v3007, 5
        %v3010 = vor.u32 %v3006, %v3009
        %v3011 = vrot.slane %v3010, 4
        %v3013 = vshll.u32 %v3002, 16
        %v3015 = vrot.slane %v3013, 5
        %v3016 = vsel %vm538, %v3011, %v3015
        %s3017 = scalar_lea.vmem %s4, 448
        %v3018 = vld [vmem:[%s3017] sm:$0xf]
        %v3019 = vld [vmem:[%s3017 + $0x4] sm:$0xf]
        %v3020 = vld [vmem:[%s3017 + $0x8] sm:$0xf]
        %v3021 = vld [vmem:[%s3017 + $0xc] sm:$0xf]
        %v3022 = vld [vmem:[%s3017 + $0x10] sm:$0xf]
        %v3023 = vld [vmem:[%s3017 + $0x14] sm:$0xf]
        %v3024 = vld [vmem:[%s3017 + $0x18] sm:$0xf]
        %v3025 = vld [vmem:[%s3017 + $0x1c] sm:$0xf]
        %v3026 = vld [vmem:[%s3017 + $0x20] sm:$0xf]
        %v3027 = vld [vmem:[%s3017 + $0x24] sm:$0xf]
        %v3028 = vld [vmem:[%s3017 + $0x28] sm:$0xf]
        %v3029 = vld [vmem:[%s3017 + $0x2c] sm:$0xf]
        %v3030 = vld [vmem:[%s3017 + $0x30] sm:$0xf]
        %v3031 = vld [vmem:[%s3017 + $0x34] sm:$0xf]
        %v3032 = vld [vmem:[%s3017 + $0x38] sm:$0xf]
        %v3033 = vld [vmem:[%s3017 + $0x3c] sm:$0xf]
        %v3034 = vunpack.c.l.b16 %v3016
        %v3035 = vpack.c.b16 %v3034, %v2577
        %v3053 = vunpack.c.l.b16 %v3018
        %v3054 = vunpack.c.l.b16 %v3019
        %v3055 = vunpack.c.l.b16 %v3020
        %v3056 = vunpack.c.l.b16 %v3021
        %v3057 = vunpack.c.l.b16 %v3022
        %v3058 = vunpack.c.l.b16 %v3023
        %v3059 = vunpack.c.l.b16 %v3024
        %v3060 = vunpack.c.l.b16 %v3025
        %v3061 = vunpack.c.l.b16 %v3026
        %v3062 = vunpack.c.l.b16 %v3027
        %v3063 = vunpack.c.l.b16 %v3028
        %v3064 = vunpack.c.l.b16 %v3029
        %v3065 = vunpack.c.l.b16 %v3030
        %v3066 = vunpack.c.l.b16 %v3031
        %v3067 = vunpack.c.l.b16 %v3032
        %v3068 = vunpack.c.l.b16 %v3033
        %v3069 = vpack.c.b16 %v3054, %v3053
        %v3070 = vpack.c.b16 %v3056, %v3055
        %v3071 = vpack.c.b16 %v3058, %v3057
        %v3072 = vpack.c.b16 %v3060, %v3059
        %v3073 = vpack.c.b16 %v3062, %v3061
        %v3074 = vpack.c.b16 %v3064, %v3063
        %v3075 = vpack.c.b16 %v3066, %v3065
        %v3076 = vpack.c.b16 %v3068, %v3067
        %3085 = vmatprep.subr.bf16.mxu0 0
        %3086 = vmatpush1.bf16.msra.mxu0 %v3069
        %3087 = vmatprep.subr.bf16.mxu0 0
        %3088 = vmatpush1.bf16.msra.mxu0 %v3070
        %3089 = vmatprep.subr.bf16.mxu0 0
        %3090 = vmatpush1.bf16.msra.mxu0 %v3071
        %3091 = vmatprep.subr.bf16.mxu0 0
        %3092 = vmatpush1.bf16.msra.mxu0 %v3072
        %3093 = vmatprep.subr.bf16.mxu0 0
        %3094 = vmatpush1.bf16.msra.mxu0 %v3073
        %3095 = vmatprep.subr.bf16.mxu0 0
        %3096 = vmatpush1.bf16.msra.mxu0 %v3074
        %3097 = vmatprep.subr.bf16.mxu0 0
        %3098 = vmatpush1.bf16.msra.mxu0 %v3075
        %3099 = vmatprep.subr.bf16.mxu0 0
        %3100 = vmatpush1.bf16.msra.mxu0 %v3076
        %3101 = vmatprep.subr.bf16.mxu0 0
        %3102 = vmatpush1.bf16.msra.mxu0 0
        %3103 = vmatprep.subr.bf16.mxu0 0
        %3104 = vmatpush1.bf16.msra.mxu0 0
        %3105 = vmatprep.subr.bf16.mxu0 0
        %3106 = vmatpush1.bf16.msra.mxu0 0
        %3107 = vmatprep.subr.bf16.mxu0 0
        %3108 = vmatpush1.bf16.msra.mxu0 0
        %3109 = vmatprep.subr.bf16.mxu0 0
        %3110 = vmatpush1.bf16.msra.mxu0 0
        %3111 = vmatprep.subr.bf16.mxu0 0
        %3112 = vmatpush1.bf16.msra.mxu0 0
        %3113 = vmatprep.subr.bf16.mxu0 0
        %3114 = vmatpush1.bf16.msra.mxu0 0
        %3115 = vmatprep.subr.bf16.mxu0 0
        %3116 = vmatpush1.bf16.msra.mxu0 0
        %3117 = vmatprep.mubr.bf16.mxu0 0
        %3118 = vmatmul.mubr.bf16.gmra.mrb[0].mxu0 %v1965
        %v3119 = vpop.f32.mrb[0].mxu0
        %v3120 = vadd.f32 0.0, %v3119
        %v3121 = vpop.f32.mrb[0].mxu0
        %v3122 = vpop.f32.mrb[0].mxu0
        %v3123 = vadd.f32 0.0, %v3122
        %v3124 = vpop.f32.mrb[0].mxu0
        %3125 = vmatprep.mubr.bf16.mxu0 0
        %3126 = vmatmul.mubr.bf16.gmra.mrb[0].mxu0 %v1966
        %v3127 = vpop.f32.mrb[0].mxu0
        %v3128 = vadd.f32 0.0, %v3127
        %v3129 = vpop.f32.mrb[0].mxu0
        %v3130 = vpop.f32.mrb[0].mxu0
        %v3131 = vadd.f32 0.0, %v3130
        %v3132 = vpop.f32.mrb[0].mxu0
        %3133 = vmatprep.mubr.bf16.mxu0 0
        %3134 = vmatmul.mubr.bf16.gmra.mrb[0].mxu0 %v1967
        %v3135 = vpop.f32.mrb[0].mxu0
        %v3136 = vadd.f32 0.0, %v3135
        %v3137 = vpop.f32.mrb[0].mxu0
        %v3138 = vpop.f32.mrb[0].mxu0
        %v3139 = vadd.f32 0.0, %v3138
        %v3140 = vpop.f32.mrb[0].mxu0
        %3141 = vmatprep.mubr.bf16.mxu0 0
        %3142 = vmatmul.mubr.bf16.gmra.mrb[0].mxu0 %v3035
        %v3143 = vpop.f32.mrb[0].mxu0
        %v3144 = vadd.f32 0.0, %v3143
        %v3145 = vpop.f32.mrb[0].mxu0
        %v3146 = vpop.f32.mrb[0].mxu0
        %v3147 = vadd.f32 0.0, %v3146
        %v3148 = vpop.f32.mrb[0].mxu0
        %3149 = vdwg.mxu0
        %v3150 = vadd.f32 %v2992, %v3120
        %v3151 = vadd.f32 %v2993, %v3123
        %v3152 = vadd.f32 %v2994, %v3128
        %v3153 = vadd.f32 %v2995, %v3131
        %v3154 = vadd.f32 %v2996, %v3136
        %v3155 = vadd.f32 %v2997, %v3139
        %v3156 = vadd.f32 %v2998, %v3144
        %v3157 = vadd.f32 %v2999, %v3147
        %v3158 = vrot.slane %v3001, 5
        %v3159 = vrot.slane %v3158, 4
        %v3160 = vrot.slane %v3002, 5
        %v3161 = vsel %vm2208, %v3159, %v3160
        %s3162 = scalar_lea.vmem %s4, 512
        %v3163 = vld [vmem:[%s3162] sm:$0xf]
        %v3164 = vld [vmem:[%s3162 + $0x4] sm:$0xf]
        %v3165 = vld [vmem:[%s3162 + $0x8] sm:$0xf]
        %v3166 = vld [vmem:[%s3162 + $0xc] sm:$0xf]
        %v3167 = vld [vmem:[%s3162 + $0x10] sm:$0xf]
        %v3168 = vld [vmem:[%s3162 + $0x14] sm:$0xf]
        %v3169 = vld [vmem:[%s3162 + $0x18] sm:$0xf]
        %v3170 = vld [vmem:[%s3162 + $0x1c] sm:$0xf]
        %v3171 = vld [vmem:[%s3162 + $0x20] sm:$0xf]
        %v3172 = vld [vmem:[%s3162 + $0x24] sm:$0xf]
        %v3173 = vld [vmem:[%s3162 + $0x28] sm:$0xf]
        %v3174 = vld [vmem:[%s3162 + $0x2c] sm:$0xf]
        %v3175 = vld [vmem:[%s3162 + $0x30] sm:$0xf]
        %v3176 = vld [vmem:[%s3162 + $0x34] sm:$0xf]
        %v3177 = vld [vmem:[%s3162 + $0x38] sm:$0xf]
        %v3178 = vld [vmem:[%s3162 + $0x3c] sm:$0xf]
        %v3179 = vunpack.c.l.b16 %v3161
        %v3180 = vpack.c.b16 %v3179, %v2728
        %v3198 = vunpack.c.l.b16 %v3163
        %v3199 = vunpack.c.l.b16 %v3164
        %v3200 = vunpack.c.l.b16 %v3165
        %v3201 = vunpack.c.l.b16 %v3166
        %v3202 = vunpack.c.l.b16 %v3167
        %v3203 = vunpack.c.l.b16 %v3168
        %v3204 = vunpack.c.l.b16 %v3169
        %v3205 = vunpack.c.l.b16 %v3170
        %v3206 = vunpack.c.l.b16 %v3171
        %v3207 = vunpack.c.l.b16 %v3172
        %v3208 = vunpack.c.l.b16 %v3173
        %v3209 = vunpack.c.l.b16 %v3174
        %v3210 = vunpack.c.l.b16 %v3175
        %v3211 = vunpack.c.l.b16 %v3176
        %v3212 = vunpack.c.l.b16 %v3177
        %v3213 = vunpack.c.l.b16 %v3178
        %v3214 = vpack.c.b16 %v3199, %v3198
        %v3215 = vpack.c.b16 %v3201, %v3200
        %v3216 = vpack.c.b16 %v3203, %v3202
        %v3217 = vpack.c.b16 %v3205, %v3204
        %v3218 = vpack.c.b16 %v3207, %v3206
        %v3219 = vpack.c.b16 %v3209, %v3208
        %v3220 = vpack.c.b16 %v3211, %v3210
        %v3221 = vpack.c.b16 %v3213, %v3212
        %3230 = vmatprep.subr.bf16.mxu0 0
        %3231 = vmatpush1.bf16.msra.mxu0 %v3214
        %3232 = vmatprep.subr.bf16.mxu0 0
        %3233 = vmatpush1.bf16.msra.mxu0 %v3215
        %3234 = vmatprep.subr.bf16.mxu0 0
        %3235 = vmatpush1.bf16.msra.mxu0 %v3216
        %3236 = vmatprep.subr.bf16.mxu0 0
        %3237 = vmatpush1.bf16.msra.mxu0 %v3217
        %3238 = vmatprep.subr.bf16.mxu0 0
        %3239 = vmatpush1.bf16.msra.mxu0 %v3218
        %3240 = vmatprep.subr.bf16.mxu0 0
        %3241 = vmatpush1.bf16.msra.mxu0 %v3219
        %3242 = vmatprep.subr.bf16.mxu0 0
        %3243 = vmatpush1.bf16.msra.mxu0 %v3220
        %3244 = vmatprep.subr.bf16.mxu0 0
        %3245 = vmatpush1.bf16.msra.mxu0 %v3221
        %3246 = vmatprep.subr.bf16.mxu0 0
        %3247 = vmatpush1.bf16.msra.mxu0 0
        %3248 = vmatprep.subr.bf16.mxu0 0
        %3249 = vmatpush1.bf16.msra.mxu0 0
        %3250 = vmatprep.subr.bf16.mxu0 0
        %3251 = vmatpush1.bf16.msra.mxu0 0
        %3252 = vmatprep.subr.bf16.mxu0 0
        %3253 = vmatpush1.bf16.msra.mxu0 0
        %3254 = vmatprep.subr.bf16.mxu0 0
        %3255 = vmatpush1.bf16.msra.mxu0 0
        %3256 = vmatprep.subr.bf16.mxu0 0
        %3257 = vmatpush1.bf16.msra.mxu0 0
        %3258 = vmatprep.subr.bf16.mxu0 0
        %3259 = vmatpush1.bf16.msra.mxu0 0
        %3260 = vmatprep.subr.bf16.mxu0 0
        %3261 = vmatpush1.bf16.msra.mxu0 0
        %3262 = vmatprep.mubr.bf16.mxu0 0
        %3263 = vmatmul.mubr.bf16.gmra.mrb[0].mxu0 %v2267
        %v3264 = vpop.f32.mrb[0].mxu0
        %v3265 = vadd.f32 0.0, %v3264
        %v3266 = vpop.f32.mrb[0].mxu0
        %v3267 = vpop.f32.mrb[0].mxu0
        %v3268 = vadd.f32 0.0, %v3267
        %v3269 = vpop.f32.mrb[0].mxu0
        %3270 = vmatprep.mubr.bf16.mxu0 0
        %3271 = vmatmul.mubr.bf16.gmra.mrb[0].mxu0 %v2268
        %v3272 = vpop.f32.mrb[0].mxu0
        %v3273 = vadd.f32 0.0, %v3272
        %v3274 = vpop.f32.mrb[0].mxu0
        %v3275 = vpop.f32.mrb[0].mxu0
        %v3276 = vadd.f32 0.0, %v3275
        %v3277 = vpop.f32.mrb[0].mxu0
        %3278 = vmatprep.mubr.bf16.mxu0 0
        %3279 = vmatmul.mubr.bf16.gmra.mrb[0].mxu0 %v2269
        %v3280 = vpop.f32.mrb[0].mxu0
        %v3281 = vadd.f32 0.0, %v3280
        %v3282 = vpop.f32.mrb[0].mxu0
        %v3283 = vpop.f32.mrb[0].mxu0
        %v3284 = vadd.f32 0.0, %v3283
        %v3285 = vpop.f32.mrb[0].mxu0
        %3286 = vmatprep.mubr.bf16.mxu0 0
        %3287 = vmatmul.mubr.bf16.gmra.mrb[0].mxu0 %v3180
        %v3288 = vpop.f32.mrb[0].mxu0
        %v3289 = vadd.f32 0.0, %v3288
        %v3290 = vpop.f32.mrb[0].mxu0
        %v3291 = vpop.f32.mrb[0].mxu0
        %v3292 = vadd.f32 0.0, %v3291
        %v3293 = vpop.f32.mrb[0].mxu0
        %3294 = vdwg.mxu0
        %v3295 = vadd.f32 %v3150, %v3265
        %v3296 = vadd.f32 %v3151, %v3268
        %v3297 = vadd.f32 %v3152, %v3273
        %v3298 = vadd.f32 %v3153, %v3276
        %v3299 = vadd.f32 %v3154, %v3281
        %v3300 = vadd.f32 %v3155, %v3284
        %v3301 = vadd.f32 %v3156, %v3289
        %v3302 = vadd.f32 %v3157, %v3292
        %v3303 = vld [vmem:[%s296] sm:$0xf]
        %v3304 = vld [vmem:[%s296 + $0x4] sm:$0xf]
        %v3305 = vld [vmem:[%s296 + $0x8] sm:$0xf]
        %v3306 = vld [vmem:[%s296 + $0xc] sm:$0xf]
        %v3307 = vld [vmem:[%s296 + $0x10] sm:$0xf]
        %v3308 = vld [vmem:[%s296 + $0x14] sm:$0xf]
        %v3309 = vld [vmem:[%s296 + $0x18] sm:$0xf]
        %v3310 = vld [vmem:[%s296 + $0x1c] sm:$0xf]
        %v3311 = vld [vmem:[%s6] sm:$0x3]
        %v3320 = vunpack.c.l.b16 %v3303
        %v3321 = vunpack.c.l.b16 %v3304
        %v3322 = vunpack.c.l.b16 %v3305
        %v3323 = vunpack.c.l.b16 %v3306
        %v3324 = vunpack.c.l.b16 %v3307
        %v3325 = vunpack.c.l.b16 %v3308
        %v3326 = vunpack.c.l.b16 %v3309
        %v3327 = vunpack.c.l.b16 %v3310
        %v3328 = vpack.c.b16 %v3321, %v3320
        %v3329 = vpack.c.b16 %v3323, %v3322
        %v3330 = vpack.c.b16 %v3325, %v3324
        %v3331 = vpack.c.b16 %v3327, %v3326
        %v3333 = vsel %vm338, %v3328, 0
        %v3336 = vsel %vm338, %v3329, 0
        %v3339 = vsel %vm338, %v3330, 0
        %v3342 = vsel %vm338, %v3331, 0
        %v3345 = vsel %vm351, %v3311, 0
        %3347 = vmatprep.subr.bf16.mxu0 0
        %3348 = vmatpush1.bf16.msra.mxu0 %v3345
        %3349 = vmatprep.subr.bf16.mxu0 0
        %3350 = vmatpush1.bf16.msra.mxu0 0
        %3351 = vmatprep.subr.bf16.mxu0 0
        %3352 = vmatpush1.bf16.msra.mxu0 0
        %3353 = vmatprep.subr.bf16.mxu0 0
        %3354 = vmatpush1.bf16.msra.mxu0 0
        %3355 = vmatprep.subr.bf16.mxu0 0
        %3356 = vmatpush1.bf16.msra.mxu0 0
        %3357 = vmatprep.subr.bf16.mxu0 0
        %3358 = vmatpush1.bf16.msra.mxu0 0
        %3359 = vmatprep.subr.bf16.mxu0 0
        %3360 = vmatpush1.bf16.msra.mxu0 0
        %3361 = vmatprep.subr.bf16.mxu0 0
        %3362 = vmatpush1.bf16.msra.mxu0 0
        %3363 = vmatprep.subr.bf16.mxu0 0
        %3364 = vmatpush1.bf16.msra.mxu0 0
        %3365 = vmatprep.subr.bf16.mxu0 0
        %3366 = vmatpush1.bf16.msra.mxu0 0
        %3367 = vmatprep.subr.bf16.mxu0 0
        %3368 = vmatpush1.bf16.msra.mxu0 0
        %3369 = vmatprep.subr.bf16.mxu0 0
        %3370 = vmatpush1.bf16.msra.mxu0 0
        %3371 = vmatprep.subr.bf16.mxu0 0
        %3372 = vmatpush1.bf16.msra.mxu0 0
        %3373 = vmatprep.subr.bf16.mxu0 0
        %3374 = vmatpush1.bf16.msra.mxu0 0
        %3375 = vmatprep.subr.bf16.mxu0 0
        %3376 = vmatpush1.bf16.msra.mxu0 0
        %3377 = vmatprep.subr.bf16.mxu0 0
        %3378 = vmatpush1.bf16.msra.mxu0 0
        %3379 = vmatprep.mubr.bf16.mxu0 0
        %3380 = vmatmul.mubr.bf16.gmra.mrb[0].mxu0 %v3333
        %v3381 = vpop.f32.mrb[0].mxu0
        %v3382 = vadd.f32 0.0, %v3381
        %v3383 = vpop.f32.mrb[0].mxu0
        %v3384 = vpop.f32.mrb[0].mxu0
        %v3385 = vadd.f32 0.0, %v3384
        %v3386 = vpop.f32.mrb[0].mxu0
        %3387 = vmatprep.mubr.bf16.mxu0 0
        %3388 = vmatmul.mubr.bf16.gmra.mrb[0].mxu0 %v3336
        %v3389 = vpop.f32.mrb[0].mxu0
        %v3390 = vadd.f32 0.0, %v3389
        %v3391 = vpop.f32.mrb[0].mxu0
        %v3392 = vpop.f32.mrb[0].mxu0
        %v3393 = vadd.f32 0.0, %v3392
        %v3394 = vpop.f32.mrb[0].mxu0
        %3395 = vmatprep.mubr.bf16.mxu0 0
        %3396 = vmatmul.mubr.bf16.gmra.mrb[0].mxu0 %v3339
        %v3397 = vpop.f32.mrb[0].mxu0
        %v3398 = vadd.f32 0.0, %v3397
        %v3399 = vpop.f32.mrb[0].mxu0
        %v3400 = vpop.f32.mrb[0].mxu0
        %v3401 = vadd.f32 0.0, %v3400
        %v3402 = vpop.f32.mrb[0].mxu0
        %3403 = vmatprep.mubr.bf16.mxu0 0
        %3404 = vmatmul.mubr.bf16.gmra.mrb[0].mxu0 %v3342
        %v3405 = vpop.f32.mrb[0].mxu0
        %v3406 = vadd.f32 0.0, %v3405
        %v3407 = vpop.f32.mrb[0].mxu0
        %v3408 = vpop.f32.mrb[0].mxu0
        %v3409 = vadd.f32 0.0, %v3408
        %v3410 = vpop.f32.mrb[0].mxu0
        %3411 = vdwg.mxu0
        %v3412 = vadd.f32 %v3295, %v3382
        %v3413 = vadd.f32 %v3296, %v3385
        %v3414 = vadd.f32 %v3297, %v3390
        %v3415 = vadd.f32 %v3298, %v3393
        %v3416 = vadd.f32 %v3299, %v3398
        %v3417 = vadd.f32 %v3300, %v3401
        %v3418 = vadd.f32 %v3301, %v3406
        %v3419 = vadd.f32 %v3302, %v3409
        %v3420 = vld [vmem:[%s5] sm:$0x1]
        %v3422 = vlaneseq
        %v3423 = vshrl.u32 %v3422, 7
        %v3424 = vsub.s32 0, %v3423
        %v3425 = vrot.slane %v3420, %v3424
        %v3427 = vadd.f32 %v3412, %v3425
        %v3428 = vadd.f32 %v3413, %v3425
        %v3429 = vadd.f32 %v3414, %v3425
        %v3430 = vadd.f32 %v3415, %v3425
        %v3431 = vadd.f32 %v3416, %v3425
        %v3432 = vadd.f32 %v3417, %v3425
        %v3433 = vadd.f32 %v3418, %v3425
        %v3434 = vadd.f32 %v3419, %v3425
        %v3435 = vmax.f32 %v3427, 0.0
        %v3436 = vmax.f32 %v3428, 0.0
        %v3437 = vmax.f32 %v3429, 0.0
        %v3438 = vmax.f32 %v3430, 0.0
        %v3439 = vmax.f32 %v3431, 0.0
        %v3440 = vmax.f32 %v3432, 0.0
        %v3441 = vmax.f32 %v3433, 0.0
        %v3442 = vmax.f32 %v3434, 0.0
        %v3443 = vpack.c.bf16 %v3435, %v3435
        %v3444 = vpack.c.bf16 %v3436, %v3436
        %v3445 = vpack.c.bf16 %v3437, %v3437
        %v3446 = vpack.c.bf16 %v3438, %v3438
        %v3447 = vpack.c.bf16 %v3439, %v3439
        %v3448 = vpack.c.bf16 %v3440, %v3440
        %v3449 = vpack.c.bf16 %v3441, %v3441
        %v3450 = vpack.c.bf16 %v3442, %v3442
        %3451 = vst [vmem:[%s286] sm:$0xf] %v3443
        %3452 = vst [vmem:[%s286 + $0x4] sm:$0xf] %v3444
        %3453 = vst [vmem:[%s286 + $0x8] sm:$0xf] %v3445
        %3454 = vst [vmem:[%s286 + $0xc] sm:$0xf] %v3446
        %3455 = vst [vmem:[%s286 + $0x10] sm:$0xf] %v3447
        %3456 = vst [vmem:[%s286 + $0x14] sm:$0xf] %v3448
        %3457 = vst [vmem:[%s286 + $0x18] sm:$0xf] %v3449
        %3458 = vst [vmem:[%s286 + $0x1c] sm:$0xf] %v3450
        %s3459 = sand.u32 %s186, 1
        %s3460 = scalar_lea.sflag [#allocation4], %s3459
        %s3461 = sand.u32 %s186, 1
        %s3462 = smul.addr %s3461, 32
        %s3463 = scalar_lea.vmem [#allocation3], %s3462
        // Predicated region
        $region49: #{tpu_custom_call.1} parent=47 // pred_check
          %p3464 = pneg %p196
        $region50: #{tpu_custom_call.1} parent=47 // pred_check_branch
          %3466 = sbr.rel (%p3464) target = $region52
        $region51: #{tpu_custom_call.1} parent=47 // pred_region
          %s3468 = ssub.s32 512, 512
          %3469 = vsyncadd %s3460, %s3468
          %s3470 = smul.addr %s21, 8
          %s3471 = smul.addr %s3470, 64
          %s3472 = scalar_lea.hbm %s7, %s3471
          %s3473 = sshll.u32 %s3463, 4
          %s3474 = int_to_ptr.vmem [resolvable:$true] %s3473
          %3479 = dma.vmem_to_hbm [thread:$0]  %s3474, 512, %s3472, %s3460, 64, 64, 4
        $region52: #{tpu_custom_call.1} parent=47 // pred_fallthru
          _
      $region48: #{tpu_custom_call.1} parent=5 // pred_fallthru
        _
      %p3480 = scmp.le.s32.totalorder 2, %s16
      // Predicated region
      $region53: #{tpu_custom_call.1} parent=5 // pred_check
        %p3481 = pneg %p3480
      $region54: #{tpu_custom_call.1} parent=5 // pred_check_branch
        %3483 = sbr.rel (%p3481) target = $region56
      $region55: #{tpu_custom_call.1} parent=5 // pred_region
        %s3484 = ssub.s32 %s16, 2
        // Predicated region
        $region57: #{tpu_custom_call.1} parent=55 // pred_check
          %p3485 = pneg %p202
        $region58: #{tpu_custom_call.1} parent=55 // pred_check_branch
          %3487 = sbr.rel (%p3485) target = $region60
        $region59: #{tpu_custom_call.1} parent=55 // pred_region
          %s3488 = sand.u32 %s187, 1
          %s3489 = scalar_lea.sflag [#allocation4], %s3488
          %s3490 = sand.u32 %s187, 1
          %s3491 = smul.addr %s3490, 32
          %s3492 = scalar_lea.vmem [#allocation3], %s3491
          %3493 = dma.done %s3489, 512
        $region60: #{tpu_custom_call.1} parent=55 // pred_fallthru
          _
      $region56: #{tpu_custom_call.1} parent=5 // pred_fallthru
        _
    $region6: #{tpu_custom_call.1} parent=1 // loop_footer
      %s20 = sadd.s32 1, %s16
    $region7: #{tpu_custom_call.1} parent=1 // loop_footer_branch
      %15 = sbr.rel target = $region3
    $region8: #{tpu_custom_call.1} parent=1 // loop_exit
      _
    %3494 = vsyncpa [#allocation4], 1
    %s3495 = scalar_lea.sflag [#allocation4], 1
    %3496 = vsyncpa %s3495, 1

</llo_original>
